<compile_context>
chip_gen: v6e
topology: v6e:2x2x1
jax: 0.10.0
libtpu: 0.0.40
codegen_flags: <defaults>
</compile_context>

<pallas_src>
import numpy as np

import jax
import jax.numpy as jnp
from jax.experimental import pallas as pl
from jax.experimental.pallas import tpu as pltpu

NUM_CHANNELS = 4
NUM_CLASSES = 2
NUM_ANCHORS = 3
NUM_OUTPUTS = NUM_CLASSES + 5            # x, y, w, h, obj, classes
DET_LANES = 128                          # detect channels zero-padded to 128 lanes

# Conv layer configs:  cin, cout, kernel, stride, input spatial size (square).
_CONV_LAYERS = [
    dict(cin=NUM_CHANNELS, cout=16, k=3, s=1, hin=16),
    dict(cin=16,           cout=32, k=3, s=2, hin=16),
    dict(cin=32,           cout=32, k=3, s=1, hin=8),
    dict(cin=32,           cout=64, k=3, s=2, hin=8),
]
_DETECT_FROM = [1, 3]                    # saved layer outputs feeding Detect


# ----------------------------------------------------------------------------
# Build-time constants (all tiny): per-tap boundary masks and, for stride-2
# layers, one small 0/1 spatial subsample matrix.
# ----------------------------------------------------------------------------
def _build_masks(hin, win, batch):
    """(9, 1, batch*hin*win) validity masks for a zero-padded 3x3 conv."""
    L = batch * hin * win
    hw = np.arange(L) % (hin * win)
    row = hw // win
    col = hw % win
    m = np.zeros((9, 1, L), np.float32)
    for kh in range(3):
        for kw in range(3):
            ok = ((row + kh - 1 >= 0) & (row + kh - 1 < hin) &
                  (col + kw - 1 >= 0) & (col + kw - 1 < win))
            m[kh * 3 + kw, 0, :] = ok.astype(np.float32)
    return m


def _build_subsample(hin, win, batch):
    """(batch*hin*win, batch*(hin//2)*(win//2)) 0/1 matrix selecting even rows/cols."""
    ho, wo = hin // 2, win // 2
    s = np.zeros((batch * hin * win, batch * ho * wo), np.float32)
    for b in range(batch):
        for r in range(ho):
            for c in range(wo):
                s[b * hin * win + (2 * r) * win + 2 * c,
                  b * ho * wo + r * wo + c] = 1.0
    return s


# ----------------------------------------------------------------------------
# The single fused Pallas kernel (no grid: one shot, everything VMEM-resident).
# ----------------------------------------------------------------------------
def _make_kernel(batch, layer_cfgs):
    B = batch

    def conv_bn_silu(x, w_ref, b_ref, m_ref, s_ref, win):
        """x: (Cin, B*H*W) f32 channel-major.  Returns post-SiLU (Cout, ...)."""
        C, L = x.shape
        W = win
        # Zero-padded lane shift: output[m] = x[m + s] (or 0 past the ends);
        # interior row / image-boundary wrap is killed by the per-tap mask.
        zpad = jnp.zeros((C, W + 1), jnp.float32)
        xpad = jnp.concatenate([zpad, x, zpad], axis=-1)       # (C, L + 2W + 2)
        pieces = []
        for kh in range(3):
            for kw in range(3):
                t = kh * 3 + kw
                off = (kh - 1) * W + (kw - 1) + (W + 1)        # >= 0 by construction
                shifted = jax.lax.slice(xpad, (0, off), (C, off + L))
                pieces.append(shifted * m_ref[t])              # mask: (1, L)
        # One stacked matmul per layer: (Cout, 9*Cin) @ (9*Cin, L), bf16 MXU path.
        patch = jnp.concatenate(pieces, axis=0).astype(jnp.bfloat16)
        y = jnp.dot(w_ref[...], patch, preferred_element_type=jnp.float32)
        if s_ref is not None:                                  # stride-2: subsample
            y = jnp.dot(y, s_ref[...], preferred_element_type=jnp.float32)
        y = y + b_ref[...]                                     # folded-BN bias (Cout,1), f32
        return y * jax.nn.sigmoid(y)                           # SiLU in f32 (v5e-safe)

    def kernel(*refs):
        it = iter(refs)
        x_ref = next(it)
        layers = []
        for cfg in layer_cfgs:
            w = next(it); b = next(it); m = next(it)
            s = next(it) if cfg["s"] == 2 else None
            layers.append((w, b, m, s, cfg))
        wd0, bd0, wd1, bd1 = next(it), next(it), next(it), next(it)
        out_ref = next(it)

        # NCHW (B, Cin, H*W) -> channel-major (Cin, B*H*W): lane-axis concat,
        # no host transpose needed.
        x = jnp.concatenate([x_ref[b] for b in range(B)], axis=-1)

        saved = {}
        for li, (w, b, m, s, cfg) in enumerate(layers):
            x = conv_bn_silu(x, w, b, m, s, cfg["hin"])
            saved[li] = x

        x1 = saved[_DETECT_FROM[0]]                            # (32, B*64)
        x3 = saved[_DETECT_FROM[1]]                            # (64, B*16)

        # Detect 1x1 convs -> lane-dense (B*HW, 128) rows (cols 21..127 zero).
        det0 = jnp.dot(x1.T, wd0[...], preferred_element_type=jnp.float32) + bd0[...]
        det1 = jnp.dot(x3.T, wd1[...], preferred_element_type=jnp.float32) + bd1[...]
        out_ref[...] = jnp.concatenate([det0, det1], axis=0)   # (B*(64+16), 128)

    return kernel


# ----------------------------------------------------------------------------
# Yolov7Model.forward equivalent (one pallas_call + tiny host-boundary reshape).
# ----------------------------------------------------------------------------
@jax.jit
def yolov7_forward(params, x_nchw):
    B, C, H, W = x_nchw.shape
    # Free reshape only (contiguous merge) -- no host-side NCHW->NHWC transpose.
    x = x_nchw.astype(jnp.float32).reshape(B, C, H * W)

    det_hw = [(H // 2, W // 2), (H // 4, W // 4)]              # strides 2 and 4
    n_rows = B * sum(h * w for h, w in det_hw)

    inputs = [x]
    for layer in params["conv"]:
        inputs += [layer["w_all"], layer["bias_col"], layer["masks"]]
        if layer["sub"] is not None:
            inputs.append(layer["sub"])
    det = params["det"]
    inputs += [det["wt"][0], det["bt"][0], det["wt"][1], det["bt"][1]]

    raw = pl.pallas_call(
        _make_kernel(B, _CONV_LAYERS),
        out_shape=jax.ShapeDtypeStruct((n_rows, DET_LANES), jnp.float32),
        compiler_params=pltpu.CompilerParams(vmem_limit_bytes=32 * 1024 * 1024),
    )(*inputs)

    # Host-boundary unpack: slice the padded lanes, then the (B, na, H, W, no)
    # permute (deferred here so the on-device store stays 128-lane dense).
    outs = []
    n = NUM_ANCHORS * NUM_OUTPUTS
    r0 = 0
    for h, w in det_hw:
        blk = raw[r0:r0 + B * h * w, :n].reshape(B, h, w, NUM_ANCHORS, NUM_OUTPUTS)
        outs.append(jnp.transpose(blk, (0, 3, 1, 2, 4)))       # (B, na, H, W, no)
        r0 += B * h * w
    return outs

# TODO(synk): postprocess/_derive_preds/_format_preds (sigmoid decode, box_convert,
# batched NMS) is data-dependent host-side logic with no clean Pallas equivalent.


# ----------------------------------------------------------------------------
# Deterministic parameter construction (mirrors create_model_from_config shapes).
# ----------------------------------------------------------------------------
def build_model_params(key, batch=2):
    conv_params = []
    for ld in _CONV_LAYERS:
        cin, cout, k, s, hin = ld["cin"], ld["cout"], ld["k"], ld["s"], ld["hin"]
        key, k1, k2, k3 = jax.random.split(key, 4)
        # PyTorch conv weight (cout, cin, kh, kw) + BatchNorm2d params.
        w = 0.05 * jax.random.normal(k1, (cout, cin, k, k), jnp.float32)
        gamma = 1.0 + 0.05 * jax.random.normal(k2, (cout,), jnp.float32)
        beta = 0.05 * jax.random.normal(k3, (cout,), jnp.float32)
        mean = jnp.zeros((cout,), jnp.float32)
        var = jnp.ones((cout,), jnp.float32)
        scale = gamma / jnp.sqrt(var + 1e-5)                   # PyTorch BN eps
        bias = beta - mean * scale
        # Fold BN scale, then round the master weights to bf16-representable f32
        # so the kernel's bf16 MXU path and the f64 reference share weights.
        w_folded = (w * scale[:, None, None, None]).astype(jnp.bfloat16).astype(jnp.float32)
        # Kernel layout: (cout, 9*cin), tap-major then channel.
        w_all = jnp.transpose(w_folded, (0, 2, 3, 1)).reshape(cout, k * k * cin)
        # Reference layout: (9, cin, cout).
        w_taps = jnp.transpose(w_folded, (2, 3, 1, 0)).reshape(k * k, cin, cout)
        conv_params.append(dict(
            w_all=w_all.astype(jnp.bfloat16),                  # bf16 MXU operand
            bias_col=bias.reshape(cout, 1),                    # f32 bias (channel rows)
            masks=jnp.asarray(_build_masks(hin, hin, batch)),  # (9, 1, B*H*W)
            sub=(jnp.asarray(_build_subsample(hin, hin, batch)) if s == 2 else None),
            w_taps=w_taps,                                     # reference copies (f32)
            bias=bias,
        ))

    n = NUM_ANCHORS * NUM_OUTPUTS
    det_wt, det_bt, det_wraw, det_braw = [], [], [], []
    for li in _DETECT_FROM:
        cin = _CONV_LAYERS[li]["cout"]
        key, kw_, kb_ = jax.random.split(key, 3)
        wd = 0.05 * jax.random.normal(kw_, (n, cin), jnp.float32)   # PyTorch (n,cin,1,1)
        bd = 0.05 * jax.random.normal(kb_, (n,), jnp.float32)
        det_wt.append(jnp.zeros((cin, DET_LANES), jnp.float32).at[:, :n].set(wd.T))
        det_bt.append(jnp.zeros((1, DET_LANES), jnp.float32).at[:, :n].set(bd))
        det_wraw.append(wd)
        det_braw.append(bd)

    # Anchor bookkeeping kept for parity with Detect.__init__/check_anchor_order
    # (not used by the forward pass).
    det = dict(
        wt=det_wt, bt=det_bt, w_raw=det_wraw, b_raw=det_braw,
        strides=jnp.array([2.0, 4.0], jnp.float32),
        anchor_grid=jnp.array(
            [[[10.0, 13.0], [16.0, 30.0], [33.0, 23.0]],
             [[30.0, 61.0], [62.0, 45.0], [59.0, 119.0]]], jnp.float32,
        ).reshape(2, 1, NUM_ANCHORS, 1, 1, 2),
    )
    return {"conv": conv_params, "det": det}


# ----------------------------------------------------------------------------
# Pure-numpy reference (float64) using the same (bf16-rounded) folded weights.
# ----------------------------------------------------------------------------
def _reference_forward(params, x_nchw):
    x = np.transpose(np.asarray(x_nchw), (0, 2, 3, 1)).astype(np.float64)   # NHWC
    saved = {}
    for li, ld in enumerate(_CONV_LAYERS):
        s = ld["s"]
        w = np.asarray(params["conv"][li]["w_taps"], np.float64)   # (9, cin, cout)
        b = np.asarray(params["conv"][li]["bias"], np.float64)     # (cout,)
        B, H, W, C = x.shape
        Ho, Wo = H // s, W // s
        xp = np.zeros((B, H + 2, W + 2, C), np.float64)
        xp[:, 1:H + 1, 1:W + 1, :] = x
        y = np.zeros((B, Ho, Wo, w.shape[2]), np.float64)
        for kh in range(3):
            for kw in range(3):
                patch = xp[:, kh:kh + Ho * s:s, kw:kw + Wo * s:s, :]
                y = y + patch @ w[kh * 3 + kw]
        y = y + b
        x = y / (1.0 + np.exp(-y))                                 # SiLU
        saved[li] = x
    outs = []
    for lvl, li in enumerate(_DETECT_FROM):
        a = saved[li]
        wd = np.asarray(params["det"]["w_raw"][lvl], np.float64)   # (n, cin)
        bd = np.asarray(params["det"]["b_raw"][lvl], np.float64)   # (n,)
        B, H, W, C = a.shape
        y = a.reshape(B * H * W, C) @ wd.T + bd
        y = y.reshape(B, H, W, NUM_ANCHORS, NUM_OUTPUTS).transpose(0, 3, 1, 2, 4)
        outs.append(y.astype(np.float32))
    return outs
# TODO(synk): Detect output channel ordering assumes anchor-major/output-minor
# packing; verify against real PyTorch Detect view/permute before real weights.


if __name__ == "__main__":
    key = jax.random.PRNGKey(0)
    k_in, k_params = jax.random.split(key)
    x = jax.random.normal(k_in, (2, NUM_CHANNELS, 16, 16), jnp.float32)   # NCHW
    params = build_model_params(k_params, batch=2)

    outs = yolov7_forward(params, x)
    outs = jax.block_until_ready(outs)

    expected = [(2, NUM_ANCHORS, 8, 8, NUM_OUTPUTS), (2, NUM_ANCHORS, 4, 4, NUM_OUTPUTS)]
    assert [tuple(o.shape) for o in outs] == expected, [o.shape for o in outs]
    assert all(bool(jnp.all(jnp.isfinite(o))) for o in outs)

    refs = _reference_forward(params, x)
    for got, want in zip(outs, refs):
        # Kernel uses identical (bf16-rounded) weights; remaining delta is the
        # bf16 activation rounding on the MXU operands with f32 accumulation.
        np.testing.assert_allclose(np.asarray(got), want, rtol=3e-2, atol=1e-2)

    print("KERNEL_OK")
</pallas_src>

<mosaic_0001>
module attributes {stable_mosaic.version = 11 : i64} {
  func.func @kernel(%arg0: memref<2x4x256xf32, #tpu.memory_space<vmem>>, %arg1: memref<16x36xbf16, #tpu.memory_space<vmem>>, %arg2: memref<16x1xf32, #tpu.memory_space<vmem>>, %arg3: memref<9x1x512xf32, #tpu.memory_space<vmem>>, %arg4: memref<32x144xbf16, #tpu.memory_space<vmem>>, %arg5: memref<32x1xf32, #tpu.memory_space<vmem>>, %arg6: memref<9x1x512xf32, #tpu.memory_space<vmem>>, %arg7: memref<512x128xf32, #tpu.memory_space<vmem>>, %arg8: memref<32x288xbf16, #tpu.memory_space<vmem>>, %arg9: memref<32x1xf32, #tpu.memory_space<vmem>>, %arg10: memref<9x1x128xf32, #tpu.memory_space<vmem>>, %arg11: memref<64x288xbf16, #tpu.memory_space<vmem>>, %arg12: memref<64x1xf32, #tpu.memory_space<vmem>>, %arg13: memref<9x1x128xf32, #tpu.memory_space<vmem>>, %arg14: memref<128x32xf32, #tpu.memory_space<vmem>>, %arg15: memref<32x128xf32, #tpu.memory_space<vmem>>, %arg16: memref<1x128xf32, #tpu.memory_space<vmem>>, %arg17: memref<64x128xf32, #tpu.memory_space<vmem>>, %arg18: memref<1x128xf32, #tpu.memory_space<vmem>>, %arg19: memref<160x128xf32, #tpu.memory_space<vmem>>) attributes {dimension_semantics = [], scalar_prefetch = 0 : i64, scratch_operands = 0 : i64, tpu.core_type = #tpu.core_type<tc>} {
    %c0 = arith.constant 0 : index
    %c0_0 = arith.constant 0 : index
    %c0_1 = arith.constant 0 : index
    %0 = vector.load %arg0[%c0, %c0_0, %c0_1] : memref<2x4x256xf32, #tpu.memory_space<vmem>>, vector<1x4x256xf32>
    %1 = vector.shape_cast %0 : vector<1x4x256xf32> to vector<4x256xf32>
    %c1 = arith.constant 1 : index
    %c0_2 = arith.constant 0 : index
    %c0_3 = arith.constant 0 : index
    %2 = vector.load %arg0[%c1, %c0_2, %c0_3] : memref<2x4x256xf32, #tpu.memory_space<vmem>>, vector<1x4x256xf32>
    %3 = vector.shape_cast %2 : vector<1x4x256xf32> to vector<4x256xf32>
    %4 = tpu.concatenate %1, %3 in 1 : vector<4x256xf32>, vector<4x256xf32> -> vector<4x512xf32>
    %cst = arith.constant 0.000000e+00 : f32
    %5 = vector.broadcast %cst : f32 to vector<4x17xf32>
    %6 = tpu.concatenate %5, %4, %5 in 1 : vector<4x17xf32>, vector<4x512xf32>, vector<4x17xf32> -> vector<4x546xf32>
    %7 = vector.extract_strided_slice %6 {offsets = [0, 0], sizes = [4, 512], strides = [1, 1]} : vector<4x546xf32> to vector<4x512xf32>
    %c0_4 = arith.constant 0 : index
    %c0_5 = arith.constant 0 : index
    %c0_6 = arith.constant 0 : index
    %8 = vector.load %arg3[%c0_4, %c0_5, %c0_6] : memref<9x1x512xf32, #tpu.memory_space<vmem>>, vector<1x1x512xf32>
    %9 = vector.shape_cast %8 : vector<1x1x512xf32> to vector<1x512xf32>
    %10 = vector.broadcast %9 : vector<1x512xf32> to vector<4x512xf32>
    %11 = arith.mulf %7, %10 : vector<4x512xf32>
    %12 = vector.extract_strided_slice %6 {offsets = [0, 1], sizes = [4, 512], strides = [1, 1]} : vector<4x546xf32> to vector<4x512xf32>
    %c1_7 = arith.constant 1 : index
    %c0_8 = arith.constant 0 : index
    %c0_9 = arith.constant 0 : index
    %13 = vector.load %arg3[%c1_7, %c0_8, %c0_9] : memref<9x1x512xf32, #tpu.memory_space<vmem>>, vector<1x1x512xf32>
    %14 = vector.shape_cast %13 : vector<1x1x512xf32> to vector<1x512xf32>
    %15 = vector.broadcast %14 : vector<1x512xf32> to vector<4x512xf32>
    %16 = arith.mulf %12, %15 : vector<4x512xf32>
    %17 = vector.extract_strided_slice %6 {offsets = [0, 2], sizes = [4, 512], strides = [1, 1]} : vector<4x546xf32> to vector<4x512xf32>
    %c2 = arith.constant 2 : index
    %c0_10 = arith.constant 0 : index
    %c0_11 = arith.constant 0 : index
    %18 = vector.load %arg3[%c2, %c0_10, %c0_11] : memref<9x1x512xf32, #tpu.memory_space<vmem>>, vector<1x1x512xf32>
    %19 = vector.shape_cast %18 : vector<1x1x512xf32> to vector<1x512xf32>
    %20 = vector.broadcast %19 : vector<1x512xf32> to vector<4x512xf32>
    %21 = arith.mulf %17, %20 : vector<4x512xf32>
    %22 = vector.extract_strided_slice %6 {offsets = [0, 16], sizes = [4, 512], strides = [1, 1]} : vector<4x546xf32> to vector<4x512xf32>
    %c3 = arith.constant 3 : index
    %c0_12 = arith.constant 0 : index
    %c0_13 = arith.constant 0 : index
    %23 = vector.load %arg3[%c3, %c0_12, %c0_13] : memref<9x1x512xf32, #tpu.memory_space<vmem>>, vector<1x1x512xf32>
    %24 = vector.shape_cast %23 : vector<1x1x512xf32> to vector<1x512xf32>
    %25 = vector.broadcast %24 : vector<1x512xf32> to vector<4x512xf32>
    %26 = arith.mulf %22, %25 : vector<4x512xf32>
    %27 = vector.extract_strided_slice %6 {offsets = [0, 17], sizes = [4, 512], strides = [1, 1]} : vector<4x546xf32> to vector<4x512xf32>
    %c4 = arith.constant 4 : index
    %c0_14 = arith.constant 0 : index
    %c0_15 = arith.constant 0 : index
    %28 = vector.load %arg3[%c4, %c0_14, %c0_15] : memref<9x1x512xf32, #tpu.memory_space<vmem>>, vector<1x1x512xf32>
    %29 = vector.shape_cast %28 : vector<1x1x512xf32> to vector<1x512xf32>
    %30 = vector.broadcast %29 : vector<1x512xf32> to vector<4x512xf32>
    %31 = arith.mulf %27, %30 : vector<4x512xf32>
    %32 = vector.extract_strided_slice %6 {offsets = [0, 18], sizes = [4, 512], strides = [1, 1]} : vector<4x546xf32> to vector<4x512xf32>
    %c5 = arith.constant 5 : index
    %c0_16 = arith.constant 0 : index
    %c0_17 = arith.constant 0 : index
    %33 = vector.load %arg3[%c5, %c0_16, %c0_17] : memref<9x1x512xf32, #tpu.memory_space<vmem>>, vector<1x1x512xf32>
    %34 = vector.shape_cast %33 : vector<1x1x512xf32> to vector<1x512xf32>
    %35 = vector.broadcast %34 : vector<1x512xf32> to vector<4x512xf32>
    %36 = arith.mulf %32, %35 : vector<4x512xf32>
    %37 = vector.extract_strided_slice %6 {offsets = [0, 32], sizes = [4, 512], strides = [1, 1]} : vector<4x546xf32> to vector<4x512xf32>
    %c6 = arith.constant 6 : index
    %c0_18 = arith.constant 0 : index
    %c0_19 = arith.constant 0 : index
    %38 = vector.load %arg3[%c6, %c0_18, %c0_19] : memref<9x1x512xf32, #tpu.memory_space<vmem>>, vector<1x1x512xf32>
    %39 = vector.shape_cast %38 : vector<1x1x512xf32> to vector<1x512xf32>
    %40 = vector.broadcast %39 : vector<1x512xf32> to vector<4x512xf32>
    %41 = arith.mulf %37, %40 : vector<4x512xf32>
    %42 = vector.extract_strided_slice %6 {offsets = [0, 33], sizes = [4, 512], strides = [1, 1]} : vector<4x546xf32> to vector<4x512xf32>
    %c7 = arith.constant 7 : index
    %c0_20 = arith.constant 0 : index
    %c0_21 = arith.constant 0 : index
    %43 = vector.load %arg3[%c7, %c0_20, %c0_21] : memref<9x1x512xf32, #tpu.memory_space<vmem>>, vector<1x1x512xf32>
    %44 = vector.shape_cast %43 : vector<1x1x512xf32> to vector<1x512xf32>
    %45 = vector.broadcast %44 : vector<1x512xf32> to vector<4x512xf32>
    %46 = arith.mulf %42, %45 : vector<4x512xf32>
    %47 = vector.extract_strided_slice %6 {offsets = [0, 34], sizes = [4, 512], strides = [1, 1]} : vector<4x546xf32> to vector<4x512xf32>
    %c8 = arith.constant 8 : index
    %c0_22 = arith.constant 0 : index
    %c0_23 = arith.constant 0 : index
    %48 = vector.load %arg3[%c8, %c0_22, %c0_23] : memref<9x1x512xf32, #tpu.memory_space<vmem>>, vector<1x1x512xf32>
    %49 = vector.shape_cast %48 : vector<1x1x512xf32> to vector<1x512xf32>
    %50 = vector.broadcast %49 : vector<1x512xf32> to vector<4x512xf32>
    %51 = arith.mulf %47, %50 : vector<4x512xf32>
    %52 = tpu.concatenate %11, %16, %21, %26, %31, %36, %41, %46, %51 in 0 : vector<4x512xf32>, vector<4x512xf32>, vector<4x512xf32>, vector<4x512xf32>, vector<4x512xf32>, vector<4x512xf32>, vector<4x512xf32>, vector<4x512xf32>, vector<4x512xf32> -> vector<36x512xf32>
    %53 = arith.truncf %52 : vector<36x512xf32> to vector<36x512xbf16>
    %c0_24 = arith.constant 0 : index
    %c0_25 = arith.constant 0 : index
    %54 = vector.load %arg1[%c0_24, %c0_25] : memref<16x36xbf16, #tpu.memory_space<vmem>>, vector<16x36xbf16>
    %cst_26 = arith.constant dense<0.000000e+00> : vector<16x512xf32>
    %55 = tpu.matmul %54, %53, %cst_26 {dimension_numbers = #tpu.dot_dimension_numbers<[1], [0], [0], [1], [0, 0, 1, 1], [], []>} : vector<16x36xbf16>, vector<36x512xbf16>, vector<16x512xf32> -> vector<16x512xf32>
    %c0_27 = arith.constant 0 : index
    %c0_28 = arith.constant 0 : index
    %56 = vector.load %arg2[%c0_27, %c0_28] : memref<16x1xf32, #tpu.memory_space<vmem>>, vector<16x1xf32>
    %57 = vector.broadcast %56 : vector<16x1xf32> to vector<16x512xf32>
    %58 = arith.addf %55, %57 : vector<16x512xf32>
    %59 = arith.negf %58 : vector<16x512xf32>
    %60 = math.exp %59 : vector<16x512xf32>
    %cst_29 = arith.constant 1.000000e+00 : f32
    %61 = vector.broadcast %cst_29 : f32 to vector<16x512xf32>
    %62 = arith.addf %61, %60 : vector<16x512xf32>
    %63 = arith.divf %61, %62 : vector<16x512xf32>
    %64 = arith.mulf %58, %63 : vector<16x512xf32>
    %cst_30 = arith.constant 0.000000e+00 : f32
    %65 = vector.broadcast %cst_30 : f32 to vector<16x17xf32>
    %66 = tpu.concatenate %65, %64, %65 in 1 : vector<16x17xf32>, vector<16x512xf32>, vector<16x17xf32> -> vector<16x546xf32>
    %67 = vector.extract_strided_slice %66 {offsets = [0, 0], sizes = [16, 512], strides = [1, 1]} : vector<16x546xf32> to vector<16x512xf32>
    %c0_31 = arith.constant 0 : index
    %c0_32 = arith.constant 0 : index
    %c0_33 = arith.constant 0 : index
    %68 = vector.load %arg6[%c0_31, %c0_32, %c0_33] : memref<9x1x512xf32, #tpu.memory_space<vmem>>, vector<1x1x512xf32>
    %69 = vector.shape_cast %68 : vector<1x1x512xf32> to vector<1x512xf32>
    %70 = vector.broadcast %69 : vector<1x512xf32> to vector<16x512xf32>
    %71 = arith.mulf %67, %70 : vector<16x512xf32>
    %72 = vector.extract_strided_slice %66 {offsets = [0, 1], sizes = [16, 512], strides = [1, 1]} : vector<16x546xf32> to vector<16x512xf32>
    %c1_34 = arith.constant 1 : index
    %c0_35 = arith.constant 0 : index
    %c0_36 = arith.constant 0 : index
    %73 = vector.load %arg6[%c1_34, %c0_35, %c0_36] : memref<9x1x512xf32, #tpu.memory_space<vmem>>, vector<1x1x512xf32>
    %74 = vector.shape_cast %73 : vector<1x1x512xf32> to vector<1x512xf32>
    %75 = vector.broadcast %74 : vector<1x512xf32> to vector<16x512xf32>
    %76 = arith.mulf %72, %75 : vector<16x512xf32>
    %77 = vector.extract_strided_slice %66 {offsets = [0, 2], sizes = [16, 512], strides = [1, 1]} : vector<16x546xf32> to vector<16x512xf32>
    %c2_37 = arith.constant 2 : index
    %c0_38 = arith.constant 0 : index
    %c0_39 = arith.constant 0 : index
    %78 = vector.load %arg6[%c2_37, %c0_38, %c0_39] : memref<9x1x512xf32, #tpu.memory_space<vmem>>, vector<1x1x512xf32>
    %79 = vector.shape_cast %78 : vector<1x1x512xf32> to vector<1x512xf32>
    %80 = vector.broadcast %79 : vector<1x512xf32> to vector<16x512xf32>
    %81 = arith.mulf %77, %80 : vector<16x512xf32>
    %82 = vector.extract_strided_slice %66 {offsets = [0, 16], sizes = [16, 512], strides = [1, 1]} : vector<16x546xf32> to vector<16x512xf32>
    %c3_40 = arith.constant 3 : index
    %c0_41 = arith.constant 0 : index
    %c0_42 = arith.constant 0 : index
    %83 = vector.load %arg6[%c3_40, %c0_41, %c0_42] : memref<9x1x512xf32, #tpu.memory_space<vmem>>, vector<1x1x512xf32>
    %84 = vector.shape_cast %83 : vector<1x1x512xf32> to vector<1x512xf32>
    %85 = vector.broadcast %84 : vector<1x512xf32> to vector<16x512xf32>
    %86 = arith.mulf %82, %85 : vector<16x512xf32>
    %87 = vector.extract_strided_slice %66 {offsets = [0, 17], sizes = [16, 512], strides = [1, 1]} : vector<16x546xf32> to vector<16x512xf32>
    %c4_43 = arith.constant 4 : index
    %c0_44 = arith.constant 0 : index
    %c0_45 = arith.constant 0 : index
    %88 = vector.load %arg6[%c4_43, %c0_44, %c0_45] : memref<9x1x512xf32, #tpu.memory_space<vmem>>, vector<1x1x512xf32>
    %89 = vector.shape_cast %88 : vector<1x1x512xf32> to vector<1x512xf32>
    %90 = vector.broadcast %89 : vector<1x512xf32> to vector<16x512xf32>
    %91 = arith.mulf %87, %90 : vector<16x512xf32>
    %92 = vector.extract_strided_slice %66 {offsets = [0, 18], sizes = [16, 512], strides = [1, 1]} : vector<16x546xf32> to vector<16x512xf32>
    %c5_46 = arith.constant 5 : index
    %c0_47 = arith.constant 0 : index
    %c0_48 = arith.constant 0 : index
    %93 = vector.load %arg6[%c5_46, %c0_47, %c0_48] : memref<9x1x512xf32, #tpu.memory_space<vmem>>, vector<1x1x512xf32>
    %94 = vector.shape_cast %93 : vector<1x1x512xf32> to vector<1x512xf32>
    %95 = vector.broadcast %94 : vector<1x512xf32> to vector<16x512xf32>
    %96 = arith.mulf %92, %95 : vector<16x512xf32>
    %97 = vector.extract_strided_slice %66 {offsets = [0, 32], sizes = [16, 512], strides = [1, 1]} : vector<16x546xf32> to vector<16x512xf32>
    %c6_49 = arith.constant 6 : index
    %c0_50 = arith.constant 0 : index
    %c0_51 = arith.constant 0 : index
    %98 = vector.load %arg6[%c6_49, %c0_50, %c0_51] : memref<9x1x512xf32, #tpu.memory_space<vmem>>, vector<1x1x512xf32>
    %99 = vector.shape_cast %98 : vector<1x1x512xf32> to vector<1x512xf32>
    %100 = vector.broadcast %99 : vector<1x512xf32> to vector<16x512xf32>
    %101 = arith.mulf %97, %100 : vector<16x512xf32>
    %102 = vector.extract_strided_slice %66 {offsets = [0, 33], sizes = [16, 512], strides = [1, 1]} : vector<16x546xf32> to vector<16x512xf32>
    %c7_52 = arith.constant 7 : index
    %c0_53 = arith.constant 0 : index
    %c0_54 = arith.constant 0 : index
    %103 = vector.load %arg6[%c7_52, %c0_53, %c0_54] : memref<9x1x512xf32, #tpu.memory_space<vmem>>, vector<1x1x512xf32>
    %104 = vector.shape_cast %103 : vector<1x1x512xf32> to vector<1x512xf32>
    %105 = vector.broadcast %104 : vector<1x512xf32> to vector<16x512xf32>
    %106 = arith.mulf %102, %105 : vector<16x512xf32>
    %107 = vector.extract_strided_slice %66 {offsets = [0, 34], sizes = [16, 512], strides = [1, 1]} : vector<16x546xf32> to vector<16x512xf32>
    %c8_55 = arith.constant 8 : index
    %c0_56 = arith.constant 0 : index
    %c0_57 = arith.constant 0 : index
    %108 = vector.load %arg6[%c8_55, %c0_56, %c0_57] : memref<9x1x512xf32, #tpu.memory_space<vmem>>, vector<1x1x512xf32>
    %109 = vector.shape_cast %108 : vector<1x1x512xf32> to vector<1x512xf32>
    %110 = vector.broadcast %109 : vector<1x512xf32> to vector<16x512xf32>
    %111 = arith.mulf %107, %110 : vector<16x512xf32>
    %112 = tpu.concatenate %71, %76, %81, %86, %91, %96, %101, %106, %111 in 0 : vector<16x512xf32>, vector<16x512xf32>, vector<16x512xf32>, vector<16x512xf32>, vector<16x512xf32>, vector<16x512xf32>, vector<16x512xf32>, vector<16x512xf32>, vector<16x512xf32> -> vector<144x512xf32>
    %113 = arith.truncf %112 : vector<144x512xf32> to vector<144x512xbf16>
    %c0_58 = arith.constant 0 : index
    %c0_59 = arith.constant 0 : index
    %114 = vector.load %arg4[%c0_58, %c0_59] : memref<32x144xbf16, #tpu.memory_space<vmem>>, vector<32x144xbf16>
    %cst_60 = arith.constant dense<0.000000e+00> : vector<32x512xf32>
    %115 = tpu.matmul %114, %113, %cst_60 {dimension_numbers = #tpu.dot_dimension_numbers<[1], [0], [0], [1], [0, 0, 1, 1], [], []>} : vector<32x144xbf16>, vector<144x512xbf16>, vector<32x512xf32> -> vector<32x512xf32>
    %c0_61 = arith.constant 0 : index
    %c0_62 = arith.constant 0 : index
    %116 = vector.load %arg7[%c0_61, %c0_62] : memref<512x128xf32, #tpu.memory_space<vmem>>, vector<512x128xf32>
    %cst_63 = arith.constant dense<0.000000e+00> : vector<32x128xf32>
    %117 = tpu.matmul %115, %116, %cst_63 {dimension_numbers = #tpu.dot_dimension_numbers<[1], [0], [0], [1], [0, 0, 1, 1], [], []>} : vector<32x512xf32>, vector<512x128xf32>, vector<32x128xf32> -> vector<32x128xf32>
    %c0_64 = arith.constant 0 : index
    %c0_65 = arith.constant 0 : index
    %118 = vector.load %arg5[%c0_64, %c0_65] : memref<32x1xf32, #tpu.memory_space<vmem>>, vector<32x1xf32>
    %119 = vector.broadcast %118 : vector<32x1xf32> to vector<32x128xf32>
    %120 = arith.addf %117, %119 : vector<32x128xf32>
    %121 = arith.negf %120 : vector<32x128xf32>
    %122 = math.exp %121 : vector<32x128xf32>
    %cst_66 = arith.constant 1.000000e+00 : f32
    %123 = vector.broadcast %cst_66 : f32 to vector<32x128xf32>
    %124 = arith.addf %123, %122 : vector<32x128xf32>
    %125 = arith.divf %123, %124 : vector<32x128xf32>
    %126 = arith.mulf %120, %125 : vector<32x128xf32>
    %cst_67 = arith.constant 0.000000e+00 : f32
    %127 = vector.broadcast %cst_67 : f32 to vector<32x9xf32>
    %128 = tpu.concatenate %127, %126, %127 in 1 : vector<32x9xf32>, vector<32x128xf32>, vector<32x9xf32> -> vector<32x146xf32>
    %129 = vector.extract_strided_slice %128 {offsets = [0, 0], sizes = [32, 128], strides = [1, 1]} : vector<32x146xf32> to vector<32x128xf32>
    %c0_68 = arith.constant 0 : index
    %c0_69 = arith.constant 0 : index
    %c0_70 = arith.constant 0 : index
    %130 = vector.load %arg10[%c0_68, %c0_69, %c0_70] : memref<9x1x128xf32, #tpu.memory_space<vmem>>, vector<1x1x128xf32>
    %131 = vector.shape_cast %130 : vector<1x1x128xf32> to vector<1x128xf32>
    %132 = vector.broadcast %131 : vector<1x128xf32> to vector<32x128xf32>
    %133 = arith.mulf %129, %132 : vector<32x128xf32>
    %134 = vector.extract_strided_slice %128 {offsets = [0, 1], sizes = [32, 128], strides = [1, 1]} : vector<32x146xf32> to vector<32x128xf32>
    %c1_71 = arith.constant 1 : index
    %c0_72 = arith.constant 0 : index
    %c0_73 = arith.constant 0 : index
    %135 = vector.load %arg10[%c1_71, %c0_72, %c0_73] : memref<9x1x128xf32, #tpu.memory_space<vmem>>, vector<1x1x128xf32>
    %136 = vector.shape_cast %135 : vector<1x1x128xf32> to vector<1x128xf32>
    %137 = vector.broadcast %136 : vector<1x128xf32> to vector<32x128xf32>
    %138 = arith.mulf %134, %137 : vector<32x128xf32>
    %139 = vector.extract_strided_slice %128 {offsets = [0, 2], sizes = [32, 128], strides = [1, 1]} : vector<32x146xf32> to vector<32x128xf32>
    %c2_74 = arith.constant 2 : index
    %c0_75 = arith.constant 0 : index
    %c0_76 = arith.constant 0 : index
    %140 = vector.load %arg10[%c2_74, %c0_75, %c0_76] : memref<9x1x128xf32, #tpu.memory_space<vmem>>, vector<1x1x128xf32>
    %141 = vector.shape_cast %140 : vector<1x1x128xf32> to vector<1x128xf32>
    %142 = vector.broadcast %141 : vector<1x128xf32> to vector<32x128xf32>
    %143 = arith.mulf %139, %142 : vector<32x128xf32>
    %144 = vector.extract_strided_slice %128 {offsets = [0, 8], sizes = [32, 128], strides = [1, 1]} : vector<32x146xf32> to vector<32x128xf32>
    %c3_77 = arith.constant 3 : index
    %c0_78 = arith.constant 0 : index
    %c0_79 = arith.constant 0 : index
    %145 = vector.load %arg10[%c3_77, %c0_78, %c0_79] : memref<9x1x128xf32, #tpu.memory_space<vmem>>, vector<1x1x128xf32>
    %146 = vector.shape_cast %145 : vector<1x1x128xf32> to vector<1x128xf32>
    %147 = vector.broadcast %146 : vector<1x128xf32> to vector<32x128xf32>
    %148 = arith.mulf %144, %147 : vector<32x128xf32>
    %149 = vector.extract_strided_slice %128 {offsets = [0, 9], sizes = [32, 128], strides = [1, 1]} : vector<32x146xf32> to vector<32x128xf32>
    %c4_80 = arith.constant 4 : index
    %c0_81 = arith.constant 0 : index
    %c0_82 = arith.constant 0 : index
    %150 = vector.load %arg10[%c4_80, %c0_81, %c0_82] : memref<9x1x128xf32, #tpu.memory_space<vmem>>, vector<1x1x128xf32>
    %151 = vector.shape_cast %150 : vector<1x1x128xf32> to vector<1x128xf32>
    %152 = vector.broadcast %151 : vector<1x128xf32> to vector<32x128xf32>
    %153 = arith.mulf %149, %152 : vector<32x128xf32>
    %154 = vector.extract_strided_slice %128 {offsets = [0, 10], sizes = [32, 128], strides = [1, 1]} : vector<32x146xf32> to vector<32x128xf32>
    %c5_83 = arith.constant 5 : index
    %c0_84 = arith.constant 0 : index
    %c0_85 = arith.constant 0 : index
    %155 = vector.load %arg10[%c5_83, %c0_84, %c0_85] : memref<9x1x128xf32, #tpu.memory_space<vmem>>, vector<1x1x128xf32>
    %156 = vector.shape_cast %155 : vector<1x1x128xf32> to vector<1x128xf32>
    %157 = vector.broadcast %156 : vector<1x128xf32> to vector<32x128xf32>
    %158 = arith.mulf %154, %157 : vector<32x128xf32>
    %159 = vector.extract_strided_slice %128 {offsets = [0, 16], sizes = [32, 128], strides = [1, 1]} : vector<32x146xf32> to vector<32x128xf32>
    %c6_86 = arith.constant 6 : index
    %c0_87 = arith.constant 0 : index
    %c0_88 = arith.constant 0 : index
    %160 = vector.load %arg10[%c6_86, %c0_87, %c0_88] : memref<9x1x128xf32, #tpu.memory_space<vmem>>, vector<1x1x128xf32>
    %161 = vector.shape_cast %160 : vector<1x1x128xf32> to vector<1x128xf32>
    %162 = vector.broadcast %161 : vector<1x128xf32> to vector<32x128xf32>
    %163 = arith.mulf %159, %162 : vector<32x128xf32>
    %164 = vector.extract_strided_slice %128 {offsets = [0, 17], sizes = [32, 128], strides = [1, 1]} : vector<32x146xf32> to vector<32x128xf32>
    %c7_89 = arith.constant 7 : index
    %c0_90 = arith.constant 0 : index
    %c0_91 = arith.constant 0 : index
    %165 = vector.load %arg10[%c7_89, %c0_90, %c0_91] : memref<9x1x128xf32, #tpu.memory_space<vmem>>, vector<1x1x128xf32>
    %166 = vector.shape_cast %165 : vector<1x1x128xf32> to vector<1x128xf32>
    %167 = vector.broadcast %166 : vector<1x128xf32> to vector<32x128xf32>
    %168 = arith.mulf %164, %167 : vector<32x128xf32>
    %169 = vector.extract_strided_slice %128 {offsets = [0, 18], sizes = [32, 128], strides = [1, 1]} : vector<32x146xf32> to vector<32x128xf32>
    %c8_92 = arith.constant 8 : index
    %c0_93 = arith.constant 0 : index
    %c0_94 = arith.constant 0 : index
    %170 = vector.load %arg10[%c8_92, %c0_93, %c0_94] : memref<9x1x128xf32, #tpu.memory_space<vmem>>, vector<1x1x128xf32>
    %171 = vector.shape_cast %170 : vector<1x1x128xf32> to vector<1x128xf32>
    %172 = vector.broadcast %171 : vector<1x128xf32> to vector<32x128xf32>
    %173 = arith.mulf %169, %172 : vector<32x128xf32>
    %174 = tpu.concatenate %133, %138, %143, %148, %153, %158, %163, %168, %173 in 0 : vector<32x128xf32>, vector<32x128xf32>, vector<32x128xf32>, vector<32x128xf32>, vector<32x128xf32>, vector<32x128xf32>, vector<32x128xf32>, vector<32x128xf32>, vector<32x128xf32> -> vector<288x128xf32>
    %175 = arith.truncf %174 : vector<288x128xf32> to vector<288x128xbf16>
    %c0_95 = arith.constant 0 : index
    %c0_96 = arith.constant 0 : index
    %176 = vector.load %arg8[%c0_95, %c0_96] : memref<32x288xbf16, #tpu.memory_space<vmem>>, vector<32x288xbf16>
    %cst_97 = arith.constant dense<0.000000e+00> : vector<32x128xf32>
    %177 = tpu.matmul %176, %175, %cst_97 {dimension_numbers = #tpu.dot_dimension_numbers<[1], [0], [0], [1], [0, 0, 1, 1], [], []>} : vector<32x288xbf16>, vector<288x128xbf16>, vector<32x128xf32> -> vector<32x128xf32>
    %c0_98 = arith.constant 0 : index
    %c0_99 = arith.constant 0 : index
    %178 = vector.load %arg9[%c0_98, %c0_99] : memref<32x1xf32, #tpu.memory_space<vmem>>, vector<32x1xf32>
    %179 = vector.broadcast %178 : vector<32x1xf32> to vector<32x128xf32>
    %180 = arith.addf %177, %179 : vector<32x128xf32>
    %181 = arith.negf %180 : vector<32x128xf32>
    %182 = math.exp %181 : vector<32x128xf32>
    %cst_100 = arith.constant 1.000000e+00 : f32
    %183 = vector.broadcast %cst_100 : f32 to vector<32x128xf32>
    %184 = arith.addf %183, %182 : vector<32x128xf32>
    %185 = arith.divf %183, %184 : vector<32x128xf32>
    %186 = arith.mulf %180, %185 : vector<32x128xf32>
    %cst_101 = arith.constant 0.000000e+00 : f32
    %187 = vector.broadcast %cst_101 : f32 to vector<32x9xf32>
    %188 = tpu.concatenate %187, %186, %187 in 1 : vector<32x9xf32>, vector<32x128xf32>, vector<32x9xf32> -> vector<32x146xf32>
    %189 = vector.extract_strided_slice %188 {offsets = [0, 0], sizes = [32, 128], strides = [1, 1]} : vector<32x146xf32> to vector<32x128xf32>
    %c0_102 = arith.constant 0 : index
    %c0_103 = arith.constant 0 : index
    %c0_104 = arith.constant 0 : index
    %190 = vector.load %arg13[%c0_102, %c0_103, %c0_104] : memref<9x1x128xf32, #tpu.memory_space<vmem>>, vector<1x1x128xf32>
    %191 = vector.shape_cast %190 : vector<1x1x128xf32> to vector<1x128xf32>
    %192 = vector.broadcast %191 : vector<1x128xf32> to vector<32x128xf32>
    %193 = arith.mulf %189, %192 : vector<32x128xf32>
    %194 = vector.extract_strided_slice %188 {offsets = [0, 1], sizes = [32, 128], strides = [1, 1]} : vector<32x146xf32> to vector<32x128xf32>
    %c1_105 = arith.constant 1 : index
    %c0_106 = arith.constant 0 : index
    %c0_107 = arith.constant 0 : index
    %195 = vector.load %arg13[%c1_105, %c0_106, %c0_107] : memref<9x1x128xf32, #tpu.memory_space<vmem>>, vector<1x1x128xf32>
    %196 = vector.shape_cast %195 : vector<1x1x128xf32> to vector<1x128xf32>
    %197 = vector.broadcast %196 : vector<1x128xf32> to vector<32x128xf32>
    %198 = arith.mulf %194, %197 : vector<32x128xf32>
    %199 = vector.extract_strided_slice %188 {offsets = [0, 2], sizes = [32, 128], strides = [1, 1]} : vector<32x146xf32> to vector<32x128xf32>
    %c2_108 = arith.constant 2 : index
    %c0_109 = arith.constant 0 : index
    %c0_110 = arith.constant 0 : index
    %200 = vector.load %arg13[%c2_108, %c0_109, %c0_110] : memref<9x1x128xf32, #tpu.memory_space<vmem>>, vector<1x1x128xf32>
    %201 = vector.shape_cast %200 : vector<1x1x128xf32> to vector<1x128xf32>
    %202 = vector.broadcast %201 : vector<1x128xf32> to vector<32x128xf32>
    %203 = arith.mulf %199, %202 : vector<32x128xf32>
    %204 = vector.extract_strided_slice %188 {offsets = [0, 8], sizes = [32, 128], strides = [1, 1]} : vector<32x146xf32> to vector<32x128xf32>
    %c3_111 = arith.constant 3 : index
    %c0_112 = arith.constant 0 : index
    %c0_113 = arith.constant 0 : index
    %205 = vector.load %arg13[%c3_111, %c0_112, %c0_113] : memref<9x1x128xf32, #tpu.memory_space<vmem>>, vector<1x1x128xf32>
    %206 = vector.shape_cast %205 : vector<1x1x128xf32> to vector<1x128xf32>
    %207 = vector.broadcast %206 : vector<1x128xf32> to vector<32x128xf32>
    %208 = arith.mulf %204, %207 : vector<32x128xf32>
    %209 = vector.extract_strided_slice %188 {offsets = [0, 9], sizes = [32, 128], strides = [1, 1]} : vector<32x146xf32> to vector<32x128xf32>
    %c4_114 = arith.constant 4 : index
    %c0_115 = arith.constant 0 : index
    %c0_116 = arith.constant 0 : index
    %210 = vector.load %arg13[%c4_114, %c0_115, %c0_116] : memref<9x1x128xf32, #tpu.memory_space<vmem>>, vector<1x1x128xf32>
    %211 = vector.shape_cast %210 : vector<1x1x128xf32> to vector<1x128xf32>
    %212 = vector.broadcast %211 : vector<1x128xf32> to vector<32x128xf32>
    %213 = arith.mulf %209, %212 : vector<32x128xf32>
    %214 = vector.extract_strided_slice %188 {offsets = [0, 10], sizes = [32, 128], strides = [1, 1]} : vector<32x146xf32> to vector<32x128xf32>
    %c5_117 = arith.constant 5 : index
    %c0_118 = arith.constant 0 : index
    %c0_119 = arith.constant 0 : index
    %215 = vector.load %arg13[%c5_117, %c0_118, %c0_119] : memref<9x1x128xf32, #tpu.memory_space<vmem>>, vector<1x1x128xf32>
    %216 = vector.shape_cast %215 : vector<1x1x128xf32> to vector<1x128xf32>
    %217 = vector.broadcast %216 : vector<1x128xf32> to vector<32x128xf32>
    %218 = arith.mulf %214, %217 : vector<32x128xf32>
    %219 = vector.extract_strided_slice %188 {offsets = [0, 16], sizes = [32, 128], strides = [1, 1]} : vector<32x146xf32> to vector<32x128xf32>
    %c6_120 = arith.constant 6 : index
    %c0_121 = arith.constant 0 : index
    %c0_122 = arith.constant 0 : index
    %220 = vector.load %arg13[%c6_120, %c0_121, %c0_122] : memref<9x1x128xf32, #tpu.memory_space<vmem>>, vector<1x1x128xf32>
    %221 = vector.shape_cast %220 : vector<1x1x128xf32> to vector<1x128xf32>
    %222 = vector.broadcast %221 : vector<1x128xf32> to vector<32x128xf32>
    %223 = arith.mulf %219, %222 : vector<32x128xf32>
    %224 = vector.extract_strided_slice %188 {offsets = [0, 17], sizes = [32, 128], strides = [1, 1]} : vector<32x146xf32> to vector<32x128xf32>
    %c7_123 = arith.constant 7 : index
    %c0_124 = arith.constant 0 : index
    %c0_125 = arith.constant 0 : index
    %225 = vector.load %arg13[%c7_123, %c0_124, %c0_125] : memref<9x1x128xf32, #tpu.memory_space<vmem>>, vector<1x1x128xf32>
    %226 = vector.shape_cast %225 : vector<1x1x128xf32> to vector<1x128xf32>
    %227 = vector.broadcast %226 : vector<1x128xf32> to vector<32x128xf32>
    %228 = arith.mulf %224, %227 : vector<32x128xf32>
    %229 = vector.extract_strided_slice %188 {offsets = [0, 18], sizes = [32, 128], strides = [1, 1]} : vector<32x146xf32> to vector<32x128xf32>
    %c8_126 = arith.constant 8 : index
    %c0_127 = arith.constant 0 : index
    %c0_128 = arith.constant 0 : index
    %230 = vector.load %arg13[%c8_126, %c0_127, %c0_128] : memref<9x1x128xf32, #tpu.memory_space<vmem>>, vector<1x1x128xf32>
    %231 = vector.shape_cast %230 : vector<1x1x128xf32> to vector<1x128xf32>
    %232 = vector.broadcast %231 : vector<1x128xf32> to vector<32x128xf32>
    %233 = arith.mulf %229, %232 : vector<32x128xf32>
    %234 = tpu.concatenate %193, %198, %203, %208, %213, %218, %223, %228, %233 in 0 : vector<32x128xf32>, vector<32x128xf32>, vector<32x128xf32>, vector<32x128xf32>, vector<32x128xf32>, vector<32x128xf32>, vector<32x128xf32>, vector<32x128xf32>, vector<32x128xf32> -> vector<288x128xf32>
    %235 = arith.truncf %234 : vector<288x128xf32> to vector<288x128xbf16>
    %c0_129 = arith.constant 0 : index
    %c0_130 = arith.constant 0 : index
    %236 = vector.load %arg11[%c0_129, %c0_130] : memref<64x288xbf16, #tpu.memory_space<vmem>>, vector<64x288xbf16>
    %cst_131 = arith.constant dense<0.000000e+00> : vector<64x128xf32>
    %237 = tpu.matmul %236, %235, %cst_131 {dimension_numbers = #tpu.dot_dimension_numbers<[1], [0], [0], [1], [0, 0, 1, 1], [], []>} : vector<64x288xbf16>, vector<288x128xbf16>, vector<64x128xf32> -> vector<64x128xf32>
    %c0_132 = arith.constant 0 : index
    %c0_133 = arith.constant 0 : index
    %238 = vector.load %arg14[%c0_132, %c0_133] : memref<128x32xf32, #tpu.memory_space<vmem>>, vector<128x32xf32>
    %cst_134 = arith.constant dense<0.000000e+00> : vector<64x32xf32>
    %239 = tpu.matmul %237, %238, %cst_134 {dimension_numbers = #tpu.dot_dimension_numbers<[1], [0], [0], [1], [0, 0, 1, 1], [], []>} : vector<64x128xf32>, vector<128x32xf32>, vector<64x32xf32> -> vector<64x32xf32>
    %c0_135 = arith.constant 0 : index
    %c0_136 = arith.constant 0 : index
    %240 = vector.load %arg12[%c0_135, %c0_136] : memref<64x1xf32, #tpu.memory_space<vmem>>, vector<64x1xf32>
    %241 = vector.broadcast %240 : vector<64x1xf32> to vector<64x32xf32>
    %242 = arith.addf %239, %241 : vector<64x32xf32>
    %243 = arith.negf %242 : vector<64x32xf32>
    %244 = math.exp %243 : vector<64x32xf32>
    %cst_137 = arith.constant 1.000000e+00 : f32
    %245 = vector.broadcast %cst_137 : f32 to vector<64x32xf32>
    %246 = arith.addf %245, %244 : vector<64x32xf32>
    %247 = arith.divf %245, %246 : vector<64x32xf32>
    %248 = arith.mulf %242, %247 : vector<64x32xf32>
    %249 = tpu.transpose %126, [1, 0] : vector<32x128xf32> -> vector<128x32xf32>
    %c0_138 = arith.constant 0 : index
    %c0_139 = arith.constant 0 : index
    %250 = vector.load %arg15[%c0_138, %c0_139] : memref<32x128xf32, #tpu.memory_space<vmem>>, vector<32x128xf32>
    %cst_140 = arith.constant dense<0.000000e+00> : vector<128x128xf32>
    %251 = tpu.matmul %249, %250, %cst_140 {dimension_numbers = #tpu.dot_dimension_numbers<[1], [0], [0], [1], [0, 0, 1, 1], [], []>} : vector<128x32xf32>, vector<32x128xf32>, vector<128x128xf32> -> vector<128x128xf32>
    %c0_141 = arith.constant 0 : index
    %c0_142 = arith.constant 0 : index
    %252 = vector.load %arg16[%c0_141, %c0_142] : memref<1x128xf32, #tpu.memory_space<vmem>>, vector<1x128xf32>
    %253 = vector.broadcast %252 : vector<1x128xf32> to vector<128x128xf32>
    %254 = arith.addf %251, %253 : vector<128x128xf32>
    %255 = tpu.transpose %248, [1, 0] : vector<64x32xf32> -> vector<32x64xf32>
    %c0_143 = arith.constant 0 : index
    %c0_144 = arith.constant 0 : index
    %256 = vector.load %arg17[%c0_143, %c0_144] : memref<64x128xf32, #tpu.memory_space<vmem>>, vector<64x128xf32>
    %cst_145 = arith.constant dense<0.000000e+00> : vector<32x128xf32>
    %257 = tpu.matmul %255, %256, %cst_145 {dimension_numbers = #tpu.dot_dimension_numbers<[1], [0], [0], [1], [0, 0, 1, 1], [], []>} : vector<32x64xf32>, vector<64x128xf32>, vector<32x128xf32> -> vector<32x128xf32>
    %c0_146 = arith.constant 0 : index
    %c0_147 = arith.constant 0 : index
    %258 = vector.load %arg18[%c0_146, %c0_147] : memref<1x128xf32, #tpu.memory_space<vmem>>, vector<1x128xf32>
    %259 = vector.broadcast %258 : vector<1x128xf32> to vector<32x128xf32>
    %260 = arith.addf %257, %259 : vector<32x128xf32>
    %261 = tpu.concatenate %254, %260 in 0 : vector<128x128xf32>, vector<32x128xf32> -> vector<160x128xf32>
    %c0_148 = arith.constant 0 : index
    %c0_149 = arith.constant 0 : index
    %262 = vector.load %arg19[%c0_148, %c0_149] : memref<160x128xf32, #tpu.memory_space<vmem>>, vector<160x128xf32>
    tpu.vector_store %arg19[%c0_148, %c0_149], %261 {strides = array<i32>} : memref<160x128xf32, #tpu.memory_space<vmem>>, vector<160x128xf32>,
    return
  }
}

</mosaic_0001>

<llo_original>
// kernel: yolov7_forward.1
$region0: #{yolov7_forward.1}
  #allocation0 [shape = 'u32[]', space=smem, size = 0x4, offset = 0x4, fixed_abs, tag = 'smem constant byte address 0x4 - core index']
  #allocation1 [shape = 'u32[144,128]{1,0:T(1,128)}', space=vmem, size = 0x12000, scoped, tag = 'internal scratch']
  %s0 = inlined_call_operand.vmem [shape: f32[2,4,256], index: 0, kind: input, shape index: {}]
  %s1 = inlined_call_operand.vmem [shape: bf16[16,36], index: 1, kind: input, shape index: {}]
  %s2 = inlined_call_operand.vmem [shape: f32[16,1], index: 2, kind: input, shape index: {}]
  %s3 = inlined_call_operand.vmem [shape: f32[9,1,512], index: 3, kind: input, shape index: {}]
  %s4 = inlined_call_operand.vmem [shape: bf16[32,144], index: 4, kind: input, shape index: {}]
  %s5 = inlined_call_operand.vmem [shape: f32[32,1], index: 5, kind: input, shape index: {}]
  %s6 = inlined_call_operand.vmem [shape: f32[9,1,512], index: 6, kind: input, shape index: {}]
  %s7 = inlined_call_operand.hbm [shape: f32[512,128], index: 7, kind: input, shape index: {}]
  %s8 = inlined_call_operand.vmem [shape: bf16[32,288], index: 8, kind: input, shape index: {}]
  %s9 = inlined_call_operand.vmem [shape: f32[32,1], index: 9, kind: input, shape index: {}]
  %s10 = inlined_call_operand.vmem [shape: f32[9,1,128], index: 10, kind: input, shape index: {}]
  %s11 = inlined_call_operand.vmem [shape: bf16[64,288], index: 11, kind: input, shape index: {}]
  %s12 = inlined_call_operand.vmem [shape: f32[64,1], index: 12, kind: input, shape index: {}]
  %s13 = inlined_call_operand.vmem [shape: f32[9,1,128], index: 13, kind: input, shape index: {}]
  %s14 = inlined_call_operand.vmem [shape: f32[128,32], index: 14, kind: input, shape index: {}]
  %s15 = inlined_call_operand.vmem [shape: f32[32,128], index: 15, kind: input, shape index: {}]
  %s16 = inlined_call_operand.vmem [shape: f32[1,128], index: 16, kind: input, shape index: {}]
  %s17 = inlined_call_operand.vmem [shape: f32[64,128], index: 17, kind: input, shape index: {}]
  %s18 = inlined_call_operand.vmem [shape: f32[1,128], index: 18, kind: input, shape index: {}]
  %s19 = inlined_call_operand.vmem [shape: f32[160,128], index: 19, kind: output, shape index: {}]
  %s20 = sld [smem:[#allocation0]]
  $region90: #{yolov7_forward.1} parent=0
    _
  %s22 = ssub.s32 1, %s20
  %s23 = scalar_select 0, %s22, %s20
  $region1: #{yolov7_forward.1} parent=0
    #allocation2 [shape = 'u8[262144]{0}', space=vmem, size = 0x40000, scoped, tag = 'input window, operand 7, single buffered']
    #allocation3 [shape = 's32[1]{0}', space=sflag, size = 0x4, scoped, tag = 'scoped memory for yolov7_forward.1']
    %24 = vsyncpa [#allocation3], 0
    // Predicated region
    $region2: #{yolov7_forward.1} parent=1 // pred_check
      _
    $region3: #{yolov7_forward.1} parent=1 // pred_check_branch
      %26 = sbr.rel (0) target = $region5
    $region4: #{yolov7_forward.1} parent=1 // pred_region
      _
    $region5: #{yolov7_forward.1} parent=1 // pred_fallthru
      _
    // Predicated region
    $region6: #{yolov7_forward.1} parent=1 // pred_check
      _
    $region7: #{yolov7_forward.1} parent=1 // pred_check_branch
      %28 = sbr.rel (0) target = $region9
    $region8: #{yolov7_forward.1} parent=1 // pred_region
      _
    $region9: #{yolov7_forward.1} parent=1 // pred_fallthru
      _
    // Predicated region
    $region10: #{yolov7_forward.1} parent=1 // pred_check
      _
    $region11: #{yolov7_forward.1} parent=1 // pred_check_branch
      %30 = sbr.rel (0) target = $region13
    $region12: #{yolov7_forward.1} parent=1 // pred_region
      _
    $region13: #{yolov7_forward.1} parent=1 // pred_fallthru
      _
    // Predicated region
    $region14: #{yolov7_forward.1} parent=1 // pred_check
      _
    $region15: #{yolov7_forward.1} parent=1 // pred_check_branch
      %32 = sbr.rel (0) target = $region17
    $region16: #{yolov7_forward.1} parent=1 // pred_region
      _
    $region17: #{yolov7_forward.1} parent=1 // pred_fallthru
      _
    // Predicated region
    $region18: #{yolov7_forward.1} parent=1 // pred_check
      _
    $region19: #{yolov7_forward.1} parent=1 // pred_check_branch
      %34 = sbr.rel (0) target = $region21
    $region20: #{yolov7_forward.1} parent=1 // pred_region
      _
    $region21: #{yolov7_forward.1} parent=1 // pred_fallthru
      _
    // Predicated region
    $region22: #{yolov7_forward.1} parent=1 // pred_check
      _
    $region23: #{yolov7_forward.1} parent=1 // pred_check_branch
      %36 = sbr.rel (0) target = $region25
    $region24: #{yolov7_forward.1} parent=1 // pred_region
      _
    $region25: #{yolov7_forward.1} parent=1 // pred_fallthru
      _
    // Predicated region
    $region26: #{yolov7_forward.1} parent=1 // pred_check
      _
    $region27: #{yolov7_forward.1} parent=1 // pred_check_branch
      %38 = sbr.rel (0) target = $region29
    $region28: #{yolov7_forward.1} parent=1 // pred_region
      _
    $region29: #{yolov7_forward.1} parent=1 // pred_fallthru
      _
    // Predicated region
    $region30: #{yolov7_forward.1} parent=1 // pred_check
      _
    $region31: #{yolov7_forward.1} parent=1 // pred_check_branch
      %40 = sbr.rel (0) target = $region33
    $region32: #{yolov7_forward.1} parent=1 // pred_region
      %s42 = ssub.s32 8192, 8192
      %43 = vsyncadd [#allocation3], %s42
      %s44 = sshll.u32 [#allocation2], 4
      %s45 = int_to_ptr.vmem [resolvable:$true] %s44
      %50 = dma.hbm_to_vmem [thread:$0]  %s7, 8192, %s45, [#allocation3], 128, 128, 8
    $region33: #{yolov7_forward.1} parent=1 // pred_fallthru
      _
    // Predicated region
    $region34: #{yolov7_forward.1} parent=1 // pred_check
      _
    $region35: #{yolov7_forward.1} parent=1 // pred_check_branch
      %52 = sbr.rel (0) target = $region37
    $region36: #{yolov7_forward.1} parent=1 // pred_region
      _
    $region37: #{yolov7_forward.1} parent=1 // pred_fallthru
      _
    // Predicated region
    $region38: #{yolov7_forward.1} parent=1 // pred_check
      _
    $region39: #{yolov7_forward.1} parent=1 // pred_check_branch
      %54 = sbr.rel (0) target = $region41
    $region40: #{yolov7_forward.1} parent=1 // pred_region
      _
    $region41: #{yolov7_forward.1} parent=1 // pred_fallthru
      _
    // Predicated region
    $region42: #{yolov7_forward.1} parent=1 // pred_check
      _
    $region43: #{yolov7_forward.1} parent=1 // pred_check_branch
      %56 = sbr.rel (0) target = $region45
    $region44: #{yolov7_forward.1} parent=1 // pred_region
      _
    $region45: #{yolov7_forward.1} parent=1 // pred_fallthru
      _
    // Predicated region
    $region46: #{yolov7_forward.1} parent=1 // pred_check
      _
    $region47: #{yolov7_forward.1} parent=1 // pred_check_branch
      %58 = sbr.rel (0) target = $region49
    $region48: #{yolov7_forward.1} parent=1 // pred_region
      _
    $region49: #{yolov7_forward.1} parent=1 // pred_fallthru
      _
    // Predicated region
    $region50: #{yolov7_forward.1} parent=1 // pred_check
      _
    $region51: #{yolov7_forward.1} parent=1 // pred_check_branch
      %60 = sbr.rel (0) target = $region53
    $region52: #{yolov7_forward.1} parent=1 // pred_region
      _
    $region53: #{yolov7_forward.1} parent=1 // pred_fallthru
      _
    // Predicated region
    $region54: #{yolov7_forward.1} parent=1 // pred_check
      _
    $region55: #{yolov7_forward.1} parent=1 // pred_check_branch
      %62 = sbr.rel (0) target = $region57
    $region56: #{yolov7_forward.1} parent=1 // pred_region
      _
    $region57: #{yolov7_forward.1} parent=1 // pred_fallthru
      _
    // Predicated region
    $region58: #{yolov7_forward.1} parent=1 // pred_check
      _
    $region59: #{yolov7_forward.1} parent=1 // pred_check_branch
      %64 = sbr.rel (0) target = $region61
    $region60: #{yolov7_forward.1} parent=1 // pred_region
      _
    $region61: #{yolov7_forward.1} parent=1 // pred_fallthru
      _
    // Predicated region
    $region62: #{yolov7_forward.1} parent=1 // pred_check
      _
    $region63: #{yolov7_forward.1} parent=1 // pred_check_branch
      %66 = sbr.rel (0) target = $region65
    $region64: #{yolov7_forward.1} parent=1 // pred_region
      _
    $region65: #{yolov7_forward.1} parent=1 // pred_fallthru
      _
    // Predicated region
    $region66: #{yolov7_forward.1} parent=1 // pred_check
      _
    $region67: #{yolov7_forward.1} parent=1 // pred_check_branch
      %68 = sbr.rel (0) target = $region69
    $region68: #{yolov7_forward.1} parent=1 // pred_region
      _
    $region69: #{yolov7_forward.1} parent=1 // pred_fallthru
      _
    // Predicated region
    $region70: #{yolov7_forward.1} parent=1 // pred_check
      _
    $region71: #{yolov7_forward.1} parent=1 // pred_check_branch
      %70 = sbr.rel (0) target = $region73
    $region72: #{yolov7_forward.1} parent=1 // pred_region
      _
    $region73: #{yolov7_forward.1} parent=1 // pred_fallthru
      _
    // Predicated region
    $region74: #{yolov7_forward.1} parent=1 // pred_check
      _
    $region75: #{yolov7_forward.1} parent=1 // pred_check_branch
      %72 = sbr.rel (0) target = $region77
    $region76: #{yolov7_forward.1} parent=1 // pred_region
      _
    $region77: #{yolov7_forward.1} parent=1 // pred_fallthru
      _
    // Predicated region
    $region78: #{yolov7_forward.1} parent=1 // pred_check
      _
    $region79: #{yolov7_forward.1} parent=1 // pred_check_branch
      %74 = sbr.rel (0) target = $region81
    $region80: #{yolov7_forward.1} parent=1 // pred_region
      %75 = dma.done [#allocation3], 8192
    $region81: #{yolov7_forward.1} parent=1 // pred_fallthru
      _
    %v77 = vld [vmem:[%s0] sm:$0xff]
    %s78 = scalar_lea.vmem %s0, 8
    %v79 = vld [vmem:[%s78] sm:$0xff]
    %v81 = vcombine.high %v77, %v77
    %v83 = vcombine.high %v79, %v79
    %84 = vrot.lane.b32.xlu0 %v77, 17
    %v85 = vpop.permute.xlu0 %84
    %86 = vrot.lane.b32.xlu0 %v81, 17
    %v87 = vpop.permute.xlu0 %86
    %88 = vrot.lane.b32.xlu0 %v79, 17
    %v89 = vpop.permute.xlu0 %88
    %90 = vrot.lane.b32.xlu0 %v83, 17
    %v91 = vpop.permute.xlu0 %90
    %vm92 = vcmask 138240
    %v93 = vsel %vm92, %v85, %v87
    %v94 = vsel %vm92, %v87, %v89
    %v95 = vsel %vm92, %v89, %v91
    %v101 = vsel %vm92, 0.0, %v85
    %v102 = vsel %vm92, %v91, 0.0
    %v103 = vld [vmem:[%s3] sm:$0xf]
    %v105 = vlaneseq
    %v106 = vshrl.u32 %v105, 7
    %v107 = vsub.s32 0, %v106
    %v108 = vrot.slane %v103, %v107
    %v109 = vlaneseq
    %v110 = vshrl.u32 %v109, 7
    %v111 = vsub.s32 1, %v110
    %v112 = vrot.slane %v103, %v111
    %v113 = vlaneseq
    %v114 = vshrl.u32 %v113, 7
    %v115 = vsub.s32 2, %v114
    %v116 = vrot.slane %v103, %v115
    %v117 = vlaneseq
    %v118 = vshrl.u32 %v117, 7
    %v119 = vsub.s32 3, %v118
    %v120 = vrot.slane %v103, %v119
    %v125 = vmul.f32 %v101, %v108
    %v126 = vmul.f32 %v93, %v112
    %v127 = vmul.f32 %v94, %v116
    %v128 = vmul.f32 %v95, %v120
    %s129 = scalar_lea.vmem %s3, 4
    %v130 = vld [vmem:[%s129] sm:$0xf]
    %v132 = vlaneseq
    %v133 = vshrl.u32 %v132, 7
    %v134 = vsub.s32 0, %v133
    %v135 = vrot.slane %v130, %v134
    %v136 = vlaneseq
    %v137 = vshrl.u32 %v136, 7
    %v138 = vsub.s32 1, %v137
    %v139 = vrot.slane %v130, %v138
    %v140 = vlaneseq
    %v141 = vshrl.u32 %v140, 7
    %v142 = vsub.s32 2, %v141
    %v143 = vrot.slane %v130, %v142
    %v144 = vlaneseq
    %v145 = vshrl.u32 %v144, 7
    %v146 = vsub.s32 3, %v145
    %v147 = vrot.slane %v130, %v146
    %148 = vrot.lane.b32.xlu0 %v135, 1
    %v149 = vpop.permute.xlu0 %148
    %150 = vrot.lane.b32.xlu0 %v139, 1
    %v151 = vpop.permute.xlu0 %150
    %152 = vrot.lane.b32.xlu0 %v143, 1
    %v153 = vpop.permute.xlu0 %152
    %154 = vrot.lane.b32.xlu0 %v147, 1
    %v155 = vpop.permute.xlu0 %154
    %vm156 = vcmask 7168
    %v157 = vsel %vm156, %v149, %v151
    %v158 = vsel %vm156, %v151, %v153
    %v159 = vsel %vm156, %v153, %v155
    %v165 = vmul.f32 %v101, %v149
    %v166 = vmul.f32 %v93, %v157
    %v167 = vmul.f32 %v94, %v158
    %v168 = vmul.f32 %v95, %v159
    %v169 = vmul.f32 %v102, %v155
    %s170 = scalar_lea.vmem %s3, 8
    %v171 = vld [vmem:[%s170] sm:$0xf]
    %v173 = vlaneseq
    %v174 = vshrl.u32 %v173, 7
    %v175 = vsub.s32 0, %v174
    %v176 = vrot.slane %v171, %v175
    %v177 = vlaneseq
    %v178 = vshrl.u32 %v177, 7
    %v179 = vsub.s32 1, %v178
    %v180 = vrot.slane %v171, %v179
    %v181 = vlaneseq
    %v182 = vshrl.u32 %v181, 7
    %v183 = vsub.s32 2, %v182
    %v184 = vrot.slane %v171, %v183
    %v185 = vlaneseq
    %v186 = vshrl.u32 %v185, 7
    %v187 = vsub.s32 3, %v186
    %v188 = vrot.slane %v171, %v187
    %189 = vrot.lane.b32.xlu0 %v176, 2
    %v190 = vpop.permute.xlu0 %189
    %191 = vrot.lane.b32.xlu0 %v180, 2
    %v192 = vpop.permute.xlu0 %191
    %193 = vrot.lane.b32.xlu0 %v184, 2
    %v194 = vpop.permute.xlu0 %193
    %195 = vrot.lane.b32.xlu0 %v188, 2
    %v196 = vpop.permute.xlu0 %195
    %vm197 = vcmask 15360
    %v198 = vsel %vm197, %v190, %v192
    %v199 = vsel %vm197, %v192, %v194
    %v200 = vsel %vm197, %v194, %v196
    %v206 = vmul.f32 %v101, %v190
    %v207 = vmul.f32 %v93, %v198
    %v208 = vmul.f32 %v94, %v199
    %v209 = vmul.f32 %v95, %v200
    %v210 = vmul.f32 %v102, %v196
    %s211 = scalar_lea.vmem %s3, 12
    %v212 = vld [vmem:[%s211] sm:$0xf]
    %v214 = vlaneseq
    %v215 = vshrl.u32 %v214, 7
    %v216 = vsub.s32 0, %v215
    %v217 = vrot.slane %v212, %v216
    %v218 = vlaneseq
    %v219 = vshrl.u32 %v218, 7
    %v220 = vsub.s32 1, %v219
    %v221 = vrot.slane %v212, %v220
    %v222 = vlaneseq
    %v223 = vshrl.u32 %v222, 7
    %v224 = vsub.s32 2, %v223
    %v225 = vrot.slane %v212, %v224
    %v226 = vlaneseq
    %v227 = vshrl.u32 %v226, 7
    %v228 = vsub.s32 3, %v227
    %v229 = vrot.slane %v212, %v228
    %230 = vrot.lane.b32.xlu0 %v217, 16
    %v231 = vpop.permute.xlu0 %230
    %232 = vrot.lane.b32.xlu0 %v221, 16
    %v233 = vpop.permute.xlu0 %232
    %234 = vrot.lane.b32.xlu0 %v225, 16
    %v235 = vpop.permute.xlu0 %234
    %236 = vrot.lane.b32.xlu0 %v229, 16
    %v237 = vpop.permute.xlu0 %236
    %vm238 = vcmask 130048
    %v239 = vsel %vm238, %v231, %v233
    %v240 = vsel %vm238, %v233, %v235
    %v241 = vsel %vm238, %v235, %v237
    %v247 = vmul.f32 %v101, %v231
    %v248 = vmul.f32 %v93, %v239
    %v249 = vmul.f32 %v94, %v240
    %v250 = vmul.f32 %v95, %v241
    %v251 = vmul.f32 %v102, %v237
    %s252 = scalar_lea.vmem %s3, 16
    %v253 = vld [vmem:[%s252] sm:$0xf]
    %v255 = vlaneseq
    %v256 = vshrl.u32 %v255, 7
    %v257 = vsub.s32 0, %v256
    %v258 = vrot.slane %v253, %v257
    %v259 = vlaneseq
    %v260 = vshrl.u32 %v259, 7
    %v261 = vsub.s32 1, %v260
    %v262 = vrot.slane %v253, %v261
    %v263 = vlaneseq
    %v264 = vshrl.u32 %v263, 7
    %v265 = vsub.s32 2, %v264
    %v266 = vrot.slane %v253, %v265
    %v267 = vlaneseq
    %v268 = vshrl.u32 %v267, 7
    %v269 = vsub.s32 3, %v268
    %v270 = vrot.slane %v253, %v269
    %271 = vrot.lane.b32.xlu0 %v258, 17
    %v272 = vpop.permute.xlu0 %271
    %273 = vrot.lane.b32.xlu0 %v262, 17
    %v274 = vpop.permute.xlu0 %273
    %275 = vrot.lane.b32.xlu0 %v266, 17
    %v276 = vpop.permute.xlu0 %275
    %277 = vrot.lane.b32.xlu0 %v270, 17
    %v278 = vpop.permute.xlu0 %277
    %v279 = vsel %vm92, %v272, %v274
    %v280 = vsel %vm92, %v274, %v276
    %v281 = vsel %vm92, %v276, %v278
    %v287 = vmul.f32 %v101, %v272
    %v288 = vmul.f32 %v93, %v279
    %v289 = vmul.f32 %v94, %v280
    %v290 = vmul.f32 %v95, %v281
    %v291 = vmul.f32 %v102, %v278
    %s292 = scalar_lea.vmem %s3, 20
    %v293 = vld [vmem:[%s292] sm:$0xf]
    %v295 = vlaneseq
    %v296 = vshrl.u32 %v295, 7
    %v297 = vsub.s32 0, %v296
    %v298 = vrot.slane %v293, %v297
    %v299 = vlaneseq
    %v300 = vshrl.u32 %v299, 7
    %v301 = vsub.s32 1, %v300
    %v302 = vrot.slane %v293, %v301
    %v303 = vlaneseq
    %v304 = vshrl.u32 %v303, 7
    %v305 = vsub.s32 2, %v304
    %v306 = vrot.slane %v293, %v305
    %v307 = vlaneseq
    %v308 = vshrl.u32 %v307, 7
    %v309 = vsub.s32 3, %v308
    %v310 = vrot.slane %v293, %v309
    %311 = vrot.lane.b32.xlu0 %v298, 18
    %v312 = vpop.permute.xlu0 %311
    %313 = vrot.lane.b32.xlu0 %v302, 18
    %v314 = vpop.permute.xlu0 %313
    %315 = vrot.lane.b32.xlu0 %v306, 18
    %v316 = vpop.permute.xlu0 %315
    %317 = vrot.lane.b32.xlu0 %v310, 18
    %v318 = vpop.permute.xlu0 %317
    %vm319 = vcmask 146432
    %v320 = vsel %vm319, %v312, %v314
    %v321 = vsel %vm319, %v314, %v316
    %v322 = vsel %vm319, %v316, %v318
    %v328 = vmul.f32 %v101, %v312
    %v329 = vmul.f32 %v93, %v320
    %v330 = vmul.f32 %v94, %v321
    %v331 = vmul.f32 %v95, %v322
    %v332 = vmul.f32 %v102, %v318
    %s333 = scalar_lea.vmem %s3, 24
    %v334 = vld [vmem:[%s333] sm:$0xf]
    %v336 = vlaneseq
    %v337 = vshrl.u32 %v336, 7
    %v338 = vsub.s32 0, %v337
    %v339 = vrot.slane %v334, %v338
    %v340 = vlaneseq
    %v341 = vshrl.u32 %v340, 7
    %v342 = vsub.s32 1, %v341
    %v343 = vrot.slane %v334, %v342
    %v344 = vlaneseq
    %v345 = vshrl.u32 %v344, 7
    %v346 = vsub.s32 2, %v345
    %v347 = vrot.slane %v334, %v346
    %v348 = vlaneseq
    %v349 = vshrl.u32 %v348, 7
    %v350 = vsub.s32 3, %v349
    %v351 = vrot.slane %v334, %v350
    %352 = vrot.lane.b32.xlu0 %v339, 32
    %v353 = vpop.permute.xlu0 %352
    %354 = vrot.lane.b32.xlu0 %v343, 32
    %v355 = vpop.permute.xlu0 %354
    %356 = vrot.lane.b32.xlu0 %v347, 32
    %v357 = vpop.permute.xlu0 %356
    %358 = vrot.lane.b32.xlu0 %v351, 32
    %v359 = vpop.permute.xlu0 %358
    %vm360 = vcmask 261120
    %v361 = vsel %vm360, %v353, %v355
    %v362 = vsel %vm360, %v355, %v357
    %v363 = vsel %vm360, %v357, %v359
    %v369 = vmul.f32 %v101, %v353
    %v370 = vmul.f32 %v93, %v361
    %v371 = vmul.f32 %v94, %v362
    %v372 = vmul.f32 %v95, %v363
    %v373 = vmul.f32 %v102, %v359
    %s374 = scalar_lea.vmem %s3, 28
    %v375 = vld [vmem:[%s374] sm:$0xf]
    %v377 = vlaneseq
    %v378 = vshrl.u32 %v377, 7
    %v379 = vsub.s32 0, %v378
    %v380 = vrot.slane %v375, %v379
    %v381 = vlaneseq
    %v382 = vshrl.u32 %v381, 7
    %v383 = vsub.s32 1, %v382
    %v384 = vrot.slane %v375, %v383
    %v385 = vlaneseq
    %v386 = vshrl.u32 %v385, 7
    %v387 = vsub.s32 2, %v386
    %v388 = vrot.slane %v375, %v387
    %v389 = vlaneseq
    %v390 = vshrl.u32 %v389, 7
    %v391 = vsub.s32 3, %v390
    %v392 = vrot.slane %v375, %v391
    %393 = vrot.lane.b32.xlu0 %v380, 33
    %v394 = vpop.permute.xlu0 %393
    %395 = vrot.lane.b32.xlu0 %v384, 33
    %v396 = vpop.permute.xlu0 %395
    %397 = vrot.lane.b32.xlu0 %v388, 33
    %v398 = vpop.permute.xlu0 %397
    %399 = vrot.lane.b32.xlu0 %v392, 33
    %v400 = vpop.permute.xlu0 %399
    %vm401 = vcmask 269312
    %v402 = vsel %vm401, %v394, %v396
    %v403 = vsel %vm401, %v396, %v398
    %v404 = vsel %vm401, %v398, %v400
    %v410 = vmul.f32 %v101, %v394
    %v411 = vmul.f32 %v93, %v402
    %v412 = vmul.f32 %v94, %v403
    %v413 = vmul.f32 %v95, %v404
    %v414 = vmul.f32 %v102, %v400
    %s415 = scalar_lea.vmem %s3, 32
    %v416 = vld [vmem:[%s415] sm:$0xf]
    %v418 = vlaneseq
    %v419 = vshrl.u32 %v418, 7
    %v420 = vsub.s32 0, %v419
    %v421 = vrot.slane %v416, %v420
    %v422 = vlaneseq
    %v423 = vshrl.u32 %v422, 7
    %v424 = vsub.s32 1, %v423
    %v425 = vrot.slane %v416, %v424
    %v426 = vlaneseq
    %v427 = vshrl.u32 %v426, 7
    %v428 = vsub.s32 2, %v427
    %v429 = vrot.slane %v416, %v428
    %v430 = vlaneseq
    %v431 = vshrl.u32 %v430, 7
    %v432 = vsub.s32 3, %v431
    %v433 = vrot.slane %v416, %v432
    %434 = vrot.lane.b32.xlu0 %v421, 34
    %v435 = vpop.permute.xlu0 %434
    %436 = vrot.lane.b32.xlu0 %v425, 34
    %v437 = vpop.permute.xlu0 %436
    %438 = vrot.lane.b32.xlu0 %v429, 34
    %v439 = vpop.permute.xlu0 %438
    %440 = vrot.lane.b32.xlu0 %v433, 34
    %v441 = vpop.permute.xlu0 %440
    %vm442 = vcmask 277504
    %v443 = vsel %vm442, %v435, %v437
    %v444 = vsel %vm442, %v437, %v439
    %v445 = vsel %vm442, %v439, %v441
    %v451 = vmul.f32 %v101, %v435
    %v452 = vmul.f32 %v93, %v443
    %v453 = vmul.f32 %v94, %v444
    %v454 = vmul.f32 %v95, %v445
    %v455 = vmul.f32 %v102, %v441
    %v461 = vrot.slane %v165, 4
    %v462 = vrot.slane %v166, 4
    %v463 = vrot.slane %v167, 4
    %v464 = vrot.slane %v168, 4
    %v465 = vrot.slane %v169, 4
    %466 = vrot.lane.b32.xlu0 %v461, 127
    %v467 = vpop.permute.xlu0 %466
    %468 = vrot.lane.b32.xlu0 %v462, 127
    %v469 = vpop.permute.xlu0 %468
    %470 = vrot.lane.b32.xlu0 %v463, 127
    %v471 = vpop.permute.xlu0 %470
    %472 = vrot.lane.b32.xlu0 %v464, 127
    %v473 = vpop.permute.xlu0 %472
    %474 = vrot.lane.b32.xlu0 %v465, 127
    %v475 = vpop.permute.xlu0 %474
    %vm476 = vcmask 1039360
    %v477 = vsel %vm476, %v467, %v469
    %v478 = vsel %vm476, %v469, %v471
    %v479 = vsel %vm476, %v471, %v473
    %v480 = vsel %vm476, %v473, %v475
    %490 = vrot.lane.b32.xlu0 %v206, 126
    %v491 = vpop.permute.xlu0 %490
    %492 = vrot.lane.b32.xlu0 %v207, 126
    %v493 = vpop.permute.xlu0 %492
    %494 = vrot.lane.b32.xlu0 %v208, 126
    %v495 = vpop.permute.xlu0 %494
    %496 = vrot.lane.b32.xlu0 %v209, 126
    %v497 = vpop.permute.xlu0 %496
    %498 = vrot.lane.b32.xlu0 %v210, 126
    %v499 = vpop.permute.xlu0 %498
    %vm500 = vcmask 1031168
    %v501 = vsel %vm500, %v491, %v493
    %v502 = vsel %vm500, %v493, %v495
    %v503 = vsel %vm500, %v495, %v497
    %v504 = vsel %vm500, %v497, %v499
    %v514 = vrot.slane %v247, 4
    %v515 = vrot.slane %v248, 4
    %v516 = vrot.slane %v249, 4
    %v517 = vrot.slane %v250, 4
    %v518 = vrot.slane %v251, 4
    %519 = vrot.lane.b32.xlu0 %v514, 112
    %v520 = vpop.permute.xlu0 %519
    %521 = vrot.lane.b32.xlu0 %v515, 112
    %v522 = vpop.permute.xlu0 %521
    %523 = vrot.lane.b32.xlu0 %v516, 112
    %v524 = vpop.permute.xlu0 %523
    %525 = vrot.lane.b32.xlu0 %v517, 112
    %v526 = vpop.permute.xlu0 %525
    %527 = vrot.lane.b32.xlu0 %v518, 112
    %v528 = vpop.permute.xlu0 %527
    %vm529 = vcmask 916480
    %v530 = vsel %vm529, %v520, %v522
    %v531 = vsel %vm529, %v522, %v524
    %v532 = vsel %vm529, %v524, %v526
    %v533 = vsel %vm529, %v526, %v528
    %543 = vrot.lane.b32.xlu0 %v287, 111
    %v544 = vpop.permute.xlu0 %543
    %545 = vrot.lane.b32.xlu0 %v288, 111
    %v546 = vpop.permute.xlu0 %545
    %547 = vrot.lane.b32.xlu0 %v289, 111
    %v548 = vpop.permute.xlu0 %547
    %549 = vrot.lane.b32.xlu0 %v290, 111
    %v550 = vpop.permute.xlu0 %549
    %551 = vrot.lane.b32.xlu0 %v291, 111
    %v552 = vpop.permute.xlu0 %551
    %vm553 = vcmask 908288
    %v554 = vsel %vm553, %v544, %v546
    %v555 = vsel %vm553, %v546, %v548
    %v556 = vsel %vm553, %v548, %v550
    %v557 = vsel %vm553, %v550, %v552
    %v567 = vrot.slane %v328, 4
    %v568 = vrot.slane %v329, 4
    %v569 = vrot.slane %v330, 4
    %v570 = vrot.slane %v331, 4
    %v571 = vrot.slane %v332, 4
    %572 = vrot.lane.b32.xlu0 %v567, 110
    %v573 = vpop.permute.xlu0 %572
    %574 = vrot.lane.b32.xlu0 %v568, 110
    %v575 = vpop.permute.xlu0 %574
    %576 = vrot.lane.b32.xlu0 %v569, 110
    %v577 = vpop.permute.xlu0 %576
    %578 = vrot.lane.b32.xlu0 %v570, 110
    %v579 = vpop.permute.xlu0 %578
    %580 = vrot.lane.b32.xlu0 %v571, 110
    %v581 = vpop.permute.xlu0 %580
    %vm582 = vcmask 900096
    %v583 = vsel %vm582, %v573, %v575
    %v584 = vsel %vm582, %v575, %v577
    %v585 = vsel %vm582, %v577, %v579
    %v586 = vsel %vm582, %v579, %v581
    %596 = vrot.lane.b32.xlu0 %v369, 96
    %v597 = vpop.permute.xlu0 %596
    %598 = vrot.lane.b32.xlu0 %v370, 96
    %v599 = vpop.permute.xlu0 %598
    %600 = vrot.lane.b32.xlu0 %v371, 96
    %v601 = vpop.permute.xlu0 %600
    %602 = vrot.lane.b32.xlu0 %v372, 96
    %v603 = vpop.permute.xlu0 %602
    %604 = vrot.lane.b32.xlu0 %v373, 96
    %v605 = vpop.permute.xlu0 %604
    %vm606 = vcmask 785408
    %v607 = vsel %vm606, %v597, %v599
    %v608 = vsel %vm606, %v599, %v601
    %v609 = vsel %vm606, %v601, %v603
    %v610 = vsel %vm606, %v603, %v605
    %v620 = vrot.slane %v410, 4
    %v621 = vrot.slane %v411, 4
    %v622 = vrot.slane %v412, 4
    %v623 = vrot.slane %v413, 4
    %v624 = vrot.slane %v414, 4
    %625 = vrot.lane.b32.xlu0 %v620, 95
    %v626 = vpop.permute.xlu0 %625
    %627 = vrot.lane.b32.xlu0 %v621, 95
    %v628 = vpop.permute.xlu0 %627
    %629 = vrot.lane.b32.xlu0 %v622, 95
    %v630 = vpop.permute.xlu0 %629
    %631 = vrot.lane.b32.xlu0 %v623, 95
    %v632 = vpop.permute.xlu0 %631
    %633 = vrot.lane.b32.xlu0 %v624, 95
    %v634 = vpop.permute.xlu0 %633
    %vm635 = vcmask 777216
    %v636 = vsel %vm635, %v626, %v628
    %v637 = vsel %vm635, %v628, %v630
    %v638 = vsel %vm635, %v630, %v632
    %v639 = vsel %vm635, %v632, %v634
    %649 = vrot.lane.b32.xlu0 %v451, 94
    %v650 = vpop.permute.xlu0 %649
    %651 = vrot.lane.b32.xlu0 %v452, 94
    %v652 = vpop.permute.xlu0 %651
    %653 = vrot.lane.b32.xlu0 %v453, 94
    %v654 = vpop.permute.xlu0 %653
    %655 = vrot.lane.b32.xlu0 %v454, 94
    %v656 = vpop.permute.xlu0 %655
    %657 = vrot.lane.b32.xlu0 %v455, 94
    %v658 = vpop.permute.xlu0 %657
    %vm659 = vcmask 769024
    %v660 = vsel %vm659, %v650, %v652
    %v661 = vsel %vm659, %v652, %v654
    %v662 = vsel %vm659, %v654, %v656
    %v663 = vsel %vm659, %v656, %v658
    %vm668 = vcmask 1043456
    %v669 = vsel %vm668, %v125, %v477
    %v670 = vsel %vm668, %v126, %v478
    %v671 = vsel %vm668, %v127, %v479
    %v672 = vsel %vm668, %v128, %v480
    %v673 = vsel %vm668, %v501, %v530
    %v674 = vsel %vm668, %v502, %v531
    %v675 = vsel %vm668, %v503, %v532
    %v676 = vsel %vm668, %v504, %v533
    %v677 = vsel %vm668, %v554, %v583
    %v678 = vsel %vm668, %v555, %v584
    %v679 = vsel %vm668, %v556, %v585
    %v680 = vsel %vm668, %v557, %v586
    %v681 = vsel %vm668, %v607, %v636
    %v682 = vsel %vm668, %v608, %v637
    %v683 = vsel %vm668, %v609, %v638
    %v684 = vsel %vm668, %v610, %v639
    %v685 = vpack.c.bf16 %v673, %v669
    %v686 = vpack.c.bf16 %v674, %v670
    %v687 = vpack.c.bf16 %v675, %v671
    %v688 = vpack.c.bf16 %v676, %v672
    %v689 = vpack.c.bf16 %v681, %v677
    %v690 = vpack.c.bf16 %v682, %v678
    %v691 = vpack.c.bf16 %v683, %v679
    %v692 = vpack.c.bf16 %v684, %v680
    %v693 = vpack.c.bf16 %v660, %v660
    %v694 = vpack.c.bf16 %v661, %v661
    %v695 = vpack.c.bf16 %v662, %v662
    %v696 = vpack.c.bf16 %v663, %v663
    %v697 = vld [vmem:[%s1] sm:$0xf]
    %v698 = vld [vmem:[%s1 + $0x4] sm:$0xf]
    %v699 = vld [vmem:[%s2] sm:$0xff]
    %v700 = vld [vmem:[%s2 + $0x8] sm:$0xff]
    %702 = vset.pattern.permute.xlu0 0
    %703 = vperm.xlu0 %702, %v699
    %v704 = vpop.permute.xlu0 %703
    %707 = vset.pattern.permute.xlu0 0
    %708 = vperm.xlu0 %707, %v700
    %v709 = vpop.permute.xlu0 %708
    %v713 = vunpack.c.l.b16 %v697
    %v714 = vunpack.c.l.b16 %v698
    %v715 = vpack.c.b16 %v714, %v713
    %vm716 = vcmask 293888
    %v718 = vsel %vm716, %v715, 0
    %vm720 = vcmask 1041408
    %v722 = vsel %vm720, %v693, 0
    %v725 = vsel %vm720, %v694, 0
    %v728 = vsel %vm720, %v695, 0
    %v731 = vsel %vm720, %v696, 0
    %733 = vmatprep.subr.bf16.mxu0 0
    %734 = vmatpush1.bf16.msra.mxu0 0
    %735 = vmatprep.subr.bf16.mxu0 0
    %736 = vmatpush1.bf16.msra.mxu0 0
    %737 = vmatprep.subr.bf16.mxu0 0
    %738 = vmatpush1.bf16.msra.mxu0 0
    %739 = vmatprep.subr.bf16.mxu0 0
    %740 = vmatpush1.bf16.msra.mxu0 0
    %741 = vmatprep.subr.bf16.mxu0 0
    %742 = vmatpush1.bf16.msra.mxu0 0
    %743 = vmatprep.subr.bf16.mxu0 %v725
    %744 = vmatpush1.bf16.msra.mxu0 %v722
    %745 = vmatprep.subr.bf16.mxu0 %v690
    %746 = vmatpush1.bf16.msra.mxu0 %v689
    %747 = vmatprep.subr.bf16.mxu0 %v686
    %748 = vmatpush1.bf16.msra.mxu0 %v685
    %749 = vmatprep.subr.bf16.mxu0 0
    %750 = vmatpush2.bf16.msra.mxu0 0
    %751 = vmatprep.subr.bf16.mxu0 0
    %752 = vmatpush2.bf16.msra.mxu0 0
    %753 = vmatprep.subr.bf16.mxu0 0
    %754 = vmatpush2.bf16.msra.mxu0 0
    %755 = vmatprep.subr.bf16.mxu0 0
    %756 = vmatpush2.bf16.msra.mxu0 0
    %757 = vmatprep.subr.bf16.mxu0 0
    %758 = vmatpush2.bf16.msra.mxu0 0
    %759 = vmatprep.subr.bf16.mxu0 0
    %760 = vmatpush2.bf16.msra.mxu0 0
    %761 = vmatprep.subr.bf16.mxu0 0
    %762 = vmatpush2.bf16.msra.mxu0 0
    %763 = vmatprep.subr.bf16.mxu0 0
    %764 = vmatpush2.bf16.msra.mxu0 0
    %765 = vmatprep.mubr.bf16.mxu0 0
    %766 = vmatmul.mubr.bf16.gmra.mxu0 %v718
    %v767 = vpop.f32.mrf.mxu0
    %v768 = vadd.f32 %v704, %v767
    %v769 = vpop.f32.mrf.mxu0
    %v770 = vadd.f32 %v704, %v769
    %v771 = vpop.f32.mrf.mxu0
    %v772 = vadd.f32 %v709, %v771
    %v773 = vpop.f32.mrf.mxu0
    %v774 = vadd.f32 %v709, %v773
    %775 = vdwg.mxu0
    %776 = vmatprep.subr.bf16.mxu0 0
    %777 = vmatpush1.bf16.msra.mxu0 0
    %778 = vmatprep.subr.bf16.mxu0 0
    %779 = vmatpush1.bf16.msra.mxu0 0
    %780 = vmatprep.subr.bf16.mxu0 0
    %781 = vmatpush1.bf16.msra.mxu0 0
    %782 = vmatprep.subr.bf16.mxu0 0
    %783 = vmatpush1.bf16.msra.mxu0 0
    %784 = vmatprep.subr.bf16.mxu0 0
    %785 = vmatpush1.bf16.msra.mxu0 0
    %786 = vmatprep.subr.bf16.mxu0 %v731
    %787 = vmatpush1.bf16.msra.mxu0 %v728
    %788 = vmatprep.subr.bf16.mxu0 %v692
    %789 = vmatpush1.bf16.msra.mxu0 %v691
    %790 = vmatprep.subr.bf16.mxu0 %v688
    %791 = vmatpush1.bf16.msra.mxu0 %v687
    %792 = vmatprep.subr.bf16.mxu0 0
    %793 = vmatpush2.bf16.msra.mxu0 0
    %794 = vmatprep.subr.bf16.mxu0 0
    %795 = vmatpush2.bf16.msra.mxu0 0
    %796 = vmatprep.subr.bf16.mxu0 0
    %797 = vmatpush2.bf16.msra.mxu0 0
    %798 = vmatprep.subr.bf16.mxu0 0
    %799 = vmatpush2.bf16.msra.mxu0 0
    %800 = vmatprep.subr.bf16.mxu0 0
    %801 = vmatpush2.bf16.msra.mxu0 0
    %802 = vmatprep.subr.bf16.mxu0 0
    %803 = vmatpush2.bf16.msra.mxu0 0
    %804 = vmatprep.subr.bf16.mxu0 0
    %805 = vmatpush2.bf16.msra.mxu0 0
    %806 = vmatprep.subr.bf16.mxu0 0
    %807 = vmatpush2.bf16.msra.mxu0 0
    %808 = vmatprep.mubr.bf16.mxu0 0
    %809 = vmatmul.mubr.bf16.gmra.mxu0 %v718
    %v810 = vpop.f32.mrf.mxu0
    %v811 = vadd.f32 %v704, %v810
    %v812 = vpop.f32.mrf.mxu0
    %v813 = vadd.f32 %v704, %v812
    %v814 = vpop.f32.mrf.mxu0
    %v815 = vadd.f32 %v709, %v814
    %v816 = vpop.f32.mrf.mxu0
    %v817 = vadd.f32 %v709, %v816
    %818 = vdwg.mxu0
    %v819 = vxor.u32 %v768, 2147483648
    %v820 = vxor.u32 %v770, 2147483648
    %v821 = vxor.u32 %v811, 2147483648
    %v822 = vxor.u32 %v813, 2147483648
    %v823 = vxor.u32 %v772, 2147483648
    %v824 = vxor.u32 %v774, 2147483648
    %v825 = vxor.u32 %v815, 2147483648
    %v826 = vxor.u32 %v817, 2147483648
    %v827 = vmul.f32 %v819, 1.442695
    %v828 = vpow.pop %v827
    %v829 = vmul.f32 %v820, 1.442695
    %v830 = vpow.pop %v829
    %v831 = vmul.f32 %v821, 1.442695
    %v832 = vpow.pop %v831
    %v833 = vmul.f32 %v822, 1.442695
    %v834 = vpow.pop %v833
    %v835 = vmul.f32 %v823, 1.442695
    %v836 = vpow.pop %v835
    %v837 = vmul.f32 %v824, 1.442695
    %v838 = vpow.pop %v837
    %v839 = vmul.f32 %v825, 1.442695
    %v840 = vpow.pop %v839
    %v841 = vmul.f32 %v826, 1.442695
    %v842 = vpow.pop %v841
    %v843 = vadd.f32 %v828, 1.0
    %v844 = vadd.f32 %v830, 1.0
    %v845 = vadd.f32 %v832, 1.0
    %v846 = vadd.f32 %v834, 1.0
    %v847 = vadd.f32 %v836, 1.0
    %v848 = vadd.f32 %v838, 1.0
    %v849 = vadd.f32 %v840, 1.0
    %v850 = vadd.f32 %v842, 1.0
    %v851 = vrcp.pop %v843
    %v852 = vmul.f32 1.0, %v851
    %v853 = vrcp.pop %v844
    %v854 = vmul.f32 1.0, %v853
    %v855 = vrcp.pop %v845
    %v856 = vmul.f32 1.0, %v855
    %v857 = vrcp.pop %v846
    %v858 = vmul.f32 1.0, %v857
    %v859 = vrcp.pop %v847
    %v860 = vmul.f32 1.0, %v859
    %v861 = vrcp.pop %v848
    %v862 = vmul.f32 1.0, %v861
    %v863 = vrcp.pop %v849
    %v864 = vmul.f32 1.0, %v863
    %v865 = vrcp.pop %v850
    %v866 = vmul.f32 1.0, %v865
    %v867 = vmul.f32 %v768, %v852
    %v868 = vmul.f32 %v770, %v854
    %v869 = vmul.f32 %v811, %v856
    %v870 = vmul.f32 %v813, %v858
    %v871 = vmul.f32 %v772, %v860
    %v872 = vmul.f32 %v774, %v862
    %v873 = vmul.f32 %v815, %v864
    %v874 = vmul.f32 %v817, %v866
    %883 = vrot.lane.b32.xlu0 %v867, 17
    %v884 = vpop.permute.xlu0 %883
    %885 = vrot.lane.b32.xlu0 %v868, 17
    %v886 = vpop.permute.xlu0 %885
    %887 = vrot.lane.b32.xlu0 %v869, 17
    %v888 = vpop.permute.xlu0 %887
    %889 = vrot.lane.b32.xlu0 %v870, 17
    %v890 = vpop.permute.xlu0 %889
    %891 = vrot.lane.b32.xlu0 %v871, 17
    %v892 = vpop.permute.xlu0 %891
    %893 = vrot.lane.b32.xlu0 %v872, 17
    %v894 = vpop.permute.xlu0 %893
    %895 = vrot.lane.b32.xlu0 %v873, 17
    %v896 = vpop.permute.xlu0 %895
    %897 = vrot.lane.b32.xlu0 %v874, 17
    %v898 = vpop.permute.xlu0 %897
    %v899 = vsel %vm92, %v884, %v886
    %v900 = vsel %vm92, %v886, %v888
    %v901 = vsel %vm92, %v888, %v890
    %v902 = vsel %vm92, %v892, %v894
    %v903 = vsel %vm92, %v894, %v896
    %v904 = vsel %vm92, %v896, %v898
    %v915 = vsel %vm92, 0.0, %v884
    %v916 = vsel %vm92, 0.0, %v892
    %v917 = vsel %vm92, %v890, 0.0
    %v918 = vsel %vm92, %v898, 0.0
    %v919 = vld [vmem:[%s6] sm:$0xf]
    %v921 = vlaneseq
    %v922 = vshrl.u32 %v921, 7
    %v923 = vsub.s32 0, %v922
    %v924 = vrot.slane %v919, %v923
    %v925 = vlaneseq
    %v926 = vshrl.u32 %v925, 7
    %v927 = vsub.s32 1, %v926
    %v928 = vrot.slane %v919, %v927
    %v929 = vlaneseq
    %v930 = vshrl.u32 %v929, 7
    %v931 = vsub.s32 2, %v930
    %v932 = vrot.slane %v919, %v931
    %v933 = vlaneseq
    %v934 = vshrl.u32 %v933, 7
    %v935 = vsub.s32 3, %v934
    %v936 = vrot.slane %v919, %v935
    %v941 = vmul.f32 %v915, %v924
    %v942 = vmul.f32 %v899, %v928
    %v943 = vmul.f32 %v900, %v932
    %v944 = vmul.f32 %v901, %v936
    %v945 = vmul.f32 %v916, %v924
    %v946 = vmul.f32 %v902, %v928
    %v947 = vmul.f32 %v903, %v932
    %v948 = vmul.f32 %v904, %v936
    %s949 = scalar_lea.vmem %s6, 4
    %v950 = vld [vmem:[%s949] sm:$0xf]
    %v952 = vlaneseq
    %v953 = vshrl.u32 %v952, 7
    %v954 = vsub.s32 0, %v953
    %v955 = vrot.slane %v950, %v954
    %v956 = vlaneseq
    %v957 = vshrl.u32 %v956, 7
    %v958 = vsub.s32 1, %v957
    %v959 = vrot.slane %v950, %v958
    %v960 = vlaneseq
    %v961 = vshrl.u32 %v960, 7
    %v962 = vsub.s32 2, %v961
    %v963 = vrot.slane %v950, %v962
    %v964 = vlaneseq
    %v965 = vshrl.u32 %v964, 7
    %v966 = vsub.s32 3, %v965
    %v967 = vrot.slane %v950, %v966
    %968 = vrot.lane.b32.xlu0 %v955, 1
    %v969 = vpop.permute.xlu0 %968
    %970 = vrot.lane.b32.xlu0 %v959, 1
    %v971 = vpop.permute.xlu0 %970
    %972 = vrot.lane.b32.xlu0 %v963, 1
    %v973 = vpop.permute.xlu0 %972
    %974 = vrot.lane.b32.xlu0 %v967, 1
    %v975 = vpop.permute.xlu0 %974
    %v976 = vsel %vm156, %v969, %v971
    %v977 = vsel %vm156, %v971, %v973
    %v978 = vsel %vm156, %v973, %v975
    %v984 = vmul.f32 %v915, %v969
    %v985 = vmul.f32 %v899, %v976
    %v986 = vmul.f32 %v900, %v977
    %v987 = vmul.f32 %v901, %v978
    %v988 = vmul.f32 %v917, %v975
    %v989 = vmul.f32 %v916, %v969
    %v990 = vmul.f32 %v902, %v976
    %v991 = vmul.f32 %v903, %v977
    %v992 = vmul.f32 %v904, %v978
    %v993 = vmul.f32 %v918, %v975
    %s994 = scalar_lea.vmem %s6, 8
    %v995 = vld [vmem:[%s994] sm:$0xf]
    %v997 = vlaneseq
    %v998 = vshrl.u32 %v997, 7
    %v999 = vsub.s32 0, %v998
    %v1000 = vrot.slane %v995, %v999
    %v1001 = vlaneseq
    %v1002 = vshrl.u32 %v1001, 7
    %v1003 = vsub.s32 1, %v1002
    %v1004 = vrot.slane %v995, %v1003
    %v1005 = vlaneseq
    %v1006 = vshrl.u32 %v1005, 7
    %v1007 = vsub.s32 2, %v1006
    %v1008 = vrot.slane %v995, %v1007
    %v1009 = vlaneseq
    %v1010 = vshrl.u32 %v1009, 7
    %v1011 = vsub.s32 3, %v1010
    %v1012 = vrot.slane %v995, %v1011
    %1013 = vrot.lane.b32.xlu0 %v1000, 2
    %v1014 = vpop.permute.xlu0 %1013
    %1015 = vrot.lane.b32.xlu0 %v1004, 2
    %v1016 = vpop.permute.xlu0 %1015
    %1017 = vrot.lane.b32.xlu0 %v1008, 2
    %v1018 = vpop.permute.xlu0 %1017
    %1019 = vrot.lane.b32.xlu0 %v1012, 2
    %v1020 = vpop.permute.xlu0 %1019
    %v1021 = vsel %vm197, %v1014, %v1016
    %v1022 = vsel %vm197, %v1016, %v1018
    %v1023 = vsel %vm197, %v1018, %v1020
    %v1029 = vmul.f32 %v915, %v1014
    %v1030 = vmul.f32 %v899, %v1021
    %v1031 = vmul.f32 %v900, %v1022
    %v1032 = vmul.f32 %v901, %v1023
    %v1033 = vmul.f32 %v917, %v1020
    %v1034 = vmul.f32 %v916, %v1014
    %v1035 = vmul.f32 %v902, %v1021
    %v1036 = vmul.f32 %v903, %v1022
    %v1037 = vmul.f32 %v904, %v1023
    %v1038 = vmul.f32 %v918, %v1020
    %s1039 = scalar_lea.vmem %s6, 12
    %v1040 = vld [vmem:[%s1039] sm:$0xf]
    %v1042 = vlaneseq
    %v1043 = vshrl.u32 %v1042, 7
    %v1044 = vsub.s32 0, %v1043
    %v1045 = vrot.slane %v1040, %v1044
    %v1046 = vlaneseq
    %v1047 = vshrl.u32 %v1046, 7
    %v1048 = vsub.s32 1, %v1047
    %v1049 = vrot.slane %v1040, %v1048
    %v1050 = vlaneseq
    %v1051 = vshrl.u32 %v1050, 7
    %v1052 = vsub.s32 2, %v1051
    %v1053 = vrot.slane %v1040, %v1052
    %v1054 = vlaneseq
    %v1055 = vshrl.u32 %v1054, 7
    %v1056 = vsub.s32 3, %v1055
    %v1057 = vrot.slane %v1040, %v1056
    %1058 = vrot.lane.b32.xlu0 %v1045, 16
    %v1059 = vpop.permute.xlu0 %1058
    %1060 = vrot.lane.b32.xlu0 %v1049, 16
    %v1061 = vpop.permute.xlu0 %1060
    %1062 = vrot.lane.b32.xlu0 %v1053, 16
    %v1063 = vpop.permute.xlu0 %1062
    %1064 = vrot.lane.b32.xlu0 %v1057, 16
    %v1065 = vpop.permute.xlu0 %1064
    %v1066 = vsel %vm238, %v1059, %v1061
    %v1067 = vsel %vm238, %v1061, %v1063
    %v1068 = vsel %vm238, %v1063, %v1065
    %v1074 = vmul.f32 %v915, %v1059
    %v1075 = vmul.f32 %v899, %v1066
    %v1076 = vmul.f32 %v900, %v1067
    %v1077 = vmul.f32 %v901, %v1068
    %v1078 = vmul.f32 %v917, %v1065
    %v1079 = vmul.f32 %v916, %v1059
    %v1080 = vmul.f32 %v902, %v1066
    %v1081 = vmul.f32 %v903, %v1067
    %v1082 = vmul.f32 %v904, %v1068
    %v1083 = vmul.f32 %v918, %v1065
    %s1084 = scalar_lea.vmem %s6, 16
    %v1085 = vld [vmem:[%s1084] sm:$0xf]
    %v1087 = vlaneseq
    %v1088 = vshrl.u32 %v1087, 7
    %v1089 = vsub.s32 0, %v1088
    %v1090 = vrot.slane %v1085, %v1089
    %v1091 = vlaneseq
    %v1092 = vshrl.u32 %v1091, 7
    %v1093 = vsub.s32 1, %v1092
    %v1094 = vrot.slane %v1085, %v1093
    %v1095 = vlaneseq
    %v1096 = vshrl.u32 %v1095, 7
    %v1097 = vsub.s32 2, %v1096
    %v1098 = vrot.slane %v1085, %v1097
    %v1099 = vlaneseq
    %v1100 = vshrl.u32 %v1099, 7
    %v1101 = vsub.s32 3, %v1100
    %v1102 = vrot.slane %v1085, %v1101
    %1103 = vrot.lane.b32.xlu0 %v1090, 17
    %v1104 = vpop.permute.xlu0 %1103
    %1105 = vrot.lane.b32.xlu0 %v1094, 17
    %v1106 = vpop.permute.xlu0 %1105
    %1107 = vrot.lane.b32.xlu0 %v1098, 17
    %v1108 = vpop.permute.xlu0 %1107
    %1109 = vrot.lane.b32.xlu0 %v1102, 17
    %v1110 = vpop.permute.xlu0 %1109
    %v1111 = vsel %vm92, %v1104, %v1106
    %v1112 = vsel %vm92, %v1106, %v1108
    %v1113 = vsel %vm92, %v1108, %v1110
    %v1119 = vmul.f32 %v915, %v1104
    %v1120 = vmul.f32 %v899, %v1111
    %v1121 = vmul.f32 %v900, %v1112
    %v1122 = vmul.f32 %v901, %v1113
    %v1123 = vmul.f32 %v917, %v1110
    %v1124 = vmul.f32 %v916, %v1104
    %v1125 = vmul.f32 %v902, %v1111
    %v1126 = vmul.f32 %v903, %v1112
    %v1127 = vmul.f32 %v904, %v1113
    %v1128 = vmul.f32 %v918, %v1110
    %s1129 = scalar_lea.vmem %s6, 20
    %v1130 = vld [vmem:[%s1129] sm:$0xf]
    %v1132 = vlaneseq
    %v1133 = vshrl.u32 %v1132, 7
    %v1134 = vsub.s32 0, %v1133
    %v1135 = vrot.slane %v1130, %v1134
    %v1136 = vlaneseq
    %v1137 = vshrl.u32 %v1136, 7
    %v1138 = vsub.s32 1, %v1137
    %v1139 = vrot.slane %v1130, %v1138
    %v1140 = vlaneseq
    %v1141 = vshrl.u32 %v1140, 7
    %v1142 = vsub.s32 2, %v1141
    %v1143 = vrot.slane %v1130, %v1142
    %v1144 = vlaneseq
    %v1145 = vshrl.u32 %v1144, 7
    %v1146 = vsub.s32 3, %v1145
    %v1147 = vrot.slane %v1130, %v1146
    %1148 = vrot.lane.b32.xlu0 %v1135, 18
    %v1149 = vpop.permute.xlu0 %1148
    %1150 = vrot.lane.b32.xlu0 %v1139, 18
    %v1151 = vpop.permute.xlu0 %1150
    %1152 = vrot.lane.b32.xlu0 %v1143, 18
    %v1153 = vpop.permute.xlu0 %1152
    %1154 = vrot.lane.b32.xlu0 %v1147, 18
    %v1155 = vpop.permute.xlu0 %1154
    %v1156 = vsel %vm319, %v1149, %v1151
    %v1157 = vsel %vm319, %v1151, %v1153
    %v1158 = vsel %vm319, %v1153, %v1155
    %v1164 = vmul.f32 %v915, %v1149
    %v1165 = vmul.f32 %v899, %v1156
    %v1166 = vmul.f32 %v900, %v1157
    %v1167 = vmul.f32 %v901, %v1158
    %v1168 = vmul.f32 %v917, %v1155
    %v1169 = vmul.f32 %v916, %v1149
    %v1170 = vmul.f32 %v902, %v1156
    %v1171 = vmul.f32 %v903, %v1157
    %v1172 = vmul.f32 %v904, %v1158
    %v1173 = vmul.f32 %v918, %v1155
    %s1174 = scalar_lea.vmem %s6, 24
    %v1175 = vld [vmem:[%s1174] sm:$0xf]
    %v1177 = vlaneseq
    %v1178 = vshrl.u32 %v1177, 7
    %v1179 = vsub.s32 0, %v1178
    %v1180 = vrot.slane %v1175, %v1179
    %v1181 = vlaneseq
    %v1182 = vshrl.u32 %v1181, 7
    %v1183 = vsub.s32 1, %v1182
    %v1184 = vrot.slane %v1175, %v1183
    %v1185 = vlaneseq
    %v1186 = vshrl.u32 %v1185, 7
    %v1187 = vsub.s32 2, %v1186
    %v1188 = vrot.slane %v1175, %v1187
    %v1189 = vlaneseq
    %v1190 = vshrl.u32 %v1189, 7
    %v1191 = vsub.s32 3, %v1190
    %v1192 = vrot.slane %v1175, %v1191
    %1193 = vrot.lane.b32.xlu0 %v1180, 32
    %v1194 = vpop.permute.xlu0 %1193
    %1195 = vrot.lane.b32.xlu0 %v1184, 32
    %v1196 = vpop.permute.xlu0 %1195
    %1197 = vrot.lane.b32.xlu0 %v1188, 32
    %v1198 = vpop.permute.xlu0 %1197
    %1199 = vrot.lane.b32.xlu0 %v1192, 32
    %v1200 = vpop.permute.xlu0 %1199
    %v1201 = vsel %vm360, %v1194, %v1196
    %v1202 = vsel %vm360, %v1196, %v1198
    %v1203 = vsel %vm360, %v1198, %v1200
    %v1209 = vmul.f32 %v915, %v1194
    %v1210 = vmul.f32 %v899, %v1201
    %v1211 = vmul.f32 %v900, %v1202
    %v1212 = vmul.f32 %v901, %v1203
    %v1213 = vmul.f32 %v917, %v1200
    %v1214 = vmul.f32 %v916, %v1194
    %v1215 = vmul.f32 %v902, %v1201
    %v1216 = vmul.f32 %v903, %v1202
    %v1217 = vmul.f32 %v904, %v1203
    %v1218 = vmul.f32 %v918, %v1200
    %s1219 = scalar_lea.vmem %s6, 28
    %v1220 = vld [vmem:[%s1219] sm:$0xf]
    %v1222 = vlaneseq
    %v1223 = vshrl.u32 %v1222, 7
    %v1224 = vsub.s32 0, %v1223
    %v1225 = vrot.slane %v1220, %v1224
    %v1226 = vlaneseq
    %v1227 = vshrl.u32 %v1226, 7
    %v1228 = vsub.s32 1, %v1227
    %v1229 = vrot.slane %v1220, %v1228
    %v1230 = vlaneseq
    %v1231 = vshrl.u32 %v1230, 7
    %v1232 = vsub.s32 2, %v1231
    %v1233 = vrot.slane %v1220, %v1232
    %v1234 = vlaneseq
    %v1235 = vshrl.u32 %v1234, 7
    %v1236 = vsub.s32 3, %v1235
    %v1237 = vrot.slane %v1220, %v1236
    %1238 = vrot.lane.b32.xlu0 %v1225, 33
    %v1239 = vpop.permute.xlu0 %1238
    %1240 = vrot.lane.b32.xlu0 %v1229, 33
    %v1241 = vpop.permute.xlu0 %1240
    %1242 = vrot.lane.b32.xlu0 %v1233, 33
    %v1243 = vpop.permute.xlu0 %1242
    %1244 = vrot.lane.b32.xlu0 %v1237, 33
    %v1245 = vpop.permute.xlu0 %1244
    %v1246 = vsel %vm401, %v1239, %v1241
    %v1247 = vsel %vm401, %v1241, %v1243
    %v1248 = vsel %vm401, %v1243, %v1245
    %v1254 = vmul.f32 %v915, %v1239
    %v1255 = vmul.f32 %v899, %v1246
    %v1256 = vmul.f32 %v900, %v1247
    %v1257 = vmul.f32 %v901, %v1248
    %v1258 = vmul.f32 %v917, %v1245
    %v1259 = vmul.f32 %v916, %v1239
    %v1260 = vmul.f32 %v902, %v1246
    %v1261 = vmul.f32 %v903, %v1247
    %v1262 = vmul.f32 %v904, %v1248
    %v1263 = vmul.f32 %v918, %v1245
    %s1264 = scalar_lea.vmem %s6, 32
    %v1265 = vld [vmem:[%s1264] sm:$0xf]
    %v1267 = vlaneseq
    %v1268 = vshrl.u32 %v1267, 7
    %v1269 = vsub.s32 0, %v1268
    %v1270 = vrot.slane %v1265, %v1269
    %v1271 = vlaneseq
    %v1272 = vshrl.u32 %v1271, 7
    %v1273 = vsub.s32 1, %v1272
    %v1274 = vrot.slane %v1265, %v1273
    %v1275 = vlaneseq
    %v1276 = vshrl.u32 %v1275, 7
    %v1277 = vsub.s32 2, %v1276
    %v1278 = vrot.slane %v1265, %v1277
    %v1279 = vlaneseq
    %v1280 = vshrl.u32 %v1279, 7
    %v1281 = vsub.s32 3, %v1280
    %v1282 = vrot.slane %v1265, %v1281
    %1283 = vrot.lane.b32.xlu0 %v1270, 34
    %v1284 = vpop.permute.xlu0 %1283
    %1285 = vrot.lane.b32.xlu0 %v1274, 34
    %v1286 = vpop.permute.xlu0 %1285
    %1287 = vrot.lane.b32.xlu0 %v1278, 34
    %v1288 = vpop.permute.xlu0 %1287
    %1289 = vrot.lane.b32.xlu0 %v1282, 34
    %v1290 = vpop.permute.xlu0 %1289
    %v1291 = vsel %vm442, %v1284, %v1286
    %v1292 = vsel %vm442, %v1286, %v1288
    %v1293 = vsel %vm442, %v1288, %v1290
    %v1299 = vmul.f32 %v915, %v1284
    %v1300 = vmul.f32 %v899, %v1291
    %v1301 = vmul.f32 %v900, %v1292
    %v1302 = vmul.f32 %v901, %v1293
    %v1303 = vmul.f32 %v917, %v1290
    %v1304 = vmul.f32 %v916, %v1284
    %v1305 = vmul.f32 %v902, %v1291
    %v1306 = vmul.f32 %v903, %v1292
    %v1307 = vmul.f32 %v904, %v1293
    %v1308 = vmul.f32 %v918, %v1290
    %1319 = vrot.lane.b32.xlu0 %v984, 127
    %v1320 = vpop.permute.xlu0 %1319
    %1321 = vrot.lane.b32.xlu0 %v985, 127
    %v1322 = vpop.permute.xlu0 %1321
    %1323 = vrot.lane.b32.xlu0 %v986, 127
    %v1324 = vpop.permute.xlu0 %1323
    %1325 = vrot.lane.b32.xlu0 %v987, 127
    %v1326 = vpop.permute.xlu0 %1325
    %1327 = vrot.lane.b32.xlu0 %v988, 127
    %v1328 = vpop.permute.xlu0 %1327
    %1329 = vrot.lane.b32.xlu0 %v989, 127
    %v1330 = vpop.permute.xlu0 %1329
    %1331 = vrot.lane.b32.xlu0 %v990, 127
    %v1332 = vpop.permute.xlu0 %1331
    %1333 = vrot.lane.b32.xlu0 %v991, 127
    %v1334 = vpop.permute.xlu0 %1333
    %1335 = vrot.lane.b32.xlu0 %v992, 127
    %v1336 = vpop.permute.xlu0 %1335
    %1337 = vrot.lane.b32.xlu0 %v993, 127
    %v1338 = vpop.permute.xlu0 %1337
    %v1339 = vsel %vm476, %v1320, %v1322
    %v1340 = vsel %vm476, %v1322, %v1324
    %v1341 = vsel %vm476, %v1324, %v1326
    %v1342 = vsel %vm476, %v1326, %v1328
    %v1343 = vsel %vm476, %v1330, %v1332
    %v1344 = vsel %vm476, %v1332, %v1334
    %v1345 = vsel %vm476, %v1334, %v1336
    %v1346 = vsel %vm476, %v1336, %v1338
    %1365 = vrot.lane.b32.xlu0 %v1029, 126
    %v1366 = vpop.permute.xlu0 %1365
    %1367 = vrot.lane.b32.xlu0 %v1030, 126
    %v1368 = vpop.permute.xlu0 %1367
    %1369 = vrot.lane.b32.xlu0 %v1031, 126
    %v1370 = vpop.permute.xlu0 %1369
    %1371 = vrot.lane.b32.xlu0 %v1032, 126
    %v1372 = vpop.permute.xlu0 %1371
    %1373 = vrot.lane.b32.xlu0 %v1033, 126
    %v1374 = vpop.permute.xlu0 %1373
    %1375 = vrot.lane.b32.xlu0 %v1034, 126
    %v1376 = vpop.permute.xlu0 %1375
    %1377 = vrot.lane.b32.xlu0 %v1035, 126
    %v1378 = vpop.permute.xlu0 %1377
    %1379 = vrot.lane.b32.xlu0 %v1036, 126
    %v1380 = vpop.permute.xlu0 %1379
    %1381 = vrot.lane.b32.xlu0 %v1037, 126
    %v1382 = vpop.permute.xlu0 %1381
    %1383 = vrot.lane.b32.xlu0 %v1038, 126
    %v1384 = vpop.permute.xlu0 %1383
    %v1385 = vsel %vm500, %v1366, %v1368
    %v1386 = vsel %vm500, %v1368, %v1370
    %v1387 = vsel %vm500, %v1370, %v1372
    %v1388 = vsel %vm500, %v1372, %v1374
    %v1389 = vsel %vm500, %v1376, %v1378
    %v1390 = vsel %vm500, %v1378, %v1380
    %v1391 = vsel %vm500, %v1380, %v1382
    %v1392 = vsel %vm500, %v1382, %v1384
    %1411 = vrot.lane.b32.xlu0 %v1074, 112
    %v1412 = vpop.permute.xlu0 %1411
    %1413 = vrot.lane.b32.xlu0 %v1075, 112
    %v1414 = vpop.permute.xlu0 %1413
    %1415 = vrot.lane.b32.xlu0 %v1076, 112
    %v1416 = vpop.permute.xlu0 %1415
    %1417 = vrot.lane.b32.xlu0 %v1077, 112
    %v1418 = vpop.permute.xlu0 %1417
    %1419 = vrot.lane.b32.xlu0 %v1078, 112
    %v1420 = vpop.permute.xlu0 %1419
    %1421 = vrot.lane.b32.xlu0 %v1079, 112
    %v1422 = vpop.permute.xlu0 %1421
    %1423 = vrot.lane.b32.xlu0 %v1080, 112
    %v1424 = vpop.permute.xlu0 %1423
    %1425 = vrot.lane.b32.xlu0 %v1081, 112
    %v1426 = vpop.permute.xlu0 %1425
    %1427 = vrot.lane.b32.xlu0 %v1082, 112
    %v1428 = vpop.permute.xlu0 %1427
    %1429 = vrot.lane.b32.xlu0 %v1083, 112
    %v1430 = vpop.permute.xlu0 %1429
    %v1431 = vsel %vm529, %v1412, %v1414
    %v1432 = vsel %vm529, %v1414, %v1416
    %v1433 = vsel %vm529, %v1416, %v1418
    %v1434 = vsel %vm529, %v1418, %v1420
    %v1435 = vsel %vm529, %v1422, %v1424
    %v1436 = vsel %vm529, %v1424, %v1426
    %v1437 = vsel %vm529, %v1426, %v1428
    %v1438 = vsel %vm529, %v1428, %v1430
    %1457 = vrot.lane.b32.xlu0 %v1119, 111
    %v1458 = vpop.permute.xlu0 %1457
    %1459 = vrot.lane.b32.xlu0 %v1120, 111
    %v1460 = vpop.permute.xlu0 %1459
    %1461 = vrot.lane.b32.xlu0 %v1121, 111
    %v1462 = vpop.permute.xlu0 %1461
    %1463 = vrot.lane.b32.xlu0 %v1122, 111
    %v1464 = vpop.permute.xlu0 %1463
    %1465 = vrot.lane.b32.xlu0 %v1123, 111
    %v1466 = vpop.permute.xlu0 %1465
    %1467 = vrot.lane.b32.xlu0 %v1124, 111
    %v1468 = vpop.permute.xlu0 %1467
    %1469 = vrot.lane.b32.xlu0 %v1125, 111
    %v1470 = vpop.permute.xlu0 %1469
    %1471 = vrot.lane.b32.xlu0 %v1126, 111
    %v1472 = vpop.permute.xlu0 %1471
    %1473 = vrot.lane.b32.xlu0 %v1127, 111
    %v1474 = vpop.permute.xlu0 %1473
    %1475 = vrot.lane.b32.xlu0 %v1128, 111
    %v1476 = vpop.permute.xlu0 %1475
    %v1477 = vsel %vm553, %v1458, %v1460
    %v1478 = vsel %vm553, %v1460, %v1462
    %v1479 = vsel %vm553, %v1462, %v1464
    %v1480 = vsel %vm553, %v1464, %v1466
    %v1481 = vsel %vm553, %v1468, %v1470
    %v1482 = vsel %vm553, %v1470, %v1472
    %v1483 = vsel %vm553, %v1472, %v1474
    %v1484 = vsel %vm553, %v1474, %v1476
    %1503 = vrot.lane.b32.xlu0 %v1164, 110
    %v1504 = vpop.permute.xlu0 %1503
    %1505 = vrot.lane.b32.xlu0 %v1165, 110
    %v1506 = vpop.permute.xlu0 %1505
    %1507 = vrot.lane.b32.xlu0 %v1166, 110
    %v1508 = vpop.permute.xlu0 %1507
    %1509 = vrot.lane.b32.xlu0 %v1167, 110
    %v1510 = vpop.permute.xlu0 %1509
    %1511 = vrot.lane.b32.xlu0 %v1168, 110
    %v1512 = vpop.permute.xlu0 %1511
    %1513 = vrot.lane.b32.xlu0 %v1169, 110
    %v1514 = vpop.permute.xlu0 %1513
    %1515 = vrot.lane.b32.xlu0 %v1170, 110
    %v1516 = vpop.permute.xlu0 %1515
    %1517 = vrot.lane.b32.xlu0 %v1171, 110
    %v1518 = vpop.permute.xlu0 %1517
    %1519 = vrot.lane.b32.xlu0 %v1172, 110
    %v1520 = vpop.permute.xlu0 %1519
    %1521 = vrot.lane.b32.xlu0 %v1173, 110
    %v1522 = vpop.permute.xlu0 %1521
    %v1523 = vsel %vm582, %v1504, %v1506
    %v1524 = vsel %vm582, %v1506, %v1508
    %v1525 = vsel %vm582, %v1508, %v1510
    %v1526 = vsel %vm582, %v1510, %v1512
    %v1527 = vsel %vm582, %v1514, %v1516
    %v1528 = vsel %vm582, %v1516, %v1518
    %v1529 = vsel %vm582, %v1518, %v1520
    %v1530 = vsel %vm582, %v1520, %v1522
    %1549 = vrot.lane.b32.xlu0 %v1209, 96
    %v1550 = vpop.permute.xlu0 %1549
    %1551 = vrot.lane.b32.xlu0 %v1210, 96
    %v1552 = vpop.permute.xlu0 %1551
    %1553 = vrot.lane.b32.xlu0 %v1211, 96
    %v1554 = vpop.permute.xlu0 %1553
    %1555 = vrot.lane.b32.xlu0 %v1212, 96
    %v1556 = vpop.permute.xlu0 %1555
    %1557 = vrot.lane.b32.xlu0 %v1213, 96
    %v1558 = vpop.permute.xlu0 %1557
    %1559 = vrot.lane.b32.xlu0 %v1214, 96
    %v1560 = vpop.permute.xlu0 %1559
    %1561 = vrot.lane.b32.xlu0 %v1215, 96
    %v1562 = vpop.permute.xlu0 %1561
    %1563 = vrot.lane.b32.xlu0 %v1216, 96
    %v1564 = vpop.permute.xlu0 %1563
    %1565 = vrot.lane.b32.xlu0 %v1217, 96
    %v1566 = vpop.permute.xlu0 %1565
    %1567 = vrot.lane.b32.xlu0 %v1218, 96
    %v1568 = vpop.permute.xlu0 %1567
    %v1569 = vsel %vm606, %v1550, %v1552
    %v1570 = vsel %vm606, %v1552, %v1554
    %v1571 = vsel %vm606, %v1554, %v1556
    %v1572 = vsel %vm606, %v1556, %v1558
    %v1573 = vsel %vm606, %v1560, %v1562
    %v1574 = vsel %vm606, %v1562, %v1564
    %v1575 = vsel %vm606, %v1564, %v1566
    %v1576 = vsel %vm606, %v1566, %v1568
    %1595 = vrot.lane.b32.xlu0 %v1254, 95
    %v1596 = vpop.permute.xlu0 %1595
    %1597 = vrot.lane.b32.xlu0 %v1255, 95
    %v1598 = vpop.permute.xlu0 %1597
    %1599 = vrot.lane.b32.xlu0 %v1256, 95
    %v1600 = vpop.permute.xlu0 %1599
    %1601 = vrot.lane.b32.xlu0 %v1257, 95
    %v1602 = vpop.permute.xlu0 %1601
    %1603 = vrot.lane.b32.xlu0 %v1258, 95
    %v1604 = vpop.permute.xlu0 %1603
    %1605 = vrot.lane.b32.xlu0 %v1259, 95
    %v1606 = vpop.permute.xlu0 %1605
    %1607 = vrot.lane.b32.xlu0 %v1260, 95
    %v1608 = vpop.permute.xlu0 %1607
    %1609 = vrot.lane.b32.xlu0 %v1261, 95
    %v1610 = vpop.permute.xlu0 %1609
    %1611 = vrot.lane.b32.xlu0 %v1262, 95
    %v1612 = vpop.permute.xlu0 %1611
    %1613 = vrot.lane.b32.xlu0 %v1263, 95
    %v1614 = vpop.permute.xlu0 %1613
    %v1615 = vsel %vm635, %v1596, %v1598
    %v1616 = vsel %vm635, %v1598, %v1600
    %v1617 = vsel %vm635, %v1600, %v1602
    %v1618 = vsel %vm635, %v1602, %v1604
    %v1619 = vsel %vm635, %v1606, %v1608
    %v1620 = vsel %vm635, %v1608, %v1610
    %v1621 = vsel %vm635, %v1610, %v1612
    %v1622 = vsel %vm635, %v1612, %v1614
    %1641 = vrot.lane.b32.xlu0 %v1299, 94
    %v1642 = vpop.permute.xlu0 %1641
    %1643 = vrot.lane.b32.xlu0 %v1300, 94
    %v1644 = vpop.permute.xlu0 %1643
    %1645 = vrot.lane.b32.xlu0 %v1301, 94
    %v1646 = vpop.permute.xlu0 %1645
    %1647 = vrot.lane.b32.xlu0 %v1302, 94
    %v1648 = vpop.permute.xlu0 %1647
    %1649 = vrot.lane.b32.xlu0 %v1303, 94
    %v1650 = vpop.permute.xlu0 %1649
    %1651 = vrot.lane.b32.xlu0 %v1304, 94
    %v1652 = vpop.permute.xlu0 %1651
    %1653 = vrot.lane.b32.xlu0 %v1305, 94
    %v1654 = vpop.permute.xlu0 %1653
    %1655 = vrot.lane.b32.xlu0 %v1306, 94
    %v1656 = vpop.permute.xlu0 %1655
    %1657 = vrot.lane.b32.xlu0 %v1307, 94
    %v1658 = vpop.permute.xlu0 %1657
    %1659 = vrot.lane.b32.xlu0 %v1308, 94
    %v1660 = vpop.permute.xlu0 %1659
    %v1661 = vsel %vm659, %v1642, %v1644
    %v1662 = vsel %vm659, %v1644, %v1646
    %v1663 = vsel %vm659, %v1646, %v1648
    %v1664 = vsel %vm659, %v1648, %v1650
    %v1665 = vsel %vm659, %v1652, %v1654
    %v1666 = vsel %vm659, %v1654, %v1656
    %v1667 = vsel %vm659, %v1656, %v1658
    %v1668 = vsel %vm659, %v1658, %v1660
    %v1677 = vpack.c.bf16 %v945, %v941
    %v1678 = vpack.c.bf16 %v946, %v942
    %v1679 = vpack.c.bf16 %v947, %v943
    %v1680 = vpack.c.bf16 %v948, %v944
    %v1681 = vpack.c.bf16 %v1343, %v1339
    %v1682 = vpack.c.bf16 %v1344, %v1340
    %v1683 = vpack.c.bf16 %v1345, %v1341
    %v1684 = vpack.c.bf16 %v1346, %v1342
    %v1685 = vpack.c.bf16 %v1389, %v1385
    %v1686 = vpack.c.bf16 %v1390, %v1386
    %v1687 = vpack.c.bf16 %v1391, %v1387
    %v1688 = vpack.c.bf16 %v1392, %v1388
    %v1689 = vpack.c.bf16 %v1435, %v1431
    %v1690 = vpack.c.bf16 %v1436, %v1432
    %v1691 = vpack.c.bf16 %v1437, %v1433
    %v1692 = vpack.c.bf16 %v1438, %v1434
    %v1693 = vpack.c.bf16 %v1481, %v1477
    %v1694 = vpack.c.bf16 %v1482, %v1478
    %v1695 = vpack.c.bf16 %v1483, %v1479
    %v1696 = vpack.c.bf16 %v1484, %v1480
    %v1697 = vpack.c.bf16 %v1527, %v1523
    %v1698 = vpack.c.bf16 %v1528, %v1524
    %v1699 = vpack.c.bf16 %v1529, %v1525
    %v1700 = vpack.c.bf16 %v1530, %v1526
    %v1701 = vpack.c.bf16 %v1573, %v1569
    %v1702 = vpack.c.bf16 %v1574, %v1570
    %v1703 = vpack.c.bf16 %v1575, %v1571
    %v1704 = vpack.c.bf16 %v1576, %v1572
    %v1705 = vpack.c.bf16 %v1619, %v1615
    %v1706 = vpack.c.bf16 %v1620, %v1616
    %v1707 = vpack.c.bf16 %v1621, %v1617
    %v1708 = vpack.c.bf16 %v1622, %v1618
    %v1709 = vpack.c.bf16 %v1665, %v1661
    %v1710 = vpack.c.bf16 %v1666, %v1662
    %v1711 = vpack.c.bf16 %v1667, %v1663
    %v1712 = vpack.c.bf16 %v1668, %v1664
    %v1713 = vld [vmem:[%s4] sm:$0xff]
    %v1714 = vld [vmem:[%s4 + $0x8] sm:$0xff]
    %v1715 = vld [vmem:[%s4 + $0x10] sm:$0xff]
    %v1716 = vld [vmem:[%s4 + $0x18] sm:$0xff]
    %v1721 = vunpack.c.l.b16 %v1713
    %v1722 = vunpack.c.h.b16 %v1713
    %v1723 = vunpack.c.l.b16 %v1714
    %v1724 = vunpack.c.h.b16 %v1714
    %v1725 = vunpack.c.l.b16 %v1715
    %v1726 = vunpack.c.h.b16 %v1715
    %v1727 = vunpack.c.l.b16 %v1716
    %v1728 = vunpack.c.h.b16 %v1716
    %v1729 = vpack.c.b16 %v1723, %v1721
    %v1730 = vpack.c.b16 %v1724, %v1722
    %v1731 = vpack.c.b16 %v1727, %v1725
    %v1732 = vpack.c.b16 %v1728, %v1726
    %v1736 = vsel %vm238, %v1730, 0
    %v1739 = vsel %vm238, %v1732, 0
    %1741 = vmatprep.subr.bf16.mxu0 %v1706
    %1742 = vmatpush1.bf16.msra.mxu0 %v1705
    %1743 = vmatprep.subr.bf16.mxu0 %v1702
    %1744 = vmatpush1.bf16.msra.mxu0 %v1701
    %1745 = vmatprep.subr.bf16.mxu0 %v1698
    %1746 = vmatpush1.bf16.msra.mxu0 %v1697
    %1747 = vmatprep.subr.bf16.mxu0 %v1694
    %1748 = vmatpush1.bf16.msra.mxu0 %v1693
    %1749 = vmatprep.subr.bf16.mxu0 %v1690
    %1750 = vmatpush1.bf16.msra.mxu0 %v1689
    %1751 = vmatprep.subr.bf16.mxu0 %v1686
    %1752 = vmatpush1.bf16.msra.mxu0 %v1685
    %1753 = vmatprep.subr.bf16.mxu0 %v1682
    %1754 = vmatpush1.bf16.msra.mxu0 %v1681
    %1755 = vmatprep.subr.bf16.mxu0 %v1678
    %1756 = vmatpush1.bf16.msra.mxu0 %v1677
    %1757 = vmatprep.subr.bf16.mxu0 0
    %1758 = vmatpush2.bf16.msra.mxu0 0
    %1759 = vmatprep.subr.bf16.mxu0 0
    %1760 = vmatpush2.bf16.msra.mxu0 0
    %1761 = vmatprep.subr.bf16.mxu0 0
    %1762 = vmatpush2.bf16.msra.mxu0 0
    %1763 = vmatprep.subr.bf16.mxu0 0
    %1764 = vmatpush2.bf16.msra.mxu0 0
    %1765 = vmatprep.subr.bf16.mxu0 0
    %1766 = vmatpush2.bf16.msra.mxu0 0
    %1767 = vmatprep.subr.bf16.mxu0 0
    %1768 = vmatpush2.bf16.msra.mxu0 0
    %1769 = vmatprep.subr.bf16.mxu0 0
    %1770 = vmatpush2.bf16.msra.mxu0 0
    %1771 = vmatprep.subr.bf16.mxu0 %v1710
    %1772 = vmatpush2.bf16.msra.mxu0 %v1709
    %1773 = vmatprep.mubr.bf16.mxu0 %v1736
    %1774 = vmatmul.mubr.bf16.gmra.mxu0 %v1729
    %v1775 = vpop.f32.mrf.mxu0
    %v1776 = vadd.f32 0.0, %v1775
    %v1777 = vpop.f32.mrf.mxu0
    %v1778 = vadd.f32 0.0, %v1777
    %v1779 = vpop.f32.mrf.mxu0
    %v1780 = vadd.f32 0.0, %v1779
    %v1781 = vpop.f32.mrf.mxu0
    %v1782 = vadd.f32 0.0, %v1781
    %1783 = vmatprep.mubr.bf16.mxu0 %v1739
    %1784 = vmatmul.mubr.bf16.gmra.mxu0 %v1731
    %v1785 = vpop.f32.mrf.mxu0
    %v1786 = vadd.f32 0.0, %v1785
    %v1787 = vpop.f32.mrf.mxu0
    %v1788 = vadd.f32 0.0, %v1787
    %v1789 = vpop.f32.mrf.mxu0
    %v1790 = vadd.f32 0.0, %v1789
    %v1791 = vpop.f32.mrf.mxu0
    %v1792 = vadd.f32 0.0, %v1791
    %1793 = vdwg.mxu0
    %1794 = vmatprep.subr.bf16.mxu0 %v1708
    %1795 = vmatpush1.bf16.msra.mxu0 %v1707
    %1796 = vmatprep.subr.bf16.mxu0 %v1704
    %1797 = vmatpush1.bf16.msra.mxu0 %v1703
    %1798 = vmatprep.subr.bf16.mxu0 %v1700
    %1799 = vmatpush1.bf16.msra.mxu0 %v1699
    %1800 = vmatprep.subr.bf16.mxu0 %v1696
    %1801 = vmatpush1.bf16.msra.mxu0 %v1695
    %1802 = vmatprep.subr.bf16.mxu0 %v1692
    %1803 = vmatpush1.bf16.msra.mxu0 %v1691
    %1804 = vmatprep.subr.bf16.mxu0 %v1688
    %1805 = vmatpush1.bf16.msra.mxu0 %v1687
    %1806 = vmatprep.subr.bf16.mxu0 %v1684
    %1807 = vmatpush1.bf16.msra.mxu0 %v1683
    %1808 = vmatprep.subr.bf16.mxu0 %v1680
    %1809 = vmatpush1.bf16.msra.mxu0 %v1679
    %1810 = vmatprep.subr.bf16.mxu0 0
    %1811 = vmatpush2.bf16.msra.mxu0 0
    %1812 = vmatprep.subr.bf16.mxu0 0
    %1813 = vmatpush2.bf16.msra.mxu0 0
    %1814 = vmatprep.subr.bf16.mxu0 0
    %1815 = vmatpush2.bf16.msra.mxu0 0
    %1816 = vmatprep.subr.bf16.mxu0 0
    %1817 = vmatpush2.bf16.msra.mxu0 0
    %1818 = vmatprep.subr.bf16.mxu0 0
    %1819 = vmatpush2.bf16.msra.mxu0 0
    %1820 = vmatprep.subr.bf16.mxu0 0
    %1821 = vmatpush2.bf16.msra.mxu0 0
    %1822 = vmatprep.subr.bf16.mxu0 0
    %1823 = vmatpush2.bf16.msra.mxu0 0
    %1824 = vmatprep.subr.bf16.mxu0 %v1712
    %1825 = vmatpush2.bf16.msra.mxu0 %v1711
    %1826 = vmatprep.mubr.bf16.mxu0 %v1736
    %1827 = vmatmul.mubr.bf16.gmra.mxu0 %v1729
    %v1828 = vpop.f32.mrf.mxu0
    %v1829 = vadd.f32 0.0, %v1828
    %v1830 = vpop.f32.mrf.mxu0
    %v1831 = vadd.f32 0.0, %v1830
    %v1832 = vpop.f32.mrf.mxu0
    %v1833 = vadd.f32 0.0, %v1832
    %v1834 = vpop.f32.mrf.mxu0
    %v1835 = vadd.f32 0.0, %v1834
    %1836 = vmatprep.mubr.bf16.mxu0 %v1739
    %1837 = vmatmul.mubr.bf16.gmra.mxu0 %v1731
    %v1838 = vpop.f32.mrf.mxu0
    %v1839 = vadd.f32 0.0, %v1838
    %v1840 = vpop.f32.mrf.mxu0
    %v1841 = vadd.f32 0.0, %v1840
    %v1842 = vpop.f32.mrf.mxu0
    %v1843 = vadd.f32 0.0, %v1842
    %v1844 = vpop.f32.mrf.mxu0
    %v1845 = vadd.f32 0.0, %v1844
    %1846 = vdwg.mxu0
    %v1847 = vld [vmem:[#allocation2] sm:$0xff]
    %v1848 = vld [vmem:[#allocation2 + $0x8] sm:$0xff]
    %v1849 = vld [vmem:[#allocation2 + $0x10] sm:$0xff]
    %v1850 = vld [vmem:[#allocation2 + $0x18] sm:$0xff]
    %v1851 = vld [vmem:[#allocation2 + $0x20] sm:$0xff]
    %v1852 = vld [vmem:[#allocation2 + $0x28] sm:$0xff]
    %v1853 = vld [vmem:[#allocation2 + $0x30] sm:$0xff]
    %v1854 = vld [vmem:[#allocation2 + $0x38] sm:$0xff]
    %v1855 = vld [vmem:[#allocation2 + $0x40] sm:$0xff]
    %v1856 = vld [vmem:[#allocation2 + $0x48] sm:$0xff]
    %v1857 = vld [vmem:[#allocation2 + $0x50] sm:$0xff]
    %v1858 = vld [vmem:[#allocation2 + $0x58] sm:$0xff]
    %v1859 = vld [vmem:[#allocation2 + $0x60] sm:$0xff]
    %v1860 = vld [vmem:[#allocation2 + $0x68] sm:$0xff]
    %v1861 = vld [vmem:[#allocation2 + $0x70] sm:$0xff]
    %v1862 = vld [vmem:[#allocation2 + $0x78] sm:$0xff]
    %v1863 = vld [vmem:[#allocation2 + $0x80] sm:$0xff]
    %v1864 = vld [vmem:[#allocation2 + $0x88] sm:$0xff]
    %v1865 = vld [vmem:[#allocation2 + $0x90] sm:$0xff]
    %v1866 = vld [vmem:[#allocation2 + $0x98] sm:$0xff]
    %v1867 = vld [vmem:[#allocation2 + $0xa0] sm:$0xff]
    %v1868 = vld [vmem:[#allocation2 + $0xa8] sm:$0xff]
    %v1869 = vld [vmem:[#allocation2 + $0xb0] sm:$0xff]
    %v1870 = vld [vmem:[#allocation2 + $0xb8] sm:$0xff]
    %v1871 = vld [vmem:[#allocation2 + $0xc0] sm:$0xff]
    %v1872 = vld [vmem:[#allocation2 + $0xc8] sm:$0xff]
    %v1873 = vld [vmem:[#allocation2 + $0xd0] sm:$0xff]
    %v1874 = vld [vmem:[#allocation2 + $0xd8] sm:$0xff]
    %v1875 = vld [vmem:[#allocation2 + $0xe0] sm:$0xff]
    %v1876 = vld [vmem:[#allocation2 + $0xe8] sm:$0xff]
    %v1877 = vld [vmem:[#allocation2 + $0xf0] sm:$0xff]
    %v1878 = vld [vmem:[#allocation2 + $0xf8] sm:$0xff]
    %v1879 = vld [vmem:[#allocation2 + $0x100] sm:$0xff]
    %v1880 = vld [vmem:[#allocation2 + $0x108] sm:$0xff]
    %v1881 = vld [vmem:[#allocation2 + $0x110] sm:$0xff]
    %v1882 = vld [vmem:[#allocation2 + $0x118] sm:$0xff]
    %v1883 = vld [vmem:[#allocation2 + $0x120] sm:$0xff]
    %v1884 = vld [vmem:[#allocation2 + $0x128] sm:$0xff]
    %v1885 = vld [vmem:[#allocation2 + $0x130] sm:$0xff]
    %v1886 = vld [vmem:[#allocation2 + $0x138] sm:$0xff]
    %v1887 = vld [vmem:[#allocation2 + $0x140] sm:$0xff]
    %v1888 = vld [vmem:[#allocation2 + $0x148] sm:$0xff]
    %v1889 = vld [vmem:[#allocation2 + $0x150] sm:$0xff]
    %v1890 = vld [vmem:[#allocation2 + $0x158] sm:$0xff]
    %v1891 = vld [vmem:[#allocation2 + $0x160] sm:$0xff]
    %v1892 = vld [vmem:[#allocation2 + $0x168] sm:$0xff]
    %v1893 = vld [vmem:[#allocation2 + $0x170] sm:$0xff]
    %v1894 = vld [vmem:[#allocation2 + $0x178] sm:$0xff]
    %v1895 = vld [vmem:[#allocation2 + $0x180] sm:$0xff]
    %v1896 = vld [vmem:[#allocation2 + $0x188] sm:$0xff]
    %v1897 = vld [vmem:[#allocation2 + $0x190] sm:$0xff]
    %v1898 = vld [vmem:[#allocation2 + $0x198] sm:$0xff]
    %v1899 = vld [vmem:[#allocation2 + $0x1a0] sm:$0xff]
    %v1900 = vld [vmem:[#allocation2 + $0x1a8] sm:$0xff]
    %v1901 = vld [vmem:[#allocation2 + $0x1b0] sm:$0xff]
    %v1902 = vld [vmem:[#allocation2 + $0x1b8] sm:$0xff]
    %v1903 = vld [vmem:[#allocation2 + $0x1c0] sm:$0xff]
    %v1904 = vld [vmem:[#allocation2 + $0x1c8] sm:$0xff]
    %v1905 = vld [vmem:[#allocation2 + $0x1d0] sm:$0xff]
    %v1906 = vld [vmem:[#allocation2 + $0x1d8] sm:$0xff]
    %v1907 = vld [vmem:[#allocation2 + $0x1e0] sm:$0xff]
    %v1908 = vld [vmem:[#allocation2 + $0x1e8] sm:$0xff]
    %v1909 = vld [vmem:[#allocation2 + $0x1f0] sm:$0xff]
    %v1910 = vld [vmem:[#allocation2 + $0x1f8] sm:$0xff]
    %v1911 = vld [vmem:[%s5] sm:$0xff]
    %v1912 = vld [vmem:[%s5 + $0x8] sm:$0xff]
    %v1913 = vld [vmem:[%s5 + $0x10] sm:$0xff]
    %v1914 = vld [vmem:[%s5 + $0x18] sm:$0xff]
    %1916 = vset.pattern.permute.xlu0 0
    %1917 = vperm.xlu0 %1916, %v1911
    %v1918 = vpop.permute.xlu0 %1917
    %1921 = vset.pattern.permute.xlu0 0
    %1922 = vperm.xlu0 %1921, %v1912
    %v1923 = vpop.permute.xlu0 %1922
    %1926 = vset.pattern.permute.xlu0 0
    %1927 = vperm.xlu0 %1926, %v1913
    %v1928 = vpop.permute.xlu0 %1927
    %1931 = vset.pattern.permute.xlu0 0
    %1932 = vperm.xlu0 %1931, %v1914
    %v1933 = vpop.permute.xlu0 %1932
    %1935 = vmatprep.subr.mxu0 0.0
    %1936 = vmatpush1.msra.mxu0 %v1862
    %1937 = vmatprep.subr.mxu0 0.0
    %1938 = vmatpush1.msra.mxu0 %v1861
    %1939 = vmatprep.subr.mxu0 0.0
    %1940 = vmatpush1.msra.mxu0 %v1860
    %1941 = vmatprep.subr.mxu0 0.0
    %1942 = vmatpush1.msra.mxu0 %v1859
    %1943 = vmatprep.subr.mxu0 0.0
    %1944 = vmatpush1.msra.mxu0 %v1858
    %1945 = vmatprep.subr.mxu0 0.0
    %1946 = vmatpush1.msra.mxu0 %v1857
    %1947 = vmatprep.subr.mxu0 0.0
    %1948 = vmatpush1.msra.mxu0 %v1856
    %1949 = vmatprep.subr.mxu0 0.0
    %1950 = vmatpush1.msra.mxu0 %v1855
    %1951 = vmatprep.subr.mxu0 0.0
    %1952 = vmatpush1.msra.mxu0 %v1854
    %1953 = vmatprep.subr.mxu0 0.0
    %1954 = vmatpush1.msra.mxu0 %v1853
    %1955 = vmatprep.subr.mxu0 0.0
    %1956 = vmatpush1.msra.mxu0 %v1852
    %1957 = vmatprep.subr.mxu0 0.0
    %1958 = vmatpush1.msra.mxu0 %v1851
    %1959 = vmatprep.subr.mxu0 0.0
    %1960 = vmatpush1.msra.mxu0 %v1850
    %1961 = vmatprep.subr.mxu0 0.0
    %1962 = vmatpush1.msra.mxu0 %v1849
    %1963 = vmatprep.subr.mxu0 0.0
    %1964 = vmatpush1.msra.mxu0 %v1848
    %1965 = vmatprep.subr.mxu0 0.0
    %1966 = vmatpush1.msra.mxu0 %v1847
    %1967 = vmatprep.subr.mxu0 0.0
    %1968 = vmatpush2.msra.mxu0 %v1878
    %1969 = vmatprep.subr.mxu0 0.0
    %1970 = vmatpush2.msra.mxu0 %v1877
    %1971 = vmatprep.subr.mxu0 0.0
    %1972 = vmatpush2.msra.mxu0 %v1876
    %1973 = vmatprep.subr.mxu0 0.0
    %1974 = vmatpush2.msra.mxu0 %v1875
    %1975 = vmatprep.subr.mxu0 0.0
    %1976 = vmatpush2.msra.mxu0 %v1874
    %1977 = vmatprep.subr.mxu0 0.0
    %1978 = vmatpush2.msra.mxu0 %v1873
    %1979 = vmatprep.subr.mxu0 0.0
    %1980 = vmatpush2.msra.mxu0 %v1872
    %1981 = vmatprep.subr.mxu0 0.0
    %1982 = vmatpush2.msra.mxu0 %v1871
    %1983 = vmatprep.subr.mxu0 0.0
    %1984 = vmatpush2.msra.mxu0 %v1870
    %1985 = vmatprep.subr.mxu0 0.0
    %1986 = vmatpush2.msra.mxu0 %v1869
    %1987 = vmatprep.subr.mxu0 0.0
    %1988 = vmatpush2.msra.mxu0 %v1868
    %1989 = vmatprep.subr.mxu0 0.0
    %1990 = vmatpush2.msra.mxu0 %v1867
    %1991 = vmatprep.subr.mxu0 0.0
    %1992 = vmatpush2.msra.mxu0 %v1866
    %1993 = vmatprep.subr.mxu0 0.0
    %1994 = vmatpush2.msra.mxu0 %v1865
    %1995 = vmatprep.subr.mxu0 0.0
    %1996 = vmatpush2.msra.mxu0 %v1864
    %1997 = vmatprep.subr.mxu0 0.0
    %1998 = vmatpush2.msra.mxu0 %v1863
    %1999 = vmatprep.mubr.f32.mxu0 %v1778
    %2000 = vmatmul.mubr.f32.gmra.mxu0 %v1776
    %v2001 = vpop.f32.mrf.mxu0
    %v2002 = vadd.f32 %v1918, %v2001
    %v2003 = vpop.f32.mrf.mxu0
    %2004 = vmatprep.mubr.f32.mxu0 %v1782
    %2005 = vmatmul.mubr.f32.gmra.mxu0 %v1780
    %v2006 = vpop.f32.mrf.mxu0
    %v2007 = vadd.f32 %v1923, %v2006
    %v2008 = vpop.f32.mrf.mxu0
    %2009 = vmatprep.mubr.f32.mxu0 %v1788
    %2010 = vmatmul.mubr.f32.gmra.mxu0 %v1786
    %v2011 = vpop.f32.mrf.mxu0
    %v2012 = vadd.f32 %v1928, %v2011
    %v2013 = vpop.f32.mrf.mxu0
    %2014 = vmatprep.mubr.f32.mxu0 %v1792
    %2015 = vmatmul.mubr.f32.gmra.mxu0 %v1790
    %v2016 = vpop.f32.mrf.mxu0
    %v2017 = vadd.f32 %v1933, %v2016
    %v2018 = vpop.f32.mrf.mxu0
    %2019 = vdwg.mxu0
    %2020 = vmatprep.subr.mxu0 0.0
    %2021 = vmatpush1.msra.mxu0 %v1894
    %2022 = vmatprep.subr.mxu0 0.0
    %2023 = vmatpush1.msra.mxu0 %v1893
    %2024 = vmatprep.subr.mxu0 0.0
    %2025 = vmatpush1.msra.mxu0 %v1892
    %2026 = vmatprep.subr.mxu0 0.0
    %2027 = vmatpush1.msra.mxu0 %v1891
    %2028 = vmatprep.subr.mxu0 0.0
    %2029 = vmatpush1.msra.mxu0 %v1890
    %2030 = vmatprep.subr.mxu0 0.0
    %2031 = vmatpush1.msra.mxu0 %v1889
    %2032 = vmatprep.subr.mxu0 0.0
    %2033 = vmatpush1.msra.mxu0 %v1888
    %2034 = vmatprep.subr.mxu0 0.0
    %2035 = vmatpush1.msra.mxu0 %v1887
    %2036 = vmatprep.subr.mxu0 0.0
    %2037 = vmatpush1.msra.mxu0 %v1886
    %2038 = vmatprep.subr.mxu0 0.0
    %2039 = vmatpush1.msra.mxu0 %v1885
    %2040 = vmatprep.subr.mxu0 0.0
    %2041 = vmatpush1.msra.mxu0 %v1884
    %2042 = vmatprep.subr.mxu0 0.0
    %2043 = vmatpush1.msra.mxu0 %v1883
    %2044 = vmatprep.subr.mxu0 0.0
    %2045 = vmatpush1.msra.mxu0 %v1882
    %2046 = vmatprep.subr.mxu0 0.0
    %2047 = vmatpush1.msra.mxu0 %v1881
    %2048 = vmatprep.subr.mxu0 0.0
    %2049 = vmatpush1.msra.mxu0 %v1880
    %2050 = vmatprep.subr.mxu0 0.0
    %2051 = vmatpush1.msra.mxu0 %v1879
    %2052 = vmatprep.subr.mxu0 0.0
    %2053 = vmatpush2.msra.mxu0 %v1910
    %2054 = vmatprep.subr.mxu0 0.0
    %2055 = vmatpush2.msra.mxu0 %v1909
    %2056 = vmatprep.subr.mxu0 0.0
    %2057 = vmatpush2.msra.mxu0 %v1908
    %2058 = vmatprep.subr.mxu0 0.0
    %2059 = vmatpush2.msra.mxu0 %v1907
    %2060 = vmatprep.subr.mxu0 0.0
    %2061 = vmatpush2.msra.mxu0 %v1906
    %2062 = vmatprep.subr.mxu0 0.0
    %2063 = vmatpush2.msra.mxu0 %v1905
    %2064 = vmatprep.subr.mxu0 0.0
    %2065 = vmatpush2.msra.mxu0 %v1904
    %2066 = vmatprep.subr.mxu0 0.0
    %2067 = vmatpush2.msra.mxu0 %v1903
    %2068 = vmatprep.subr.mxu0 0.0
    %2069 = vmatpush2.msra.mxu0 %v1902
    %2070 = vmatprep.subr.mxu0 0.0
    %2071 = vmatpush2.msra.mxu0 %v1901
    %2072 = vmatprep.subr.mxu0 0.0
    %2073 = vmatpush2.msra.mxu0 %v1900
    %2074 = vmatprep.subr.mxu0 0.0
    %2075 = vmatpush2.msra.mxu0 %v1899
    %2076 = vmatprep.subr.mxu0 0.0
    %2077 = vmatpush2.msra.mxu0 %v1898
    %2078 = vmatprep.subr.mxu0 0.0
    %2079 = vmatpush2.msra.mxu0 %v1897
    %2080 = vmatprep.subr.mxu0 0.0
    %2081 = vmatpush2.msra.mxu0 %v1896
    %2082 = vmatprep.subr.mxu0 0.0
    %2083 = vmatpush2.msra.mxu0 %v1895
    %2084 = vmatprep.mubr.f32.mxu0 %v1831
    %2085 = vmatmul.mubr.f32.gmra.mxu0 %v1829
    %v2086 = vpop.f32.mrf.mxu0
    %v2087 = vadd.f32 %v2002, %v2086
    %v2088 = vpop.f32.mrf.mxu0
    %2089 = vmatprep.mubr.f32.mxu0 %v1835
    %2090 = vmatmul.mubr.f32.gmra.mxu0 %v1833
    %v2091 = vpop.f32.mrf.mxu0
    %v2092 = vadd.f32 %v2007, %v2091
    %v2093 = vpop.f32.mrf.mxu0
    %2094 = vmatprep.mubr.f32.mxu0 %v1841
    %2095 = vmatmul.mubr.f32.gmra.mxu0 %v1839
    %v2096 = vpop.f32.mrf.mxu0
    %v2097 = vadd.f32 %v2012, %v2096
    %v2098 = vpop.f32.mrf.mxu0
    %2099 = vmatprep.mubr.f32.mxu0 %v1845
    %2100 = vmatmul.mubr.f32.gmra.mxu0 %v1843
    %v2101 = vpop.f32.mrf.mxu0
    %v2102 = vadd.f32 %v2017, %v2101
    %v2103 = vpop.f32.mrf.mxu0
    %2104 = vdwg.mxu0
    %v2105 = vxor.u32 %v2087, 2147483648
    %v2106 = vxor.u32 %v2092, 2147483648
    %v2107 = vxor.u32 %v2097, 2147483648
    %v2108 = vxor.u32 %v2102, 2147483648
    %v2109 = vmul.f32 %v2105, 1.442695
    %v2110 = vpow.pop %v2109
    %v2111 = vmul.f32 %v2106, 1.442695
    %v2112 = vpow.pop %v2111
    %v2113 = vmul.f32 %v2107, 1.442695
    %v2114 = vpow.pop %v2113
    %v2115 = vmul.f32 %v2108, 1.442695
    %v2116 = vpow.pop %v2115
    %v2117 = vadd.f32 %v2110, 1.0
    %v2118 = vadd.f32 %v2112, 1.0
    %v2119 = vadd.f32 %v2114, 1.0
    %v2120 = vadd.f32 %v2116, 1.0
    %v2121 = vrcp.pop %v2117
    %v2122 = vmul.f32 1.0, %v2121
    %v2123 = vrcp.pop %v2118
    %v2124 = vmul.f32 1.0, %v2123
    %v2125 = vrcp.pop %v2119
    %v2126 = vmul.f32 1.0, %v2125
    %v2127 = vrcp.pop %v2120
    %v2128 = vmul.f32 1.0, %v2127
    %v2129 = vmul.f32 %v2087, %v2122
    %v2130 = vmul.f32 %v2092, %v2124
    %v2131 = vmul.f32 %v2097, %v2126
    %v2132 = vmul.f32 %v2102, %v2128
    %2137 = vrot.lane.b32.xlu0 %v2129, 9
    %v2138 = vpop.permute.xlu0 %2137
    %2139 = vrot.lane.b32.xlu0 %v2130, 9
    %v2140 = vpop.permute.xlu0 %2139
    %2141 = vrot.lane.b32.xlu0 %v2131, 9
    %v2142 = vpop.permute.xlu0 %2141
    %2143 = vrot.lane.b32.xlu0 %v2132, 9
    %v2144 = vpop.permute.xlu0 %2143
    %vm2149 = vcmask 72704
    %v2150 = vsel %vm2149, 0.0, %v2138
    %v2151 = vsel %vm2149, 0.0, %v2140
    %v2152 = vsel %vm2149, 0.0, %v2142
    %v2153 = vsel %vm2149, 0.0, %v2144
    %v2154 = vsel %vm2149, %v2138, 0.0
    %v2155 = vsel %vm2149, %v2140, 0.0
    %v2156 = vsel %vm2149, %v2142, 0.0
    %v2157 = vsel %vm2149, %v2144, 0.0
    %v2158 = vld [vmem:[%s10] sm:$0x1]
    %v2160 = vlaneseq
    %v2161 = vshrl.u32 %v2160, 7
    %v2162 = vsub.s32 0, %v2161
    %v2163 = vrot.slane %v2158, %v2162
    %v2165 = vmul.f32 %v2150, %v2163
    %v2166 = vmul.f32 %v2151, %v2163
    %v2167 = vmul.f32 %v2152, %v2163
    %v2168 = vmul.f32 %v2153, %v2163
    %s2169 = scalar_lea.vmem %s10, 1
    %v2170 = vld [vmem:[%s2169] sm:$0x1]
    %v2172 = vlaneseq
    %v2173 = vshrl.u32 %v2172, 7
    %v2174 = vsub.s32 0, %v2173
    %v2175 = vrot.slane %v2170, %v2174
    %2176 = vrot.lane.b32.xlu0 %v2175, 1
    %v2177 = vpop.permute.xlu0 %2176
    %v2179 = vmul.f32 %v2150, %v2177
    %v2180 = vmul.f32 %v2154, %v2177
    %v2181 = vmul.f32 %v2151, %v2177
    %v2182 = vmul.f32 %v2155, %v2177
    %v2183 = vmul.f32 %v2152, %v2177
    %v2184 = vmul.f32 %v2156, %v2177
    %v2185 = vmul.f32 %v2153, %v2177
    %v2186 = vmul.f32 %v2157, %v2177
    %s2187 = scalar_lea.vmem %s10, 2
    %v2188 = vld [vmem:[%s2187] sm:$0x1]
    %v2190 = vlaneseq
    %v2191 = vshrl.u32 %v2190, 7
    %v2192 = vsub.s32 0, %v2191
    %v2193 = vrot.slane %v2188, %v2192
    %2194 = vrot.lane.b32.xlu0 %v2193, 2
    %v2195 = vpop.permute.xlu0 %2194
    %v2197 = vmul.f32 %v2150, %v2195
    %v2198 = vmul.f32 %v2154, %v2195
    %v2199 = vmul.f32 %v2151, %v2195
    %v2200 = vmul.f32 %v2155, %v2195
    %v2201 = vmul.f32 %v2152, %v2195
    %v2202 = vmul.f32 %v2156, %v2195
    %v2203 = vmul.f32 %v2153, %v2195
    %v2204 = vmul.f32 %v2157, %v2195
    %s2205 = scalar_lea.vmem %s10, 3
    %v2206 = vld [vmem:[%s2205] sm:$0x1]
    %v2208 = vlaneseq
    %v2209 = vshrl.u32 %v2208, 7
    %v2210 = vsub.s32 0, %v2209
    %v2211 = vrot.slane %v2206, %v2210
    %2212 = vrot.lane.b32.xlu0 %v2211, 8
    %v2213 = vpop.permute.xlu0 %2212
    %v2215 = vmul.f32 %v2150, %v2213
    %v2216 = vmul.f32 %v2154, %v2213
    %v2217 = vmul.f32 %v2151, %v2213
    %v2218 = vmul.f32 %v2155, %v2213
    %v2219 = vmul.f32 %v2152, %v2213
    %v2220 = vmul.f32 %v2156, %v2213
    %v2221 = vmul.f32 %v2153, %v2213
    %v2222 = vmul.f32 %v2157, %v2213
    %s2223 = scalar_lea.vmem %s10, 4
    %v2224 = vld [vmem:[%s2223] sm:$0x1]
    %v2226 = vlaneseq
    %v2227 = vshrl.u32 %v2226, 7
    %v2228 = vsub.s32 0, %v2227
    %v2229 = vrot.slane %v2224, %v2228
    %2230 = vrot.lane.b32.xlu0 %v2229, 9
    %v2231 = vpop.permute.xlu0 %2230
    %v2233 = vmul.f32 %v2150, %v2231
    %v2234 = vmul.f32 %v2154, %v2231
    %v2235 = vmul.f32 %v2151, %v2231
    %v2236 = vmul.f32 %v2155, %v2231
    %v2237 = vmul.f32 %v2152, %v2231
    %v2238 = vmul.f32 %v2156, %v2231
    %v2239 = vmul.f32 %v2153, %v2231
    %v2240 = vmul.f32 %v2157, %v2231
    %s2241 = scalar_lea.vmem %s10, 5
    %v2242 = vld [vmem:[%s2241] sm:$0x1]
    %v2244 = vlaneseq
    %v2245 = vshrl.u32 %v2244, 7
    %v2246 = vsub.s32 0, %v2245
    %v2247 = vrot.slane %v2242, %v2246
    %2248 = vrot.lane.b32.xlu0 %v2247, 10
    %v2249 = vpop.permute.xlu0 %2248
    %v2251 = vmul.f32 %v2150, %v2249
    %v2252 = vmul.f32 %v2154, %v2249
    %v2253 = vmul.f32 %v2151, %v2249
    %v2254 = vmul.f32 %v2155, %v2249
    %v2255 = vmul.f32 %v2152, %v2249
    %v2256 = vmul.f32 %v2156, %v2249
    %v2257 = vmul.f32 %v2153, %v2249
    %v2258 = vmul.f32 %v2157, %v2249
    %s2259 = scalar_lea.vmem %s10, 6
    %v2260 = vld [vmem:[%s2259] sm:$0x1]
    %v2262 = vlaneseq
    %v2263 = vshrl.u32 %v2262, 7
    %v2264 = vsub.s32 0, %v2263
    %v2265 = vrot.slane %v2260, %v2264
    %2266 = vrot.lane.b32.xlu0 %v2265, 16
    %v2267 = vpop.permute.xlu0 %2266
    %v2269 = vmul.f32 %v2150, %v2267
    %v2270 = vmul.f32 %v2154, %v2267
    %v2271 = vmul.f32 %v2151, %v2267
    %v2272 = vmul.f32 %v2155, %v2267
    %v2273 = vmul.f32 %v2152, %v2267
    %v2274 = vmul.f32 %v2156, %v2267
    %v2275 = vmul.f32 %v2153, %v2267
    %v2276 = vmul.f32 %v2157, %v2267
    %s2277 = scalar_lea.vmem %s10, 7
    %v2278 = vld [vmem:[%s2277] sm:$0x1]
    %v2280 = vlaneseq
    %v2281 = vshrl.u32 %v2280, 7
    %v2282 = vsub.s32 0, %v2281
    %v2283 = vrot.slane %v2278, %v2282
    %2284 = vrot.lane.b32.xlu0 %v2283, 17
    %v2285 = vpop.permute.xlu0 %2284
    %v2287 = vmul.f32 %v2150, %v2285
    %v2288 = vmul.f32 %v2154, %v2285
    %v2289 = vmul.f32 %v2151, %v2285
    %v2290 = vmul.f32 %v2155, %v2285
    %v2291 = vmul.f32 %v2152, %v2285
    %v2292 = vmul.f32 %v2156, %v2285
    %v2293 = vmul.f32 %v2153, %v2285
    %v2294 = vmul.f32 %v2157, %v2285
    %s2295 = scalar_lea.vmem %s10, 8
    %v2296 = vld [vmem:[%s2295] sm:$0x1]
    %v2298 = vlaneseq
    %v2299 = vshrl.u32 %v2298, 7
    %v2300 = vsub.s32 0, %v2299
    %v2301 = vrot.slane %v2296, %v2300
    %2302 = vrot.lane.b32.xlu0 %v2301, 18
    %v2303 = vpop.permute.xlu0 %2302
    %v2305 = vmul.f32 %v2150, %v2303
    %v2306 = vmul.f32 %v2154, %v2303
    %v2307 = vmul.f32 %v2151, %v2303
    %v2308 = vmul.f32 %v2155, %v2303
    %v2309 = vmul.f32 %v2152, %v2303
    %v2310 = vmul.f32 %v2156, %v2303
    %v2311 = vmul.f32 %v2153, %v2303
    %v2312 = vmul.f32 %v2157, %v2303
    %2321 = vrot.lane.b32.xlu0 %v2179, 127
    %v2322 = vpop.permute.xlu0 %2321
    %2323 = vrot.lane.b32.xlu0 %v2180, 127
    %v2324 = vpop.permute.xlu0 %2323
    %2325 = vrot.lane.b32.xlu0 %v2181, 127
    %v2326 = vpop.permute.xlu0 %2325
    %2327 = vrot.lane.b32.xlu0 %v2182, 127
    %v2328 = vpop.permute.xlu0 %2327
    %2329 = vrot.lane.b32.xlu0 %v2183, 127
    %v2330 = vpop.permute.xlu0 %2329
    %2331 = vrot.lane.b32.xlu0 %v2184, 127
    %v2332 = vpop.permute.xlu0 %2331
    %2333 = vrot.lane.b32.xlu0 %v2185, 127
    %v2334 = vpop.permute.xlu0 %2333
    %2335 = vrot.lane.b32.xlu0 %v2186, 127
    %v2336 = vpop.permute.xlu0 %2335
    %v2337 = vsel %vm476, %v2322, %v2324
    %v2338 = vsel %vm476, %v2326, %v2328
    %v2339 = vsel %vm476, %v2330, %v2332
    %v2340 = vsel %vm476, %v2334, %v2336
    %2353 = vrot.lane.b32.xlu0 %v2197, 126
    %v2354 = vpop.permute.xlu0 %2353
    %2355 = vrot.lane.b32.xlu0 %v2198, 126
    %v2356 = vpop.permute.xlu0 %2355
    %2357 = vrot.lane.b32.xlu0 %v2199, 126
    %v2358 = vpop.permute.xlu0 %2357
    %2359 = vrot.lane.b32.xlu0 %v2200, 126
    %v2360 = vpop.permute.xlu0 %2359
    %2361 = vrot.lane.b32.xlu0 %v2201, 126
    %v2362 = vpop.permute.xlu0 %2361
    %2363 = vrot.lane.b32.xlu0 %v2202, 126
    %v2364 = vpop.permute.xlu0 %2363
    %2365 = vrot.lane.b32.xlu0 %v2203, 126
    %v2366 = vpop.permute.xlu0 %2365
    %2367 = vrot.lane.b32.xlu0 %v2204, 126
    %v2368 = vpop.permute.xlu0 %2367
    %v2369 = vsel %vm500, %v2354, %v2356
    %v2370 = vsel %vm500, %v2358, %v2360
    %v2371 = vsel %vm500, %v2362, %v2364
    %v2372 = vsel %vm500, %v2366, %v2368
    %2385 = vrot.lane.b32.xlu0 %v2215, 120
    %v2386 = vpop.permute.xlu0 %2385
    %2387 = vrot.lane.b32.xlu0 %v2216, 120
    %v2388 = vpop.permute.xlu0 %2387
    %2389 = vrot.lane.b32.xlu0 %v2217, 120
    %v2390 = vpop.permute.xlu0 %2389
    %2391 = vrot.lane.b32.xlu0 %v2218, 120
    %v2392 = vpop.permute.xlu0 %2391
    %2393 = vrot.lane.b32.xlu0 %v2219, 120
    %v2394 = vpop.permute.xlu0 %2393
    %2395 = vrot.lane.b32.xlu0 %v2220, 120
    %v2396 = vpop.permute.xlu0 %2395
    %2397 = vrot.lane.b32.xlu0 %v2221, 120
    %v2398 = vpop.permute.xlu0 %2397
    %2399 = vrot.lane.b32.xlu0 %v2222, 120
    %v2400 = vpop.permute.xlu0 %2399
    %vm2401 = vcmask 982016
    %v2402 = vsel %vm2401, %v2386, %v2388
    %v2403 = vsel %vm2401, %v2390, %v2392
    %v2404 = vsel %vm2401, %v2394, %v2396
    %v2405 = vsel %vm2401, %v2398, %v2400
    %2418 = vrot.lane.b32.xlu0 %v2233, 119
    %v2419 = vpop.permute.xlu0 %2418
    %2420 = vrot.lane.b32.xlu0 %v2234, 119
    %v2421 = vpop.permute.xlu0 %2420
    %2422 = vrot.lane.b32.xlu0 %v2235, 119
    %v2423 = vpop.permute.xlu0 %2422
    %2424 = vrot.lane.b32.xlu0 %v2236, 119
    %v2425 = vpop.permute.xlu0 %2424
    %2426 = vrot.lane.b32.xlu0 %v2237, 119
    %v2427 = vpop.permute.xlu0 %2426
    %2428 = vrot.lane.b32.xlu0 %v2238, 119
    %v2429 = vpop.permute.xlu0 %2428
    %2430 = vrot.lane.b32.xlu0 %v2239, 119
    %v2431 = vpop.permute.xlu0 %2430
    %2432 = vrot.lane.b32.xlu0 %v2240, 119
    %v2433 = vpop.permute.xlu0 %2432
    %vm2434 = vcmask 973824
    %v2435 = vsel %vm2434, %v2419, %v2421
    %v2436 = vsel %vm2434, %v2423, %v2425
    %v2437 = vsel %vm2434, %v2427, %v2429
    %v2438 = vsel %vm2434, %v2431, %v2433
    %2451 = vrot.lane.b32.xlu0 %v2251, 118
    %v2452 = vpop.permute.xlu0 %2451
    %2453 = vrot.lane.b32.xlu0 %v2252, 118
    %v2454 = vpop.permute.xlu0 %2453
    %2455 = vrot.lane.b32.xlu0 %v2253, 118
    %v2456 = vpop.permute.xlu0 %2455
    %2457 = vrot.lane.b32.xlu0 %v2254, 118
    %v2458 = vpop.permute.xlu0 %2457
    %2459 = vrot.lane.b32.xlu0 %v2255, 118
    %v2460 = vpop.permute.xlu0 %2459
    %2461 = vrot.lane.b32.xlu0 %v2256, 118
    %v2462 = vpop.permute.xlu0 %2461
    %2463 = vrot.lane.b32.xlu0 %v2257, 118
    %v2464 = vpop.permute.xlu0 %2463
    %2465 = vrot.lane.b32.xlu0 %v2258, 118
    %v2466 = vpop.permute.xlu0 %2465
    %vm2467 = vcmask 965632
    %v2468 = vsel %vm2467, %v2452, %v2454
    %v2469 = vsel %vm2467, %v2456, %v2458
    %v2470 = vsel %vm2467, %v2460, %v2462
    %v2471 = vsel %vm2467, %v2464, %v2466
    %2484 = vrot.lane.b32.xlu0 %v2269, 112
    %v2485 = vpop.permute.xlu0 %2484
    %2486 = vrot.lane.b32.xlu0 %v2270, 112
    %v2487 = vpop.permute.xlu0 %2486
    %2488 = vrot.lane.b32.xlu0 %v2271, 112
    %v2489 = vpop.permute.xlu0 %2488
    %2490 = vrot.lane.b32.xlu0 %v2272, 112
    %v2491 = vpop.permute.xlu0 %2490
    %2492 = vrot.lane.b32.xlu0 %v2273, 112
    %v2493 = vpop.permute.xlu0 %2492
    %2494 = vrot.lane.b32.xlu0 %v2274, 112
    %v2495 = vpop.permute.xlu0 %2494
    %2496 = vrot.lane.b32.xlu0 %v2275, 112
    %v2497 = vpop.permute.xlu0 %2496
    %2498 = vrot.lane.b32.xlu0 %v2276, 112
    %v2499 = vpop.permute.xlu0 %2498
    %v2500 = vsel %vm529, %v2485, %v2487
    %v2501 = vsel %vm529, %v2489, %v2491
    %v2502 = vsel %vm529, %v2493, %v2495
    %v2503 = vsel %vm529, %v2497, %v2499
    %2516 = vrot.lane.b32.xlu0 %v2287, 111
    %v2517 = vpop.permute.xlu0 %2516
    %2518 = vrot.lane.b32.xlu0 %v2288, 111
    %v2519 = vpop.permute.xlu0 %2518
    %2520 = vrot.lane.b32.xlu0 %v2289, 111
    %v2521 = vpop.permute.xlu0 %2520
    %2522 = vrot.lane.b32.xlu0 %v2290, 111
    %v2523 = vpop.permute.xlu0 %2522
    %2524 = vrot.lane.b32.xlu0 %v2291, 111
    %v2525 = vpop.permute.xlu0 %2524
    %2526 = vrot.lane.b32.xlu0 %v2292, 111
    %v2527 = vpop.permute.xlu0 %2526
    %2528 = vrot.lane.b32.xlu0 %v2293, 111
    %v2529 = vpop.permute.xlu0 %2528
    %2530 = vrot.lane.b32.xlu0 %v2294, 111
    %v2531 = vpop.permute.xlu0 %2530
    %v2532 = vsel %vm553, %v2517, %v2519
    %v2533 = vsel %vm553, %v2521, %v2523
    %v2534 = vsel %vm553, %v2525, %v2527
    %v2535 = vsel %vm553, %v2529, %v2531
    %2548 = vrot.lane.b32.xlu0 %v2305, 110
    %v2549 = vpop.permute.xlu0 %2548
    %2550 = vrot.lane.b32.xlu0 %v2306, 110
    %v2551 = vpop.permute.xlu0 %2550
    %2552 = vrot.lane.b32.xlu0 %v2307, 110
    %v2553 = vpop.permute.xlu0 %2552
    %2554 = vrot.lane.b32.xlu0 %v2308, 110
    %v2555 = vpop.permute.xlu0 %2554
    %2556 = vrot.lane.b32.xlu0 %v2309, 110
    %v2557 = vpop.permute.xlu0 %2556
    %2558 = vrot.lane.b32.xlu0 %v2310, 110
    %v2559 = vpop.permute.xlu0 %2558
    %2560 = vrot.lane.b32.xlu0 %v2311, 110
    %v2561 = vpop.permute.xlu0 %2560
    %2562 = vrot.lane.b32.xlu0 %v2312, 110
    %v2563 = vpop.permute.xlu0 %2562
    %v2564 = vsel %vm582, %v2549, %v2551
    %v2565 = vsel %vm582, %v2553, %v2555
    %v2566 = vsel %vm582, %v2557, %v2559
    %v2567 = vsel %vm582, %v2561, %v2563
    %v2572 = vpack.c.bf16 %v2166, %v2165
    %v2573 = vpack.c.bf16 %v2168, %v2167
    %v2574 = vpack.c.bf16 %v2338, %v2337
    %v2575 = vpack.c.bf16 %v2340, %v2339
    %v2576 = vpack.c.bf16 %v2370, %v2369
    %v2577 = vpack.c.bf16 %v2372, %v2371
    %v2578 = vpack.c.bf16 %v2403, %v2402
    %v2579 = vpack.c.bf16 %v2405, %v2404
    %v2580 = vpack.c.bf16 %v2436, %v2435
    %v2581 = vpack.c.bf16 %v2438, %v2437
    %v2582 = vpack.c.bf16 %v2469, %v2468
    %v2583 = vpack.c.bf16 %v2471, %v2470
    %v2584 = vpack.c.bf16 %v2501, %v2500
    %v2585 = vpack.c.bf16 %v2503, %v2502
    %v2586 = vpack.c.bf16 %v2533, %v2532
    %v2587 = vpack.c.bf16 %v2535, %v2534
    %v2588 = vpack.c.bf16 %v2565, %v2564
    %v2589 = vpack.c.bf16 %v2567, %v2566
    %v2590 = vld [vmem:[%s8] sm:$0xff]
    %v2591 = vld [vmem:[%s8 + $0x8] sm:$0xf]
    %v2592 = vld [vmem:[%s8 + $0xc] sm:$0xff]
    %v2593 = vld [vmem:[%s8 + $0x14] sm:$0xf]
    %v2594 = vld [vmem:[%s8 + $0x18] sm:$0xff]
    %v2595 = vld [vmem:[%s8 + $0x20] sm:$0xf]
    %v2596 = vld [vmem:[%s8 + $0x24] sm:$0xff]
    %v2597 = vld [vmem:[%s8 + $0x2c] sm:$0xf]
    %v2598 = vld [vmem:[%s9] sm:$0xff]
    %v2599 = vld [vmem:[%s9 + $0x8] sm:$0xff]
    %v2600 = vld [vmem:[%s9 + $0x10] sm:$0xff]
    %v2601 = vld [vmem:[%s9 + $0x18] sm:$0xff]
    %2603 = vset.pattern.permute.xlu0 0
    %2604 = vperm.xlu0 %2603, %v2598
    %v2605 = vpop.permute.xlu0 %2604
    %2608 = vset.pattern.permute.xlu0 0
    %2609 = vperm.xlu0 %2608, %v2599
    %v2610 = vpop.permute.xlu0 %2609
    %2613 = vset.pattern.permute.xlu0 0
    %2614 = vperm.xlu0 %2613, %v2600
    %v2615 = vpop.permute.xlu0 %2614
    %2618 = vset.pattern.permute.xlu0 0
    %2619 = vperm.xlu0 %2618, %v2601
    %v2620 = vpop.permute.xlu0 %2619
    %v2630 = vunpack.c.l.b16 %v2590
    %v2631 = vunpack.c.h.b16 %v2590
    %v2632 = vunpack.c.l.b16 %v2591
    %v2633 = vunpack.c.l.b16 %v2592
    %v2634 = vunpack.c.h.b16 %v2592
    %v2635 = vunpack.c.l.b16 %v2593
    %v2636 = vunpack.c.l.b16 %v2594
    %v2637 = vunpack.c.h.b16 %v2594
    %v2638 = vunpack.c.l.b16 %v2595
    %v2639 = vunpack.c.l.b16 %v2596
    %v2640 = vunpack.c.h.b16 %v2596
    %v2641 = vunpack.c.l.b16 %v2597
    %v2642 = vpack.c.b16 %v2633, %v2630
    %v2643 = vpack.c.b16 %v2634, %v2631
    %v2644 = vpack.c.b16 %v2635, %v2632
    %v2645 = vpack.c.b16 %v2639, %v2636
    %v2646 = vpack.c.b16 %v2640, %v2637
    %v2647 = vpack.c.b16 %v2641, %v2638
    %v2653 = vsel %vm360, %v2644, 0
    %v2656 = vsel %vm360, %v2647, 0
    %2658 = vmatprep.subr.bf16.mxu0 0
    %2659 = vmatpush1.bf16.msra.mxu0 %v2579
    %2660 = vmatprep.subr.bf16.mxu0 0
    %2661 = vmatpush1.bf16.msra.mxu0 %v2578
    %2662 = vmatprep.subr.bf16.mxu0 0
    %2663 = vmatpush1.bf16.msra.mxu0 %v2577
    %2664 = vmatprep.subr.bf16.mxu0 0
    %2665 = vmatpush1.bf16.msra.mxu0 %v2576
    %2666 = vmatprep.subr.bf16.mxu0 0
    %2667 = vmatpush1.bf16.msra.mxu0 %v2575
    %2668 = vmatprep.subr.bf16.mxu0 0
    %2669 = vmatpush1.bf16.msra.mxu0 %v2574
    %2670 = vmatprep.subr.bf16.mxu0 0
    %2671 = vmatpush1.bf16.msra.mxu0 %v2573
    %2672 = vmatprep.subr.bf16.mxu0 0
    %2673 = vmatpush1.bf16.msra.mxu0 %v2572
    %2674 = vmatprep.subr.bf16.mxu0 0
    %2675 = vmatpush2.bf16.msra.mxu0 %v2587
    %2676 = vmatprep.subr.bf16.mxu0 0
    %2677 = vmatpush2.bf16.msra.mxu0 %v2586
    %2678 = vmatprep.subr.bf16.mxu0 0
    %2679 = vmatpush2.bf16.msra.mxu0 %v2585
    %2680 = vmatprep.subr.bf16.mxu0 0
    %2681 = vmatpush2.bf16.msra.mxu0 %v2584
    %2682 = vmatprep.subr.bf16.mxu0 0
    %2683 = vmatpush2.bf16.msra.mxu0 %v2583
    %2684 = vmatprep.subr.bf16.mxu0 0
    %2685 = vmatpush2.bf16.msra.mxu0 %v2582
    %2686 = vmatprep.subr.bf16.mxu0 0
    %2687 = vmatpush2.bf16.msra.mxu0 %v2581
    %2688 = vmatprep.subr.bf16.mxu0 0
    %2689 = vmatpush2.bf16.msra.mxu0 %v2580
    %2690 = vmatprep.mubr.bf16.mxu0 %v2643
    %2691 = vmatmul.mubr.bf16.gmra.mxu0 %v2642
    %v2692 = vpop.f32.mrf.mxu0
    %v2693 = vadd.f32 %v2605, %v2692
    %v2694 = vpop.f32.mrf.mxu0
    %v2695 = vpop.f32.mrf.mxu0
    %v2696 = vadd.f32 %v2610, %v2695
    %v2697 = vpop.f32.mrf.mxu0
    %2698 = vmatprep.mubr.bf16.mxu0 %v2646
    %2699 = vmatmul.mubr.bf16.gmra.mxu0 %v2645
    %v2700 = vpop.f32.mrf.mxu0
    %v2701 = vadd.f32 %v2615, %v2700
    %v2702 = vpop.f32.mrf.mxu0
    %v2703 = vpop.f32.mrf.mxu0
    %v2704 = vadd.f32 %v2620, %v2703
    %v2705 = vpop.f32.mrf.mxu0
    %2706 = vdwg.mxu0
    %2707 = vmatprep.subr.bf16.mxu0 0
    %2708 = vmatpush1.bf16.msra.mxu0 0
    %2709 = vmatprep.subr.bf16.mxu0 0
    %2710 = vmatpush1.bf16.msra.mxu0 0
    %2711 = vmatprep.subr.bf16.mxu0 0
    %2712 = vmatpush1.bf16.msra.mxu0 0
    %2713 = vmatprep.subr.bf16.mxu0 0
    %2714 = vmatpush1.bf16.msra.mxu0 0
    %2715 = vmatprep.subr.bf16.mxu0 0
    %2716 = vmatpush1.bf16.msra.mxu0 0
    %2717 = vmatprep.subr.bf16.mxu0 0
    %2718 = vmatpush1.bf16.msra.mxu0 0
    %2719 = vmatprep.subr.bf16.mxu0 0
    %2720 = vmatpush1.bf16.msra.mxu0 %v2589
    %2721 = vmatprep.subr.bf16.mxu0 0
    %2722 = vmatpush1.bf16.msra.mxu0 %v2588
    %2723 = vmatprep.subr.bf16.mxu0 0
    %2724 = vmatpush2.bf16.msra.mxu0 0
    %2725 = vmatprep.subr.bf16.mxu0 0
    %2726 = vmatpush2.bf16.msra.mxu0 0
    %2727 = vmatprep.subr.bf16.mxu0 0
    %2728 = vmatpush2.bf16.msra.mxu0 0
    %2729 = vmatprep.subr.bf16.mxu0 0
    %2730 = vmatpush2.bf16.msra.mxu0 0
    %2731 = vmatprep.subr.bf16.mxu0 0
    %2732 = vmatpush2.bf16.msra.mxu0 0
    %2733 = vmatprep.subr.bf16.mxu0 0
    %2734 = vmatpush2.bf16.msra.mxu0 0
    %2735 = vmatprep.subr.bf16.mxu0 0
    %2736 = vmatpush2.bf16.msra.mxu0 0
    %2737 = vmatprep.subr.bf16.mxu0 0
    %2738 = vmatpush2.bf16.msra.mxu0 0
    %2739 = vmatprep.mubr.bf16.mxu0 0
    %2740 = vmatmul.mubr.bf16.gmra.mxu0 %v2653
    %v2741 = vpop.f32.mrf.mxu0
    %v2742 = vadd.f32 %v2693, %v2741
    %v2743 = vpop.f32.mrf.mxu0
    %v2744 = vpop.f32.mrf.mxu0
    %v2745 = vadd.f32 %v2696, %v2744
    %v2746 = vpop.f32.mrf.mxu0
    %2747 = vmatprep.mubr.bf16.mxu0 0
    %2748 = vmatmul.mubr.bf16.gmra.mxu0 %v2656
    %v2749 = vpop.f32.mrf.mxu0
    %v2750 = vadd.f32 %v2701, %v2749
    %v2751 = vpop.f32.mrf.mxu0
    %v2752 = vpop.f32.mrf.mxu0
    %v2753 = vadd.f32 %v2704, %v2752
    %v2754 = vpop.f32.mrf.mxu0
    %2755 = vdwg.mxu0
    %v2756 = vxor.u32 %v2742, 2147483648
    %v2757 = vxor.u32 %v2745, 2147483648
    %v2758 = vxor.u32 %v2750, 2147483648
    %v2759 = vxor.u32 %v2753, 2147483648
    %v2760 = vmul.f32 %v2756, 1.442695
    %v2761 = vpow.pop %v2760
    %v2762 = vmul.f32 %v2757, 1.442695
    %v2763 = vpow.pop %v2762
    %v2764 = vmul.f32 %v2758, 1.442695
    %v2765 = vpow.pop %v2764
    %v2766 = vmul.f32 %v2759, 1.442695
    %v2767 = vpow.pop %v2766
    %v2768 = vadd.f32 %v2761, 1.0
    %v2769 = vadd.f32 %v2763, 1.0
    %v2770 = vadd.f32 %v2765, 1.0
    %v2771 = vadd.f32 %v2767, 1.0
    %v2772 = vrcp.pop %v2768
    %v2773 = vmul.f32 1.0, %v2772
    %v2774 = vrcp.pop %v2769
    %v2775 = vmul.f32 1.0, %v2774
    %v2776 = vrcp.pop %v2770
    %v2777 = vmul.f32 1.0, %v2776
    %v2778 = vrcp.pop %v2771
    %v2779 = vmul.f32 1.0, %v2778
    %v2780 = vmul.f32 %v2742, %v2773
    %v2781 = vmul.f32 %v2745, %v2775
    %v2782 = vmul.f32 %v2750, %v2777
    %v2783 = vmul.f32 %v2753, %v2779
    %2788 = vrot.lane.b32.xlu0 %v2780, 9
    %v2789 = vpop.permute.xlu0 %2788
    %2790 = vrot.lane.b32.xlu0 %v2781, 9
    %v2791 = vpop.permute.xlu0 %2790
    %2792 = vrot.lane.b32.xlu0 %v2782, 9
    %v2793 = vpop.permute.xlu0 %2792
    %2794 = vrot.lane.b32.xlu0 %v2783, 9
    %v2795 = vpop.permute.xlu0 %2794
    %v2800 = vsel %vm2149, 0.0, %v2789
    %v2801 = vsel %vm2149, 0.0, %v2791
    %v2802 = vsel %vm2149, 0.0, %v2793
    %v2803 = vsel %vm2149, 0.0, %v2795
    %v2804 = vsel %vm2149, %v2789, 0.0
    %v2805 = vsel %vm2149, %v2791, 0.0
    %v2806 = vsel %vm2149, %v2793, 0.0
    %v2807 = vsel %vm2149, %v2795, 0.0
    %v2808 = vld [vmem:[%s13] sm:$0x1]
    %v2810 = vlaneseq
    %v2811 = vshrl.u32 %v2810, 7
    %v2812 = vsub.s32 0, %v2811
    %v2813 = vrot.slane %v2808, %v2812
    %v2815 = vmul.f32 %v2800, %v2813
    %v2816 = vmul.f32 %v2801, %v2813
    %v2817 = vmul.f32 %v2802, %v2813
    %v2818 = vmul.f32 %v2803, %v2813
    %s2819 = scalar_lea.vmem %s13, 1
    %v2820 = vld [vmem:[%s2819] sm:$0x1]
    %v2822 = vlaneseq
    %v2823 = vshrl.u32 %v2822, 7
    %v2824 = vsub.s32 0, %v2823
    %v2825 = vrot.slane %v2820, %v2824
    %2826 = vrot.lane.b32.xlu0 %v2825, 1
    %v2827 = vpop.permute.xlu0 %2826
    %v2829 = vmul.f32 %v2800, %v2827
    %v2830 = vmul.f32 %v2804, %v2827
    %v2831 = vmul.f32 %v2801, %v2827
    %v2832 = vmul.f32 %v2805, %v2827
    %v2833 = vmul.f32 %v2802, %v2827
    %v2834 = vmul.f32 %v2806, %v2827
    %v2835 = vmul.f32 %v2803, %v2827
    %v2836 = vmul.f32 %v2807, %v2827
    %s2837 = scalar_lea.vmem %s13, 2
    %v2838 = vld [vmem:[%s2837] sm:$0x1]
    %v2840 = vlaneseq
    %v2841 = vshrl.u32 %v2840, 7
    %v2842 = vsub.s32 0, %v2841
    %v2843 = vrot.slane %v2838, %v2842
    %2844 = vrot.lane.b32.xlu0 %v2843, 2
    %v2845 = vpop.permute.xlu0 %2844
    %v2847 = vmul.f32 %v2800, %v2845
    %v2848 = vmul.f32 %v2804, %v2845
    %v2849 = vmul.f32 %v2801, %v2845
    %v2850 = vmul.f32 %v2805, %v2845
    %v2851 = vmul.f32 %v2802, %v2845
    %v2852 = vmul.f32 %v2806, %v2845
    %v2853 = vmul.f32 %v2803, %v2845
    %v2854 = vmul.f32 %v2807, %v2845
    %s2855 = scalar_lea.vmem %s13, 3
    %v2856 = vld [vmem:[%s2855] sm:$0x1]
    %v2858 = vlaneseq
    %v2859 = vshrl.u32 %v2858, 7
    %v2860 = vsub.s32 0, %v2859
    %v2861 = vrot.slane %v2856, %v2860
    %2862 = vrot.lane.b32.xlu0 %v2861, 8
    %v2863 = vpop.permute.xlu0 %2862
    %v2865 = vmul.f32 %v2800, %v2863
    %v2866 = vmul.f32 %v2804, %v2863
    %v2867 = vmul.f32 %v2801, %v2863
    %v2868 = vmul.f32 %v2805, %v2863
    %v2869 = vmul.f32 %v2802, %v2863
    %v2870 = vmul.f32 %v2806, %v2863
    %v2871 = vmul.f32 %v2803, %v2863
    %v2872 = vmul.f32 %v2807, %v2863
    %s2873 = scalar_lea.vmem %s13, 4
    %v2874 = vld [vmem:[%s2873] sm:$0x1]
    %v2876 = vlaneseq
    %v2877 = vshrl.u32 %v2876, 7
    %v2878 = vsub.s32 0, %v2877
    %v2879 = vrot.slane %v2874, %v2878
    %2880 = vrot.lane.b32.xlu0 %v2879, 9
    %v2881 = vpop.permute.xlu0 %2880
    %v2883 = vmul.f32 %v2800, %v2881
    %v2884 = vmul.f32 %v2804, %v2881
    %v2885 = vmul.f32 %v2801, %v2881
    %v2886 = vmul.f32 %v2805, %v2881
    %v2887 = vmul.f32 %v2802, %v2881
    %v2888 = vmul.f32 %v2806, %v2881
    %v2889 = vmul.f32 %v2803, %v2881
    %v2890 = vmul.f32 %v2807, %v2881
    %s2891 = scalar_lea.vmem %s13, 5
    %v2892 = vld [vmem:[%s2891] sm:$0x1]
    %v2894 = vlaneseq
    %v2895 = vshrl.u32 %v2894, 7
    %v2896 = vsub.s32 0, %v2895
    %v2897 = vrot.slane %v2892, %v2896
    %2898 = vrot.lane.b32.xlu0 %v2897, 10
    %v2899 = vpop.permute.xlu0 %2898
    %v2901 = vmul.f32 %v2800, %v2899
    %v2902 = vmul.f32 %v2804, %v2899
    %v2903 = vmul.f32 %v2801, %v2899
    %v2904 = vmul.f32 %v2805, %v2899
    %v2905 = vmul.f32 %v2802, %v2899
    %v2906 = vmul.f32 %v2806, %v2899
    %v2907 = vmul.f32 %v2803, %v2899
    %v2908 = vmul.f32 %v2807, %v2899
    %s2909 = scalar_lea.vmem %s13, 6
    %v2910 = vld [vmem:[%s2909] sm:$0x1]
    %v2912 = vlaneseq
    %v2913 = vshrl.u32 %v2912, 7
    %v2914 = vsub.s32 0, %v2913
    %v2915 = vrot.slane %v2910, %v2914
    %2916 = vrot.lane.b32.xlu0 %v2915, 16
    %v2917 = vpop.permute.xlu0 %2916
    %v2919 = vmul.f32 %v2800, %v2917
    %v2920 = vmul.f32 %v2804, %v2917
    %v2921 = vmul.f32 %v2801, %v2917
    %v2922 = vmul.f32 %v2805, %v2917
    %v2923 = vmul.f32 %v2802, %v2917
    %v2924 = vmul.f32 %v2806, %v2917
    %v2925 = vmul.f32 %v2803, %v2917
    %v2926 = vmul.f32 %v2807, %v2917
    %s2927 = scalar_lea.vmem %s13, 7
    %v2928 = vld [vmem:[%s2927] sm:$0x1]
    %v2930 = vlaneseq
    %v2931 = vshrl.u32 %v2930, 7
    %v2932 = vsub.s32 0, %v2931
    %v2933 = vrot.slane %v2928, %v2932
    %2934 = vrot.lane.b32.xlu0 %v2933, 17
    %v2935 = vpop.permute.xlu0 %2934
    %v2937 = vmul.f32 %v2800, %v2935
    %v2938 = vmul.f32 %v2804, %v2935
    %v2939 = vmul.f32 %v2801, %v2935
    %v2940 = vmul.f32 %v2805, %v2935
    %v2941 = vmul.f32 %v2802, %v2935
    %v2942 = vmul.f32 %v2806, %v2935
    %v2943 = vmul.f32 %v2803, %v2935
    %v2944 = vmul.f32 %v2807, %v2935
    %s2945 = scalar_lea.vmem %s13, 8
    %v2946 = vld [vmem:[%s2945] sm:$0x1]
    %v2948 = vlaneseq
    %v2949 = vshrl.u32 %v2948, 7
    %v2950 = vsub.s32 0, %v2949
    %v2951 = vrot.slane %v2946, %v2950
    %2952 = vrot.lane.b32.xlu0 %v2951, 18
    %v2953 = vpop.permute.xlu0 %2952
    %v2955 = vmul.f32 %v2800, %v2953
    %v2956 = vmul.f32 %v2804, %v2953
    %v2957 = vmul.f32 %v2801, %v2953
    %v2958 = vmul.f32 %v2805, %v2953
    %v2959 = vmul.f32 %v2802, %v2953
    %v2960 = vmul.f32 %v2806, %v2953
    %v2961 = vmul.f32 %v2803, %v2953
    %v2962 = vmul.f32 %v2807, %v2953
    %2971 = vrot.lane.b32.xlu0 %v2829, 127
    %v2972 = vpop.permute.xlu0 %2971
    %2973 = vrot.lane.b32.xlu0 %v2830, 127
    %v2974 = vpop.permute.xlu0 %2973
    %2975 = vrot.lane.b32.xlu0 %v2831, 127
    %v2976 = vpop.permute.xlu0 %2975
    %2977 = vrot.lane.b32.xlu0 %v2832, 127
    %v2978 = vpop.permute.xlu0 %2977
    %2979 = vrot.lane.b32.xlu0 %v2833, 127
    %v2980 = vpop.permute.xlu0 %2979
    %2981 = vrot.lane.b32.xlu0 %v2834, 127
    %v2982 = vpop.permute.xlu0 %2981
    %2983 = vrot.lane.b32.xlu0 %v2835, 127
    %v2984 = vpop.permute.xlu0 %2983
    %2985 = vrot.lane.b32.xlu0 %v2836, 127
    %v2986 = vpop.permute.xlu0 %2985
    %v2987 = vsel %vm476, %v2972, %v2974
    %v2988 = vsel %vm476, %v2976, %v2978
    %v2989 = vsel %vm476, %v2980, %v2982
    %v2990 = vsel %vm476, %v2984, %v2986
    %3003 = vrot.lane.b32.xlu0 %v2847, 126
    %v3004 = vpop.permute.xlu0 %3003
    %3005 = vrot.lane.b32.xlu0 %v2848, 126
    %v3006 = vpop.permute.xlu0 %3005
    %3007 = vrot.lane.b32.xlu0 %v2849, 126
    %v3008 = vpop.permute.xlu0 %3007
    %3009 = vrot.lane.b32.xlu0 %v2850, 126
    %v3010 = vpop.permute.xlu0 %3009
    %3011 = vrot.lane.b32.xlu0 %v2851, 126
    %v3012 = vpop.permute.xlu0 %3011
    %3013 = vrot.lane.b32.xlu0 %v2852, 126
    %v3014 = vpop.permute.xlu0 %3013
    %3015 = vrot.lane.b32.xlu0 %v2853, 126
    %v3016 = vpop.permute.xlu0 %3015
    %3017 = vrot.lane.b32.xlu0 %v2854, 126
    %v3018 = vpop.permute.xlu0 %3017
    %v3019 = vsel %vm500, %v3004, %v3006
    %v3020 = vsel %vm500, %v3008, %v3010
    %v3021 = vsel %vm500, %v3012, %v3014
    %v3022 = vsel %vm500, %v3016, %v3018
    %3035 = vrot.lane.b32.xlu0 %v2865, 120
    %v3036 = vpop.permute.xlu0 %3035
    %3037 = vrot.lane.b32.xlu0 %v2866, 120
    %v3038 = vpop.permute.xlu0 %3037
    %3039 = vrot.lane.b32.xlu0 %v2867, 120
    %v3040 = vpop.permute.xlu0 %3039
    %3041 = vrot.lane.b32.xlu0 %v2868, 120
    %v3042 = vpop.permute.xlu0 %3041
    %3043 = vrot.lane.b32.xlu0 %v2869, 120
    %v3044 = vpop.permute.xlu0 %3043
    %3045 = vrot.lane.b32.xlu0 %v2870, 120
    %v3046 = vpop.permute.xlu0 %3045
    %3047 = vrot.lane.b32.xlu0 %v2871, 120
    %v3048 = vpop.permute.xlu0 %3047
    %3049 = vrot.lane.b32.xlu0 %v2872, 120
    %v3050 = vpop.permute.xlu0 %3049
    %v3051 = vsel %vm2401, %v3036, %v3038
    %v3052 = vsel %vm2401, %v3040, %v3042
    %v3053 = vsel %vm2401, %v3044, %v3046
    %v3054 = vsel %vm2401, %v3048, %v3050
    %3067 = vrot.lane.b32.xlu0 %v2883, 119
    %v3068 = vpop.permute.xlu0 %3067
    %3069 = vrot.lane.b32.xlu0 %v2884, 119
    %v3070 = vpop.permute.xlu0 %3069
    %3071 = vrot.lane.b32.xlu0 %v2885, 119
    %v3072 = vpop.permute.xlu0 %3071
    %3073 = vrot.lane.b32.xlu0 %v2886, 119
    %v3074 = vpop.permute.xlu0 %3073
    %3075 = vrot.lane.b32.xlu0 %v2887, 119
    %v3076 = vpop.permute.xlu0 %3075
    %3077 = vrot.lane.b32.xlu0 %v2888, 119
    %v3078 = vpop.permute.xlu0 %3077
    %3079 = vrot.lane.b32.xlu0 %v2889, 119
    %v3080 = vpop.permute.xlu0 %3079
    %3081 = vrot.lane.b32.xlu0 %v2890, 119
    %v3082 = vpop.permute.xlu0 %3081
    %v3083 = vsel %vm2434, %v3068, %v3070
    %v3084 = vsel %vm2434, %v3072, %v3074
    %v3085 = vsel %vm2434, %v3076, %v3078
    %v3086 = vsel %vm2434, %v3080, %v3082
    %3099 = vrot.lane.b32.xlu0 %v2901, 118
    %v3100 = vpop.permute.xlu0 %3099
    %3101 = vrot.lane.b32.xlu0 %v2902, 118
    %v3102 = vpop.permute.xlu0 %3101
    %3103 = vrot.lane.b32.xlu0 %v2903, 118
    %v3104 = vpop.permute.xlu0 %3103
    %3105 = vrot.lane.b32.xlu0 %v2904, 118
    %v3106 = vpop.permute.xlu0 %3105
    %3107 = vrot.lane.b32.xlu0 %v2905, 118
    %v3108 = vpop.permute.xlu0 %3107
    %3109 = vrot.lane.b32.xlu0 %v2906, 118
    %v3110 = vpop.permute.xlu0 %3109
    %3111 = vrot.lane.b32.xlu0 %v2907, 118
    %v3112 = vpop.permute.xlu0 %3111
    %3113 = vrot.lane.b32.xlu0 %v2908, 118
    %v3114 = vpop.permute.xlu0 %3113
    %v3115 = vsel %vm2467, %v3100, %v3102
    %v3116 = vsel %vm2467, %v3104, %v3106
    %v3117 = vsel %vm2467, %v3108, %v3110
    %v3118 = vsel %vm2467, %v3112, %v3114
    %3131 = vrot.lane.b32.xlu0 %v2919, 112
    %v3132 = vpop.permute.xlu0 %3131
    %3133 = vrot.lane.b32.xlu0 %v2920, 112
    %v3134 = vpop.permute.xlu0 %3133
    %3135 = vrot.lane.b32.xlu0 %v2921, 112
    %v3136 = vpop.permute.xlu0 %3135
    %3137 = vrot.lane.b32.xlu0 %v2922, 112
    %v3138 = vpop.permute.xlu0 %3137
    %3139 = vrot.lane.b32.xlu0 %v2923, 112
    %v3140 = vpop.permute.xlu0 %3139
    %3141 = vrot.lane.b32.xlu0 %v2924, 112
    %v3142 = vpop.permute.xlu0 %3141
    %3143 = vrot.lane.b32.xlu0 %v2925, 112
    %v3144 = vpop.permute.xlu0 %3143
    %3145 = vrot.lane.b32.xlu0 %v2926, 112
    %v3146 = vpop.permute.xlu0 %3145
    %v3147 = vsel %vm529, %v3132, %v3134
    %v3148 = vsel %vm529, %v3136, %v3138
    %v3149 = vsel %vm529, %v3140, %v3142
    %v3150 = vsel %vm529, %v3144, %v3146
    %3163 = vrot.lane.b32.xlu0 %v2937, 111
    %v3164 = vpop.permute.xlu0 %3163
    %3165 = vrot.lane.b32.xlu0 %v2938, 111
    %v3166 = vpop.permute.xlu0 %3165
    %3167 = vrot.lane.b32.xlu0 %v2939, 111
    %v3168 = vpop.permute.xlu0 %3167
    %3169 = vrot.lane.b32.xlu0 %v2940, 111
    %v3170 = vpop.permute.xlu0 %3169
    %3171 = vrot.lane.b32.xlu0 %v2941, 111
    %v3172 = vpop.permute.xlu0 %3171
    %3173 = vrot.lane.b32.xlu0 %v2942, 111
    %v3174 = vpop.permute.xlu0 %3173
    %3175 = vrot.lane.b32.xlu0 %v2943, 111
    %v3176 = vpop.permute.xlu0 %3175
    %3177 = vrot.lane.b32.xlu0 %v2944, 111
    %v3178 = vpop.permute.xlu0 %3177
    %v3179 = vsel %vm553, %v3164, %v3166
    %v3180 = vsel %vm553, %v3168, %v3170
    %v3181 = vsel %vm553, %v3172, %v3174
    %v3182 = vsel %vm553, %v3176, %v3178
    %3195 = vrot.lane.b32.xlu0 %v2955, 110
    %v3196 = vpop.permute.xlu0 %3195
    %3197 = vrot.lane.b32.xlu0 %v2956, 110
    %v3198 = vpop.permute.xlu0 %3197
    %3199 = vrot.lane.b32.xlu0 %v2957, 110
    %v3200 = vpop.permute.xlu0 %3199
    %3201 = vrot.lane.b32.xlu0 %v2958, 110
    %v3202 = vpop.permute.xlu0 %3201
    %3203 = vrot.lane.b32.xlu0 %v2959, 110
    %v3204 = vpop.permute.xlu0 %3203
    %3205 = vrot.lane.b32.xlu0 %v2960, 110
    %v3206 = vpop.permute.xlu0 %3205
    %3207 = vrot.lane.b32.xlu0 %v2961, 110
    %v3208 = vpop.permute.xlu0 %3207
    %3209 = vrot.lane.b32.xlu0 %v2962, 110
    %v3210 = vpop.permute.xlu0 %3209
    %v3211 = vsel %vm582, %v3196, %v3198
    %v3212 = vsel %vm582, %v3200, %v3202
    %v3213 = vsel %vm582, %v3204, %v3206
    %v3214 = vsel %vm582, %v3208, %v3210
    %v3219 = vpack.c.bf16 %v2816, %v2815
    %v3220 = vpack.c.bf16 %v2818, %v2817
    %v3221 = vpack.c.bf16 %v2988, %v2987
    %v3222 = vpack.c.bf16 %v2990, %v2989
    %v3223 = vpack.c.bf16 %v3020, %v3019
    %v3224 = vpack.c.bf16 %v3022, %v3021
    %v3225 = vpack.c.bf16 %v3052, %v3051
    %v3226 = vpack.c.bf16 %v3054, %v3053
    %v3227 = vpack.c.bf16 %v3084, %v3083
    %v3228 = vpack.c.bf16 %v3086, %v3085
    %v3229 = vpack.c.bf16 %v3116, %v3115
    %v3230 = vpack.c.bf16 %v3118, %v3117
    %v3231 = vpack.c.bf16 %v3148, %v3147
    %v3232 = vpack.c.bf16 %v3150, %v3149
    %v3233 = vpack.c.bf16 %v3180, %v3179
    %v3234 = vpack.c.bf16 %v3182, %v3181
    %v3235 = vpack.c.bf16 %v3212, %v3211
    %v3236 = vpack.c.bf16 %v3214, %v3213
    %v3237 = vld [vmem:[%s11] sm:$0xff]
    %v3238 = vld [vmem:[%s11 + $0x8] sm:$0xf]
    %v3239 = vld [vmem:[%s11 + $0xc] sm:$0xff]
    %v3240 = vld [vmem:[%s11 + $0x14] sm:$0xf]
    %v3241 = vld [vmem:[%s11 + $0x18] sm:$0xff]
    %v3242 = vld [vmem:[%s11 + $0x20] sm:$0xf]
    %v3243 = vld [vmem:[%s11 + $0x24] sm:$0xff]
    %v3244 = vld [vmem:[%s11 + $0x2c] sm:$0xf]
    %v3245 = vld [vmem:[%s11 + $0x30] sm:$0xff]
    %v3246 = vld [vmem:[%s11 + $0x38] sm:$0xf]
    %v3247 = vld [vmem:[%s11 + $0x3c] sm:$0xff]
    %v3248 = vld [vmem:[%s11 + $0x44] sm:$0xf]
    %v3249 = vld [vmem:[%s11 + $0x48] sm:$0xff]
    %v3250 = vld [vmem:[%s11 + $0x50] sm:$0xf]
    %v3251 = vld [vmem:[%s11 + $0x54] sm:$0xff]
    %v3252 = vld [vmem:[%s11 + $0x5c] sm:$0xf]
    %v3269 = vunpack.c.l.b16 %v3237
    %v3270 = vunpack.c.h.b16 %v3237
    %v3271 = vunpack.c.l.b16 %v3238
    %v3272 = vunpack.c.l.b16 %v3239
    %v3273 = vunpack.c.h.b16 %v3239
    %v3274 = vunpack.c.l.b16 %v3240
    %v3275 = vunpack.c.l.b16 %v3241
    %v3276 = vunpack.c.h.b16 %v3241
    %v3277 = vunpack.c.l.b16 %v3242
    %v3278 = vunpack.c.l.b16 %v3243
    %v3279 = vunpack.c.h.b16 %v3243
    %v3280 = vunpack.c.l.b16 %v3244
    %v3281 = vunpack.c.l.b16 %v3245
    %v3282 = vunpack.c.h.b16 %v3245
    %v3283 = vunpack.c.l.b16 %v3246
    %v3284 = vunpack.c.l.b16 %v3247
    %v3285 = vunpack.c.h.b16 %v3247
    %v3286 = vunpack.c.l.b16 %v3248
    %v3287 = vunpack.c.l.b16 %v3249
    %v3288 = vunpack.c.h.b16 %v3249
    %v3289 = vunpack.c.l.b16 %v3250
    %v3290 = vunpack.c.l.b16 %v3251
    %v3291 = vunpack.c.h.b16 %v3251
    %v3292 = vunpack.c.l.b16 %v3252
    %v3293 = vpack.c.b16 %v3272, %v3269
    %v3294 = vpack.c.b16 %v3273, %v3270
    %v3295 = vpack.c.b16 %v3274, %v3271
    %v3296 = vpack.c.b16 %v3278, %v3275
    %v3297 = vpack.c.b16 %v3279, %v3276
    %v3298 = vpack.c.b16 %v3280, %v3277
    %v3299 = vpack.c.b16 %v3284, %v3281
    %v3300 = vpack.c.b16 %v3285, %v3282
    %v3301 = vpack.c.b16 %v3286, %v3283
    %v3302 = vpack.c.b16 %v3290, %v3287
    %v3303 = vpack.c.b16 %v3291, %v3288
    %v3304 = vpack.c.b16 %v3292, %v3289
    %v3314 = vsel %vm360, %v3295, 0
    %v3317 = vsel %vm360, %v3298, 0
    %v3320 = vsel %vm360, %v3301, 0
    %v3323 = vsel %vm360, %v3304, 0
    %3325 = vmatprep.subr.bf16.mxu0 0
    %3326 = vmatpush1.bf16.msra.mxu0 %v3226
    %3327 = vmatprep.subr.bf16.mxu0 0
    %3328 = vmatpush1.bf16.msra.mxu0 %v3225
    %3329 = vmatprep.subr.bf16.mxu0 0
    %3330 = vmatpush1.bf16.msra.mxu0 %v3224
    %3331 = vmatprep.subr.bf16.mxu0 0
    %3332 = vmatpush1.bf16.msra.mxu0 %v3223
    %3333 = vmatprep.subr.bf16.mxu0 0
    %3334 = vmatpush1.bf16.msra.mxu0 %v3222
    %3335 = vmatprep.subr.bf16.mxu0 0
    %3336 = vmatpush1.bf16.msra.mxu0 %v3221
    %3337 = vmatprep.subr.bf16.mxu0 0
    %3338 = vmatpush1.bf16.msra.mxu0 %v3220
    %3339 = vmatprep.subr.bf16.mxu0 0
    %3340 = vmatpush1.bf16.msra.mxu0 %v3219
    %3341 = vmatprep.subr.bf16.mxu0 0
    %3342 = vmatpush2.bf16.msra.mxu0 %v3234
    %3343 = vmatprep.subr.bf16.mxu0 0
    %3344 = vmatpush2.bf16.msra.mxu0 %v3233
    %3345 = vmatprep.subr.bf16.mxu0 0
    %3346 = vmatpush2.bf16.msra.mxu0 %v3232
    %3347 = vmatprep.subr.bf16.mxu0 0
    %3348 = vmatpush2.bf16.msra.mxu0 %v3231
    %3349 = vmatprep.subr.bf16.mxu0 0
    %3350 = vmatpush2.bf16.msra.mxu0 %v3230
    %3351 = vmatprep.subr.bf16.mxu0 0
    %3352 = vmatpush2.bf16.msra.mxu0 %v3229
    %3353 = vmatprep.subr.bf16.mxu0 0
    %3354 = vmatpush2.bf16.msra.mxu0 %v3228
    %3355 = vmatprep.subr.bf16.mxu0 0
    %3356 = vmatpush2.bf16.msra.mxu0 %v3227
    %3357 = vmatprep.mubr.bf16.mxu0 %v3294
    %3358 = vmatmul.mubr.bf16.gmra.mxu0 %v3293
    %v3359 = vpop.f32.mrf.mxu0
    %v3360 = vadd.f32 0.0, %v3359
    %v3361 = vpop.f32.mrf.mxu0
    %v3362 = vpop.f32.mrf.mxu0
    %v3363 = vadd.f32 0.0, %v3362
    %v3364 = vpop.f32.mrf.mxu0
    %3365 = vmatprep.mubr.bf16.mxu0 %v3297
    %3366 = vmatmul.mubr.bf16.gmra.mxu0 %v3296
    %v3367 = vpop.f32.mrf.mxu0
    %v3368 = vadd.f32 0.0, %v3367
    %v3369 = vpop.f32.mrf.mxu0
    %v3370 = vpop.f32.mrf.mxu0
    %v3371 = vadd.f32 0.0, %v3370
    %v3372 = vpop.f32.mrf.mxu0
    %3373 = vmatprep.mubr.bf16.mxu0 %v3300
    %3374 = vmatmul.mubr.bf16.gmra.mxu0 %v3299
    %v3375 = vpop.f32.mrf.mxu0
    %v3376 = vadd.f32 0.0, %v3375
    %v3377 = vpop.f32.mrf.mxu0
    %v3378 = vpop.f32.mrf.mxu0
    %v3379 = vadd.f32 0.0, %v3378
    %v3380 = vpop.f32.mrf.mxu0
    %3381 = vmatprep.mubr.bf16.mxu0 %v3303
    %3382 = vmatmul.mubr.bf16.gmra.mxu0 %v3302
    %v3383 = vpop.f32.mrf.mxu0
    %v3384 = vadd.f32 0.0, %v3383
    %v3385 = vpop.f32.mrf.mxu0
    %v3386 = vpop.f32.mrf.mxu0
    %v3387 = vadd.f32 0.0, %v3386
    %v3388 = vpop.f32.mrf.mxu0
    %3389 = vdwg.mxu0
    %3390 = vmatprep.subr.bf16.mxu0 0
    %3391 = vmatpush1.bf16.msra.mxu0 0
    %3392 = vmatprep.subr.bf16.mxu0 0
    %3393 = vmatpush1.bf16.msra.mxu0 0
    %3394 = vmatprep.subr.bf16.mxu0 0
    %3395 = vmatpush1.bf16.msra.mxu0 0
    %3396 = vmatprep.subr.bf16.mxu0 0
    %3397 = vmatpush1.bf16.msra.mxu0 0
    %3398 = vmatprep.subr.bf16.mxu0 0
    %3399 = vmatpush1.bf16.msra.mxu0 0
    %3400 = vmatprep.subr.bf16.mxu0 0
    %3401 = vmatpush1.bf16.msra.mxu0 0
    %3402 = vmatprep.subr.bf16.mxu0 0
    %3403 = vmatpush1.bf16.msra.mxu0 %v3236
    %3404 = vmatprep.subr.bf16.mxu0 0
    %3405 = vmatpush1.bf16.msra.mxu0 %v3235
    %3406 = vmatprep.subr.bf16.mxu0 0
    %3407 = vmatpush2.bf16.msra.mxu0 0
    %3408 = vmatprep.subr.bf16.mxu0 0
    %3409 = vmatpush2.bf16.msra.mxu0 0
    %3410 = vmatprep.subr.bf16.mxu0 0
    %3411 = vmatpush2.bf16.msra.mxu0 0
    %3412 = vmatprep.subr.bf16.mxu0 0
    %3413 = vmatpush2.bf16.msra.mxu0 0
    %3414 = vmatprep.subr.bf16.mxu0 0
    %3415 = vmatpush2.bf16.msra.mxu0 0
    %3416 = vmatprep.subr.bf16.mxu0 0
    %3417 = vmatpush2.bf16.msra.mxu0 0
    %3418 = vmatprep.subr.bf16.mxu0 0
    %3419 = vmatpush2.bf16.msra.mxu0 0
    %3420 = vmatprep.subr.bf16.mxu0 0
    %3421 = vmatpush2.bf16.msra.mxu0 0
    %3422 = vmatprep.mubr.bf16.mxu0 0
    %3423 = vmatmul.mubr.bf16.gmra.mxu0 %v3314
    %v3424 = vpop.f32.mrf.mxu0
    %v3425 = vadd.f32 %v3360, %v3424
    %v3426 = vpop.f32.mrf.mxu0
    %v3427 = vpop.f32.mrf.mxu0
    %v3428 = vadd.f32 %v3363, %v3427
    %v3429 = vpop.f32.mrf.mxu0
    %3430 = vmatprep.mubr.bf16.mxu0 0
    %3431 = vmatmul.mubr.bf16.gmra.mxu0 %v3317
    %v3432 = vpop.f32.mrf.mxu0
    %v3433 = vadd.f32 %v3368, %v3432
    %v3434 = vpop.f32.mrf.mxu0
    %v3435 = vpop.f32.mrf.mxu0
    %v3436 = vadd.f32 %v3371, %v3435
    %v3437 = vpop.f32.mrf.mxu0
    %3438 = vmatprep.mubr.bf16.mxu0 0
    %3439 = vmatmul.mubr.bf16.gmra.mxu0 %v3320
    %v3440 = vpop.f32.mrf.mxu0
    %v3441 = vadd.f32 %v3376, %v3440
    %v3442 = vpop.f32.mrf.mxu0
    %v3443 = vpop.f32.mrf.mxu0
    %v3444 = vadd.f32 %v3379, %v3443
    %v3445 = vpop.f32.mrf.mxu0
    %3446 = vmatprep.mubr.bf16.mxu0 0
    %3447 = vmatmul.mubr.bf16.gmra.mxu0 %v3323
    %v3448 = vpop.f32.mrf.mxu0
    %v3449 = vadd.f32 %v3384, %v3448
    %v3450 = vpop.f32.mrf.mxu0
    %v3451 = vpop.f32.mrf.mxu0
    %v3452 = vadd.f32 %v3387, %v3451
    %v3453 = vpop.f32.mrf.mxu0
    %3454 = vdwg.mxu0
    %v3455 = vld [vmem:[%s14] sm:$0xff]
    %v3456 = vld [vmem:[%s14 + $0x8] sm:$0xff]
    %v3457 = vld [vmem:[%s14 + $0x10] sm:$0xff]
    %v3458 = vld [vmem:[%s14 + $0x18] sm:$0xff]
    %v3459 = vld [vmem:[%s14 + $0x20] sm:$0xff]
    %v3460 = vld [vmem:[%s14 + $0x28] sm:$0xff]
    %v3461 = vld [vmem:[%s14 + $0x30] sm:$0xff]
    %v3462 = vld [vmem:[%s14 + $0x38] sm:$0xff]
    %v3463 = vld [vmem:[%s14 + $0x40] sm:$0xff]
    %v3464 = vld [vmem:[%s14 + $0x48] sm:$0xff]
    %v3465 = vld [vmem:[%s14 + $0x50] sm:$0xff]
    %v3466 = vld [vmem:[%s14 + $0x58] sm:$0xff]
    %v3467 = vld [vmem:[%s14 + $0x60] sm:$0xff]
    %v3468 = vld [vmem:[%s14 + $0x68] sm:$0xff]
    %v3469 = vld [vmem:[%s14 + $0x70] sm:$0xff]
    %v3470 = vld [vmem:[%s14 + $0x78] sm:$0xff]
    %v3471 = vld [vmem:[%s12] sm:$0xff]
    %v3472 = vld [vmem:[%s12 + $0x8] sm:$0xff]
    %v3473 = vld [vmem:[%s12 + $0x10] sm:$0xff]
    %v3474 = vld [vmem:[%s12 + $0x18] sm:$0xff]
    %v3475 = vld [vmem:[%s12 + $0x20] sm:$0xff]
    %v3476 = vld [vmem:[%s12 + $0x28] sm:$0xff]
    %v3477 = vld [vmem:[%s12 + $0x30] sm:$0xff]
    %v3478 = vld [vmem:[%s12 + $0x38] sm:$0xff]
    %3480 = vset.pattern.permute.xlu0 0
    %3481 = vperm.xlu0 %3480, %v3471
    %v3482 = vpop.permute.xlu0 %3481
    %3485 = vset.pattern.permute.xlu0 0
    %3486 = vperm.xlu0 %3485, %v3472
    %v3487 = vpop.permute.xlu0 %3486
    %3490 = vset.pattern.permute.xlu0 0
    %3491 = vperm.xlu0 %3490, %v3473
    %v3492 = vpop.permute.xlu0 %3491
    %3495 = vset.pattern.permute.xlu0 0
    %3496 = vperm.xlu0 %3495, %v3474
    %v3497 = vpop.permute.xlu0 %3496
    %3500 = vset.pattern.permute.xlu0 0
    %3501 = vperm.xlu0 %3500, %v3475
    %v3502 = vpop.permute.xlu0 %3501
    %3505 = vset.pattern.permute.xlu0 0
    %3506 = vperm.xlu0 %3505, %v3476
    %v3507 = vpop.permute.xlu0 %3506
    %3510 = vset.pattern.permute.xlu0 0
    %3511 = vperm.xlu0 %3510, %v3477
    %v3512 = vpop.permute.xlu0 %3511
    %3515 = vset.pattern.permute.xlu0 0
    %3516 = vperm.xlu0 %3515, %v3478
    %v3517 = vpop.permute.xlu0 %3516
    %3519 = vmatprep.subr.mxu0 0.0
    %3520 = vmatpush1.msra.mxu0 %v3470
    %3521 = vmatprep.subr.mxu0 0.0
    %3522 = vmatpush1.msra.mxu0 %v3469
    %3523 = vmatprep.subr.mxu0 0.0
    %3524 = vmatpush1.msra.mxu0 %v3468
    %3525 = vmatprep.subr.mxu0 0.0
    %3526 = vmatpush1.msra.mxu0 %v3467
    %3527 = vmatprep.subr.mxu0 0.0
    %3528 = vmatpush1.msra.mxu0 %v3466
    %3529 = vmatprep.subr.mxu0 0.0
    %3530 = vmatpush1.msra.mxu0 %v3465
    %3531 = vmatprep.subr.mxu0 0.0
    %3532 = vmatpush1.msra.mxu0 %v3464
    %3533 = vmatprep.subr.mxu0 0.0
    %3534 = vmatpush1.msra.mxu0 %v3463
    %3535 = vmatprep.subr.mxu0 0.0
    %3536 = vmatpush1.msra.mxu0 %v3462
    %3537 = vmatprep.subr.mxu0 0.0
    %3538 = vmatpush1.msra.mxu0 %v3461
    %3539 = vmatprep.subr.mxu0 0.0
    %3540 = vmatpush1.msra.mxu0 %v3460
    %3541 = vmatprep.subr.mxu0 0.0
    %3542 = vmatpush1.msra.mxu0 %v3459
    %3543 = vmatprep.subr.mxu0 0.0
    %3544 = vmatpush1.msra.mxu0 %v3458
    %3545 = vmatprep.subr.mxu0 0.0
    %3546 = vmatpush1.msra.mxu0 %v3457
    %3547 = vmatprep.subr.mxu0 0.0
    %3548 = vmatpush1.msra.mxu0 %v3456
    %3549 = vmatprep.subr.mxu0 0.0
    %3550 = vmatpush1.msra.mxu0 %v3455
    %3551 = vmatprep.subr.mxu0 0.0
    %3552 = vmatpush2.msra.mxu0 0.0
    %3553 = vmatprep.subr.mxu0 0.0
    %3554 = vmatpush2.msra.mxu0 0.0
    %3555 = vmatprep.subr.mxu0 0.0
    %3556 = vmatpush2.msra.mxu0 0.0
    %3557 = vmatprep.subr.mxu0 0.0
    %3558 = vmatpush2.msra.mxu0 0.0
    %3559 = vmatprep.subr.mxu0 0.0
    %3560 = vmatpush2.msra.mxu0 0.0
    %3561 = vmatprep.subr.mxu0 0.0
    %3562 = vmatpush2.msra.mxu0 0.0
    %3563 = vmatprep.subr.mxu0 0.0
    %3564 = vmatpush2.msra.mxu0 0.0
    %3565 = vmatprep.subr.mxu0 0.0
    %3566 = vmatpush2.msra.mxu0 0.0
    %3567 = vmatprep.subr.mxu0 0.0
    %3568 = vmatpush2.msra.mxu0 0.0
    %3569 = vmatprep.subr.mxu0 0.0
    %3570 = vmatpush2.msra.mxu0 0.0
    %3571 = vmatprep.subr.mxu0 0.0
    %3572 = vmatpush2.msra.mxu0 0.0
    %3573 = vmatprep.subr.mxu0 0.0
    %3574 = vmatpush2.msra.mxu0 0.0
    %3575 = vmatprep.subr.mxu0 0.0
    %3576 = vmatpush2.msra.mxu0 0.0
    %3577 = vmatprep.subr.mxu0 0.0
    %3578 = vmatpush2.msra.mxu0 0.0
    %3579 = vmatprep.subr.mxu0 0.0
    %3580 = vmatpush2.msra.mxu0 0.0
    %3581 = vmatprep.subr.mxu0 0.0
    %3582 = vmatpush2.msra.mxu0 0.0
    %3583 = vmatprep.mubr.f32.mxu0 0.0
    %3584 = vmatmul.mubr.f32.gmra.mxu0 %v3425
    %v3585 = vpop.f32.mrf.mxu0
    %v3586 = vadd.f32 %v3482, %v3585
    %v3587 = vpop.f32.mrf.mxu0
    %3588 = vmatprep.mubr.f32.mxu0 0.0
    %3589 = vmatmul.mubr.f32.gmra.mxu0 %v3428
    %v3590 = vpop.f32.mrf.mxu0
    %v3591 = vadd.f32 %v3487, %v3590
    %v3592 = vpop.f32.mrf.mxu0
    %3593 = vmatprep.mubr.f32.mxu0 0.0
    %3594 = vmatmul.mubr.f32.gmra.mxu0 %v3433
    %v3595 = vpop.f32.mrf.mxu0
    %v3596 = vadd.f32 %v3492, %v3595
    %v3597 = vpop.f32.mrf.mxu0
    %3598 = vmatprep.mubr.f32.mxu0 0.0
    %3599 = vmatmul.mubr.f32.gmra.mxu0 %v3436
    %v3600 = vpop.f32.mrf.mxu0
    %v3601 = vadd.f32 %v3497, %v3600
    %v3602 = vpop.f32.mrf.mxu0
    %3603 = vmatprep.mubr.f32.mxu0 0.0
    %3604 = vmatmul.mubr.f32.gmra.mxu0 %v3441
    %v3605 = vpop.f32.mrf.mxu0
    %v3606 = vadd.f32 %v3502, %v3605
    %v3607 = vpop.f32.mrf.mxu0
    %3608 = vmatprep.mubr.f32.mxu0 0.0
    %3609 = vmatmul.mubr.f32.gmra.mxu0 %v3444
    %v3610 = vpop.f32.mrf.mxu0
    %v3611 = vadd.f32 %v3507, %v3610
    %v3612 = vpop.f32.mrf.mxu0
    %3613 = vmatprep.mubr.f32.mxu0 0.0
    %3614 = vmatmul.mubr.f32.gmra.mxu0 %v3449
    %v3615 = vpop.f32.mrf.mxu0
    %v3616 = vadd.f32 %v3512, %v3615
    %v3617 = vpop.f32.mrf.mxu0
    %3618 = vmatprep.mubr.f32.mxu0 0.0
    %3619 = vmatmul.mubr.f32.gmra.mxu0 %v3452
    %v3620 = vpop.f32.mrf.mxu0
    %v3621 = vadd.f32 %v3517, %v3620
    %v3622 = vpop.f32.mrf.mxu0
    %3623 = vdwg.mxu0
    %v3624 = vxor.u32 %v3586, 2147483648
    %v3625 = vxor.u32 %v3591, 2147483648
    %v3626 = vxor.u32 %v3596, 2147483648
    %v3627 = vxor.u32 %v3601, 2147483648
    %v3628 = vxor.u32 %v3606, 2147483648
    %v3629 = vxor.u32 %v3611, 2147483648
    %v3630 = vxor.u32 %v3616, 2147483648
    %v3631 = vxor.u32 %v3621, 2147483648
    %v3632 = vmul.f32 %v3624, 1.442695
    %v3633 = vpow.pop %v3632
    %v3634 = vmul.f32 %v3625, 1.442695
    %v3635 = vpow.pop %v3634
    %v3636 = vmul.f32 %v3626, 1.442695
    %v3637 = vpow.pop %v3636
    %v3638 = vmul.f32 %v3627, 1.442695
    %v3639 = vpow.pop %v3638
    %v3640 = vmul.f32 %v3628, 1.442695
    %v3641 = vpow.pop %v3640
    %v3642 = vmul.f32 %v3629, 1.442695
    %v3643 = vpow.pop %v3642
    %v3644 = vmul.f32 %v3630, 1.442695
    %v3645 = vpow.pop %v3644
    %v3646 = vmul.f32 %v3631, 1.442695
    %v3647 = vpow.pop %v3646
    %v3648 = vadd.f32 %v3633, 1.0
    %v3649 = vadd.f32 %v3635, 1.0
    %v3650 = vadd.f32 %v3637, 1.0
    %v3651 = vadd.f32 %v3639, 1.0
    %v3652 = vadd.f32 %v3641, 1.0
    %v3653 = vadd.f32 %v3643, 1.0
    %v3654 = vadd.f32 %v3645, 1.0
    %v3655 = vadd.f32 %v3647, 1.0
    %v3656 = vrcp.pop %v3648
    %v3657 = vmul.f32 1.0, %v3656
    %v3658 = vrcp.pop %v3649
    %v3659 = vmul.f32 1.0, %v3658
    %v3660 = vrcp.pop %v3650
    %v3661 = vmul.f32 1.0, %v3660
    %v3662 = vrcp.pop %v3651
    %v3663 = vmul.f32 1.0, %v3662
    %v3664 = vrcp.pop %v3652
    %v3665 = vmul.f32 1.0, %v3664
    %v3666 = vrcp.pop %v3653
    %v3667 = vmul.f32 1.0, %v3666
    %v3668 = vrcp.pop %v3654
    %v3669 = vmul.f32 1.0, %v3668
    %v3670 = vrcp.pop %v3655
    %v3671 = vmul.f32 1.0, %v3670
    %v3672 = vmul.f32 %v3586, %v3657
    %v3673 = vmul.f32 %v3591, %v3659
    %v3674 = vmul.f32 %v3596, %v3661
    %v3675 = vmul.f32 %v3601, %v3663
    %v3676 = vmul.f32 %v3606, %v3665
    %v3677 = vmul.f32 %v3611, %v3667
    %v3678 = vmul.f32 %v3616, %v3669
    %v3679 = vmul.f32 %v3621, %v3671
    %3680 = vxpose.xlu0.b32.start [1/16] %v2129, 128
    %3681 = vxpose.xlu0.b32.cont [2/16] %v2130, 128
    %3682 = vxpose.xlu0.b32.cont [3/16] %v2131, 128
    %3683 = vxpose.xlu0.b32.cont [4/16] %v2132, 128
    %3684 = vxpose.xlu0.b32.cont [5/16] 0.0, 128
    %3685 = vxpose.xlu0.b32.cont [6/16] 0.0, 128
    %3686 = vxpose.xlu0.b32.cont [7/16] 0.0, 128
    %3687 = vxpose.xlu0.b32.cont [8/16] 0.0, 128
    %3688 = vxpose.xlu0.b32.cont [9/16] 0.0, 128
    %3689 = vxpose.xlu0.b32.cont [10/16] 0.0, 128
    %3690 = vxpose.xlu0.b32.cont [11/16] 0.0, 128
    %3691 = vxpose.xlu0.b32.cont [12/16] 0.0, 128
    %3692 = vxpose.xlu0.b32.cont [13/16] 0.0, 128
    %3693 = vxpose.xlu0.b32.cont [14/16] 0.0, 128
    %3694 = vxpose.xlu0.b32.cont [15/16] 0.0, 128
    %3695 = vxpose.xlu0.b32.end [16/16] 0.0, 128
    %v3696 = vpop.trf.xlu0
    %v3697 = vpop.trf.xlu0
    %v3698 = vpop.trf.xlu0
    %v3699 = vpop.trf.xlu0
    %v3700 = vpop.trf.xlu0
    %v3701 = vpop.trf.xlu0
    %v3702 = vpop.trf.xlu0
    %v3703 = vpop.trf.xlu0
    %v3704 = vpop.trf.xlu0
    %v3705 = vpop.trf.xlu0
    %v3706 = vpop.trf.xlu0
    %v3707 = vpop.trf.xlu0
    %v3708 = vpop.trf.xlu0
    %v3709 = vpop.trf.xlu0
    %v3710 = vpop.trf.xlu0
    %v3711 = vpop.trf.xlu0
    %v3712 = vld [vmem:[%s15] sm:$0xff]
    %v3713 = vld [vmem:[%s15 + $0x8] sm:$0xff]
    %v3714 = vld [vmem:[%s15 + $0x10] sm:$0xff]
    %v3715 = vld [vmem:[%s15 + $0x18] sm:$0xff]
    %v3716 = vld [vmem:[%s16] sm:$0x1]
    %v3718 = vlaneseq
    %v3719 = vshrl.u32 %v3718, 7
    %v3720 = vsub.s32 0, %v3719
    %v3721 = vrot.slane %v3716, %v3720
    %v3724 = vsel %vm360, %v3696, 0
    %v3727 = vsel %vm360, %v3697, 0
    %v3730 = vsel %vm360, %v3698, 0
    %v3733 = vsel %vm360, %v3699, 0
    %v3736 = vsel %vm360, %v3700, 0
    %v3739 = vsel %vm360, %v3701, 0
    %v3742 = vsel %vm360, %v3702, 0
    %v3745 = vsel %vm360, %v3703, 0
    %v3748 = vsel %vm360, %v3704, 0
    %v3751 = vsel %vm360, %v3705, 0
    %v3754 = vsel %vm360, %v3706, 0
    %v3757 = vsel %vm360, %v3707, 0
    %v3760 = vsel %vm360, %v3708, 0
    %v3763 = vsel %vm360, %v3709, 0
    %v3766 = vsel %vm360, %v3710, 0
    %v3769 = vsel %vm360, %v3711, 0
    %3771 = vmatprep.subr.mxu0 0.0
    %3772 = vmatpush1.msra.mxu0 0.0
    %3773 = vmatprep.subr.mxu0 0.0
    %3774 = vmatpush1.msra.mxu0 0.0
    %3775 = vmatprep.subr.mxu0 0.0
    %3776 = vmatpush1.msra.mxu0 0.0
    %3777 = vmatprep.subr.mxu0 0.0
    %3778 = vmatpush1.msra.mxu0 0.0
    %3779 = vmatprep.subr.mxu0 0.0
    %3780 = vmatpush1.msra.mxu0 0.0
    %3781 = vmatprep.subr.mxu0 0.0
    %3782 = vmatpush1.msra.mxu0 0.0
    %3783 = vmatprep.subr.mxu0 0.0
    %3784 = vmatpush1.msra.mxu0 0.0
    %3785 = vmatprep.subr.mxu0 0.0
    %3786 = vmatpush1.msra.mxu0 0.0
    %3787 = vmatprep.subr.mxu0 0.0
    %3788 = vmatpush1.msra.mxu0 0.0
    %3789 = vmatprep.subr.mxu0 0.0
    %3790 = vmatpush1.msra.mxu0 0.0
    %3791 = vmatprep.subr.mxu0 0.0
    %3792 = vmatpush1.msra.mxu0 0.0
    %3793 = vmatprep.subr.mxu0 0.0
    %3794 = vmatpush1.msra.mxu0 0.0
    %3795 = vmatprep.subr.mxu0 0.0
    %3796 = vmatpush1.msra.mxu0 %v3715
    %3797 = vmatprep.subr.mxu0 0.0
    %3798 = vmatpush1.msra.mxu0 %v3714
    %3799 = vmatprep.subr.mxu0 0.0
    %3800 = vmatpush1.msra.mxu0 %v3713
    %3801 = vmatprep.subr.mxu0 0.0
    %3802 = vmatpush1.msra.mxu0 %v3712
    %3803 = vmatprep.subr.mxu0 0.0
    %3804 = vmatpush2.msra.mxu0 0.0
    %3805 = vmatprep.subr.mxu0 0.0
    %3806 = vmatpush2.msra.mxu0 0.0
    %3807 = vmatprep.subr.mxu0 0.0
    %3808 = vmatpush2.msra.mxu0 0.0
    %3809 = vmatprep.subr.mxu0 0.0
    %3810 = vmatpush2.msra.mxu0 0.0
    %3811 = vmatprep.subr.mxu0 0.0
    %3812 = vmatpush2.msra.mxu0 0.0
    %3813 = vmatprep.subr.mxu0 0.0
    %3814 = vmatpush2.msra.mxu0 0.0
    %3815 = vmatprep.subr.mxu0 0.0
    %3816 = vmatpush2.msra.mxu0 0.0
    %3817 = vmatprep.subr.mxu0 0.0
    %3818 = vmatpush2.msra.mxu0 0.0
    %3819 = vmatprep.subr.mxu0 0.0
    %3820 = vmatpush2.msra.mxu0 0.0
    %3821 = vmatprep.subr.mxu0 0.0
    %3822 = vmatpush2.msra.mxu0 0.0
    %3823 = vmatprep.subr.mxu0 0.0
    %3824 = vmatpush2.msra.mxu0 0.0
    %3825 = vmatprep.subr.mxu0 0.0
    %3826 = vmatpush2.msra.mxu0 0.0
    %3827 = vmatprep.subr.mxu0 0.0
    %3828 = vmatpush2.msra.mxu0 0.0
    %3829 = vmatprep.subr.mxu0 0.0
    %3830 = vmatpush2.msra.mxu0 0.0
    %3831 = vmatprep.subr.mxu0 0.0
    %3832 = vmatpush2.msra.mxu0 0.0
    %3833 = vmatprep.subr.mxu0 0.0
    %3834 = vmatpush2.msra.mxu0 0.0
    %3835 = vmatprep.mubr.f32.mxu0 0.0
    %3836 = vmatmul.mubr.f32.gmra.mxu0 %v3724
    %v3837 = vpop.f32.mrf.mxu0
    %v3838 = vadd.f32 %v3721, %v3837
    %v3839 = vpop.f32.mrf.mxu0
    %3840 = vmatprep.mubr.f32.mxu0 0.0
    %3841 = vmatmul.mubr.f32.gmra.mxu0 %v3727
    %v3842 = vpop.f32.mrf.mxu0
    %v3843 = vadd.f32 %v3721, %v3842
    %v3844 = vpop.f32.mrf.mxu0
    %3845 = vmatprep.mubr.f32.mxu0 0.0
    %3846 = vmatmul.mubr.f32.gmra.mxu0 %v3730
    %v3847 = vpop.f32.mrf.mxu0
    %v3848 = vadd.f32 %v3721, %v3847
    %v3849 = vpop.f32.mrf.mxu0
    %3850 = vmatprep.mubr.f32.mxu0 0.0
    %3851 = vmatmul.mubr.f32.gmra.mxu0 %v3733
    %v3852 = vpop.f32.mrf.mxu0
    %v3853 = vadd.f32 %v3721, %v3852
    %v3854 = vpop.f32.mrf.mxu0
    %3855 = vmatprep.mubr.f32.mxu0 0.0
    %3856 = vmatmul.mubr.f32.gmra.mxu0 %v3736
    %v3857 = vpop.f32.mrf.mxu0
    %v3858 = vadd.f32 %v3721, %v3857
    %v3859 = vpop.f32.mrf.mxu0
    %3860 = vmatprep.mubr.f32.mxu0 0.0
    %3861 = vmatmul.mubr.f32.gmra.mxu0 %v3739
    %v3862 = vpop.f32.mrf.mxu0
    %v3863 = vadd.f32 %v3721, %v3862
    %v3864 = vpop.f32.mrf.mxu0
    %3865 = vmatprep.mubr.f32.mxu0 0.0
    %3866 = vmatmul.mubr.f32.gmra.mxu0 %v3742
    %v3867 = vpop.f32.mrf.mxu0
    %v3868 = vadd.f32 %v3721, %v3867
    %v3869 = vpop.f32.mrf.mxu0
    %3870 = vmatprep.mubr.f32.mxu0 0.0
    %3871 = vmatmul.mubr.f32.gmra.mxu0 %v3745
    %v3872 = vpop.f32.mrf.mxu0
    %v3873 = vadd.f32 %v3721, %v3872
    %v3874 = vpop.f32.mrf.mxu0
    %3875 = vmatprep.mubr.f32.mxu0 0.0
    %3876 = vmatmul.mubr.f32.gmra.mxu0 %v3748
    %v3877 = vpop.f32.mrf.mxu0
    %v3878 = vadd.f32 %v3721, %v3877
    %v3879 = vpop.f32.mrf.mxu0
    %3880 = vmatprep.mubr.f32.mxu0 0.0
    %3881 = vmatmul.mubr.f32.gmra.mxu0 %v3751
    %v3882 = vpop.f32.mrf.mxu0
    %v3883 = vadd.f32 %v3721, %v3882
    %v3884 = vpop.f32.mrf.mxu0
    %3885 = vmatprep.mubr.f32.mxu0 0.0
    %3886 = vmatmul.mubr.f32.gmra.mxu0 %v3754
    %v3887 = vpop.f32.mrf.mxu0
    %v3888 = vadd.f32 %v3721, %v3887
    %v3889 = vpop.f32.mrf.mxu0
    %3890 = vmatprep.mubr.f32.mxu0 0.0
    %3891 = vmatmul.mubr.f32.gmra.mxu0 %v3757
    %v3892 = vpop.f32.mrf.mxu0
    %v3893 = vadd.f32 %v3721, %v3892
    %v3894 = vpop.f32.mrf.mxu0
    %3895 = vmatprep.mubr.f32.mxu0 0.0
    %3896 = vmatmul.mubr.f32.gmra.mxu0 %v3760
    %v3897 = vpop.f32.mrf.mxu0
    %v3898 = vadd.f32 %v3721, %v3897
    %v3899 = vpop.f32.mrf.mxu0
    %3900 = vmatprep.mubr.f32.mxu0 0.0
    %3901 = vmatmul.mubr.f32.gmra.mxu0 %v3763
    %v3902 = vpop.f32.mrf.mxu0
    %v3903 = vadd.f32 %v3721, %v3902
    %v3904 = vpop.f32.mrf.mxu0
    %3905 = vmatprep.mubr.f32.mxu0 0.0
    %3906 = vmatmul.mubr.f32.gmra.mxu0 %v3766
    %v3907 = vpop.f32.mrf.mxu0
    %v3908 = vadd.f32 %v3721, %v3907
    %v3909 = vpop.f32.mrf.mxu0
    %3910 = vmatprep.mubr.f32.mxu0 0.0
    %3911 = vmatmul.mubr.f32.gmra.mxu0 %v3769
    %v3912 = vpop.f32.mrf.mxu0
    %v3913 = vadd.f32 %v3721, %v3912
    %v3914 = vpop.f32.mrf.mxu0
    %3915 = vdwg.mxu0
    %3916 = vxpose.xlu0.b32.start [1/16] %v3672, 128
    %3917 = vxpose.xlu0.b32.cont [2/16] %v3673, 128
    %3918 = vxpose.xlu0.b32.cont [3/16] %v3674, 128
    %3919 = vxpose.xlu0.b32.cont [4/16] %v3675, 128
    %3920 = vxpose.xlu0.b32.cont [5/16] %v3676, 128
    %3921 = vxpose.xlu0.b32.cont [6/16] %v3677, 128
    %3922 = vxpose.xlu0.b32.cont [7/16] %v3678, 128
    %3923 = vxpose.xlu0.b32.cont [8/16] %v3679, 128
    %3924 = vxpose.xlu0.b32.cont [9/16] 0.0, 128
    %3925 = vxpose.xlu0.b32.cont [10/16] 0.0, 128
    %3926 = vxpose.xlu0.b32.cont [11/16] 0.0, 128
    %3927 = vxpose.xlu0.b32.cont [12/16] 0.0, 128
    %3928 = vxpose.xlu0.b32.cont [13/16] 0.0, 128
    %3929 = vxpose.xlu0.b32.cont [14/16] 0.0, 128
    %3930 = vxpose.xlu0.b32.cont [15/16] 0.0, 128
    %3931 = vxpose.xlu0.b32.end [16/16] 0.0, 128
    %v3932 = vpop.trf.xlu0
    %v3933 = vpop.trf.xlu0
    %v3934 = vpop.trf.xlu0
    %v3935 = vpop.trf.xlu0
    %v3936 = vpop.trf.xlu0
    %v3937 = vpop.trf.xlu0
    %v3938 = vpop.trf.xlu0
    %v3939 = vpop.trf.xlu0
    %v3940 = vpop.trf.xlu0
    %v3941 = vpop.trf.xlu0
    %v3942 = vpop.trf.xlu0
    %v3943 = vpop.trf.xlu0
    %v3944 = vpop.trf.xlu0
    %v3945 = vpop.trf.xlu0
    %v3946 = vpop.trf.xlu0
    %v3947 = vpop.trf.xlu0
    %v3948 = vld [vmem:[%s17] sm:$0xff]
    %v3949 = vld [vmem:[%s17 + $0x8] sm:$0xff]
    %v3950 = vld [vmem:[%s17 + $0x10] sm:$0xff]
    %v3951 = vld [vmem:[%s17 + $0x18] sm:$0xff]
    %v3952 = vld [vmem:[%s17 + $0x20] sm:$0xff]
    %v3953 = vld [vmem:[%s17 + $0x28] sm:$0xff]
    %v3954 = vld [vmem:[%s17 + $0x30] sm:$0xff]
    %v3955 = vld [vmem:[%s17 + $0x38] sm:$0xff]
    %v3956 = vld [vmem:[%s18] sm:$0x1]
    %v3958 = vlaneseq
    %v3959 = vshrl.u32 %v3958, 7
    %v3960 = vsub.s32 0, %v3959
    %v3961 = vrot.slane %v3956, %v3960
    %vm3963 = vcmask 523264
    %v3965 = vsel %vm3963, %v3932, 0
    %v3968 = vsel %vm3963, %v3933, 0
    %v3971 = vsel %vm3963, %v3934, 0
    %v3974 = vsel %vm3963, %v3935, 0
    %3976 = vmatprep.subr.mxu0 0.0
    %3977 = vmatpush1.msra.mxu0 0.0
    %3978 = vmatprep.subr.mxu0 0.0
    %3979 = vmatpush1.msra.mxu0 0.0
    %3980 = vmatprep.subr.mxu0 0.0
    %3981 = vmatpush1.msra.mxu0 0.0
    %3982 = vmatprep.subr.mxu0 0.0
    %3983 = vmatpush1.msra.mxu0 0.0
    %3984 = vmatprep.subr.mxu0 0.0
    %3985 = vmatpush1.msra.mxu0 0.0
    %3986 = vmatprep.subr.mxu0 0.0
    %3987 = vmatpush1.msra.mxu0 0.0
    %3988 = vmatprep.subr.mxu0 0.0
    %3989 = vmatpush1.msra.mxu0 0.0
    %3990 = vmatprep.subr.mxu0 0.0
    %3991 = vmatpush1.msra.mxu0 0.0
    %3992 = vmatprep.subr.mxu0 0.0
    %3993 = vmatpush1.msra.mxu0 %v3955
    %3994 = vmatprep.subr.mxu0 0.0
    %3995 = vmatpush1.msra.mxu0 %v3954
    %3996 = vmatprep.subr.mxu0 0.0
    %3997 = vmatpush1.msra.mxu0 %v3953
    %3998 = vmatprep.subr.mxu0 0.0
    %3999 = vmatpush1.msra.mxu0 %v3952
    %4000 = vmatprep.subr.mxu0 0.0
    %4001 = vmatpush1.msra.mxu0 %v3951
    %4002 = vmatprep.subr.mxu0 0.0
    %4003 = vmatpush1.msra.mxu0 %v3950
    %4004 = vmatprep.subr.mxu0 0.0
    %4005 = vmatpush1.msra.mxu0 %v3949
    %4006 = vmatprep.subr.mxu0 0.0
    %4007 = vmatpush1.msra.mxu0 %v3948
    %4008 = vmatprep.subr.mxu0 0.0
    %4009 = vmatpush2.msra.mxu0 0.0
    %4010 = vmatprep.subr.mxu0 0.0
    %4011 = vmatpush2.msra.mxu0 0.0
    %4012 = vmatprep.subr.mxu0 0.0
    %4013 = vmatpush2.msra.mxu0 0.0
    %4014 = vmatprep.subr.mxu0 0.0
    %4015 = vmatpush2.msra.mxu0 0.0
    %4016 = vmatprep.subr.mxu0 0.0
    %4017 = vmatpush2.msra.mxu0 0.0
    %4018 = vmatprep.subr.mxu0 0.0
    %4019 = vmatpush2.msra.mxu0 0.0
    %4020 = vmatprep.subr.mxu0 0.0
    %4021 = vmatpush2.msra.mxu0 0.0
    %4022 = vmatprep.subr.mxu0 0.0
    %4023 = vmatpush2.msra.mxu0 0.0
    %4024 = vmatprep.subr.mxu0 0.0
    %4025 = vmatpush2.msra.mxu0 0.0
    %4026 = vmatprep.subr.mxu0 0.0
    %4027 = vmatpush2.msra.mxu0 0.0
    %4028 = vmatprep.subr.mxu0 0.0
    %4029 = vmatpush2.msra.mxu0 0.0
    %4030 = vmatprep.subr.mxu0 0.0
    %4031 = vmatpush2.msra.mxu0 0.0
    %4032 = vmatprep.subr.mxu0 0.0
    %4033 = vmatpush2.msra.mxu0 0.0
    %4034 = vmatprep.subr.mxu0 0.0
    %4035 = vmatpush2.msra.mxu0 0.0
    %4036 = vmatprep.subr.mxu0 0.0
    %4037 = vmatpush2.msra.mxu0 0.0
    %4038 = vmatprep.subr.mxu0 0.0
    %4039 = vmatpush2.msra.mxu0 0.0
    %4040 = vmatprep.mubr.f32.mxu0 0.0
    %4041 = vmatmul.mubr.f32.gmra.mxu0 %v3965
    %v4042 = vpop.f32.mrf.mxu0
    %v4043 = vadd.f32 %v3961, %v4042
    %v4044 = vpop.f32.mrf.mxu0
    %4045 = vmatprep.mubr.f32.mxu0 0.0
    %4046 = vmatmul.mubr.f32.gmra.mxu0 %v3968
    %v4047 = vpop.f32.mrf.mxu0
    %v4048 = vadd.f32 %v3961, %v4047
    %v4049 = vpop.f32.mrf.mxu0
    %4050 = vmatprep.mubr.f32.mxu0 0.0
    %4051 = vmatmul.mubr.f32.gmra.mxu0 %v3971
    %v4052 = vpop.f32.mrf.mxu0
    %v4053 = vadd.f32 %v3961, %v4052
    %v4054 = vpop.f32.mrf.mxu0
    %4055 = vmatprep.mubr.f32.mxu0 0.0
    %4056 = vmatmul.mubr.f32.gmra.mxu0 %v3974
    %v4057 = vpop.f32.mrf.mxu0
    %v4058 = vadd.f32 %v3961, %v4057
    %v4059 = vpop.f32.mrf.mxu0
    %4060 = vdwg.mxu0
    %4061 = vst [vmem:[%s19] sm:$0xff] %v3838
    %4062 = vst [vmem:[%s19 + $0x8] sm:$0xff] %v3843
    %4063 = vst [vmem:[%s19 + $0x10] sm:$0xff] %v3848
    %4064 = vst [vmem:[%s19 + $0x18] sm:$0xff] %v3853
    %4065 = vst [vmem:[%s19 + $0x20] sm:$0xff] %v3858
    %4066 = vst [vmem:[%s19 + $0x28] sm:$0xff] %v3863
    %4067 = vst [vmem:[%s19 + $0x30] sm:$0xff] %v3868
    %4068 = vst [vmem:[%s19 + $0x38] sm:$0xff] %v3873
    %4069 = vst [vmem:[%s19 + $0x40] sm:$0xff] %v3878
    %4070 = vst [vmem:[%s19 + $0x48] sm:$0xff] %v3883
    %4071 = vst [vmem:[%s19 + $0x50] sm:$0xff] %v3888
    %4072 = vst [vmem:[%s19 + $0x58] sm:$0xff] %v3893
    %4073 = vst [vmem:[%s19 + $0x60] sm:$0xff] %v3898
    %4074 = vst [vmem:[%s19 + $0x68] sm:$0xff] %v3903
    %4075 = vst [vmem:[%s19 + $0x70] sm:$0xff] %v3908
    %4076 = vst [vmem:[%s19 + $0x78] sm:$0xff] %v3913
    %4077 = vst [vmem:[%s19 + $0x80] sm:$0xff] %v4043
    %4078 = vst [vmem:[%s19 + $0x88] sm:$0xff] %v4048
    %4079 = vst [vmem:[%s19 + $0x90] sm:$0xff] %v4053
    %4080 = vst [vmem:[%s19 + $0x98] sm:$0xff] %v4058
    // Predicated region
    $region82: #{yolov7_forward.1} parent=1 // pred_check
      _
    $region83: #{yolov7_forward.1} parent=1 // pred_check_branch
      %4082 = sbr.rel (0) target = $region85
    $region84: #{yolov7_forward.1} parent=1 // pred_region
      _
    $region85: #{yolov7_forward.1} parent=1 // pred_fallthru
      _
    // Predicated region
    $region86: #{yolov7_forward.1} parent=1 // pred_check
      _
    $region87: #{yolov7_forward.1} parent=1 // pred_check_branch
      %4084 = sbr.rel (0) target = $region89
    $region88: #{yolov7_forward.1} parent=1 // pred_region
      _
    $region89: #{yolov7_forward.1} parent=1 // pred_fallthru
      _
    %4085 = vsyncpa [#allocation3], 1

</llo_original>
